<compile_context>
chip_gen: v6e
topology: v6e:2x2x1
jax: 0.10.0
libtpu: 0.0.40
codegen_flags: <defaults>
</compile_context>

<pallas_src>
import functools

import jax
import jax.numpy as jnp
from jax.experimental import pallas as pl
from jax.experimental.pallas import tpu as pltpu


# ----------------------------------------------------------------------------
# Fused MobileBlock kernel: 1x1 conv -> kxk conv (stride) -> 1x1 conv + ReLU6
# (+ residual), all BN folded, intermediates resident in VMEM.
# ----------------------------------------------------------------------------
def _mobile_block_kernel(x_ref, w1_ref, b1_ref, w2_ref, b2_ref, w3_ref, b3_ref,
                         o_ref, ypad_ref, *, H, W, Ho, Wo, k, stride,
                         use_residual):
    p = k // 2
    cmid = w1_ref.shape[1]

    # ---- 1x1 conv + folded BN (no activation) -------------------------------
    x_cf = x_ref[0].astype(jnp.float32)                     # (cin, H*W)
    # (H*W, cmid) = x^T @ w1 ; contraction over cin.
    y1 = jax.lax.dot_general(
        x_cf, w1_ref[...],
        dimension_numbers=(((0,), (0,)), ((), ())),
        preferred_element_type=jnp.float32) + b1_ref[...]

    # ---- in-kernel zero padding into the VMEM scratch (channels-last) -------
    if p > 0:
        ypad_ref[...] = jnp.zeros_like(ypad_ref)
    ypad_ref[pl.ds(p, H), pl.ds(p, W), :] = y1.reshape(H, W, cmid)

    # ---- kxk conv, stride s, as ONE im2col matmul (K = k*k*cmid) ------------
    taps = []
    for kh in range(k):
        for kw in range(k):
            if stride == 1:
                tap = ypad_ref[pl.ds(kh, Ho), pl.ds(kw, Wo), :]
            else:
                # only the strided output positions are read / computed
                tap = ypad_ref[pl.ds(kh, Ho, stride=stride),
                               pl.ds(kw, Wo, stride=stride), :]
            taps.append(tap)                                 # (Ho, Wo, cmid)
    patches = jnp.concatenate(taps, axis=-1).reshape(Ho * Wo, k * k * cmid)
    y2 = jnp.dot(patches, w2_ref[...],
                 preferred_element_type=jnp.float32) + b2_ref[...]   # (Ho*Wo, cmid)

    # ---- 1x1 conv + folded BN + ReLU6, produced channels-first --------------
    # (cout, Ho*Wo) = w3 @ y2^T : lane dim = Ho*Wo -> lane-dense epilogue/store.
    y3 = jax.lax.dot_general(
        w3_ref[...], y2,
        dimension_numbers=(((1,), (1,)), ((), ())),
        preferred_element_type=jnp.float32)
    y3 = jnp.clip(y3 + b3_ref[...], 0.0, 6.0)                # ReLU6

    if use_residual:                                         # ReLU6(...) + x
        y3 = y3 + x_cf

    o_ref[0] = y3.astype(o_ref.dtype)


def mobile_block_forward(params, x_ncs, N, H, W, cin, cout, k, stride):
    """One ConvMobileBlock as a single fused Pallas kernel.

    x_ncs : (N, cin, H*W) float32, channels-first with flattened spatial.
    Returns (out, Ho, Wo) with out of shape (N, cout, Ho*Wo).
    """
    p = k // 2
    Ho = (H + 2 * p - k) // stride + 1
    Wo = (W + 2 * p - k) // stride + 1
    cmid = cin + cout // 2
    use_residual = (cin == cout) and (stride == 1)

    c1, c2, c3 = params['c1'], params['c2'], params['c3']
    # Fold the BatchNorm scale into the conv weights (trace time, free); the
    # per-channel shift stays as the kernel epilogue bias.
    w1 = (c1['w'][:, :, 0, 0] * c1['scale'][:, None]).T.astype(jnp.float32)     # (cin, cmid)
    b1 = c1['shift'].reshape(1, cmid).astype(jnp.float32)
    w2 = jnp.transpose(c2['w'] * c2['scale'][:, None, None, None],
                       (2, 3, 1, 0)).reshape(k * k * cmid, cmid).astype(jnp.float32)
    b2 = c2['shift'].reshape(1, cmid).astype(jnp.float32)
    w3 = (c3['w'][:, :, 0, 0] * c3['scale'][:, None]).astype(jnp.float32)       # (cout, cmid)
    b3 = c3['shift'].reshape(cout, 1).astype(jnp.float32)

    kernel = functools.partial(
        _mobile_block_kernel, H=H, W=W, Ho=Ho, Wo=Wo, k=k, stride=stride,
        use_residual=use_residual)

    hp, wp = H + 2 * p, W + 2 * p
    out = pl.pallas_call(
        kernel,
        out_shape=jax.ShapeDtypeStruct((N, cout, Ho * Wo), jnp.float32),
        grid=(N,),
        in_specs=[
            pl.BlockSpec((1, cin, H * W), lambda n: (n, 0, 0)),      # x (per image)
            pl.BlockSpec((cin, cmid), lambda n: (0, 0)),             # w1
            pl.BlockSpec((1, cmid), lambda n: (0, 0)),               # b1
            pl.BlockSpec((k * k * cmid, cmid), lambda n: (0, 0)),    # w2
            pl.BlockSpec((1, cmid), lambda n: (0, 0)),               # b2
            pl.BlockSpec((cout, cmid), lambda n: (0, 0)),            # w3
            pl.BlockSpec((cout, 1), lambda n: (0, 0)),               # b3
        ],
        out_specs=pl.BlockSpec((1, cout, Ho * Wo), lambda n: (n, 0, 0)),
        scratch_shapes=[pltpu.VMEM((hp, wp, cmid), jnp.float32)],    # padded mid act
        compiler_params=pltpu.CompilerParams(
            dimension_semantics=("parallel",)),
    )(x_ncs, w1, b1, w2, b2, w3, b3)
    return out, Ho, Wo


def conv_stage_forward(params_list, stage_config, x_nchw):
    """Matches ConvStage.forward. Input/output: NCHW (PyTorch convention)."""
    N, C, H, W = x_nchw.shape
    x = x_nchw.reshape(N, C, H * W)           # free reshape, no transpose
    for params, (cin, cout, k, stride) in zip(params_list, stage_config):
        x, H, W = mobile_block_forward(params, x, N, H, W, cin, cout, k, stride)
    return x.reshape(N, stage_config[-1][1], H, W)


# ----------------------------------------------------------------------------
# Parameter construction (deterministic, synthetic) + BN folding
# ----------------------------------------------------------------------------
_BN_EPS = 1e-5


def _fold_bn(gamma, beta, mean, var, eps=_BN_EPS):
    scale = gamma / jnp.sqrt(var + eps)
    shift = beta - mean * scale
    return scale, shift


def init_conv_block(key, cin, cout, k):
    kw, kg, kb, km, kv = jax.random.split(key, 5)
    w = 0.1 * jax.random.normal(kw, (cout, cin, k, k), jnp.float32)
    gamma = 1.0 + 0.1 * jax.random.normal(kg, (cout,), jnp.float32)
    beta = 0.1 * jax.random.normal(kb, (cout,), jnp.float32)
    mean = 0.1 * jax.random.normal(km, (cout,), jnp.float32)
    var = jax.random.uniform(kv, (cout,), jnp.float32, minval=0.5, maxval=1.5)
    scale, shift = _fold_bn(gamma, beta, mean, var)
    return {'w': w, 'scale': scale, 'shift': shift}


def init_mobile_block(key, cin, cout, k):
    mid = cin + cout // 2
    k1, k2, k3 = jax.random.split(key, 3)
    return {
        'c1': init_conv_block(k1, cin, mid, 1),    # 1x1, no activation
        'c2': init_conv_block(k2, mid, mid, k),    # kxk, stride, no activation
        'c3': init_conv_block(k3, mid, cout, 1),   # 1x1, ReLU6
    }


def init_conv_stage(key, stage_config):
    keys = jax.random.split(key, len(stage_config))
    return [init_mobile_block(keys[i], cfg[0], cfg[1], cfg[2])
            for i, cfg in enumerate(stage_config)]


# ----------------------------------------------------------------------------
# Pure-JAX reference (for a numerical self-check)
# ----------------------------------------------------------------------------
def _reference_conv_bn(x, w, scale, shift, k, stride, activation):
    p = k // 2
    y = jax.lax.conv_general_dilated(
        x, w, window_strides=(stride, stride), padding=[(p, p), (p, p)],
        dimension_numbers=('NCHW', 'OIHW', 'NCHW'),
        precision=jax.lax.Precision.HIGHEST)
    y = y * scale[None, :, None, None] + shift[None, :, None, None]
    if activation:
        y = jnp.clip(y, 0.0, 6.0)
    return y


def _reference_stage(params_list, stage_config, x_nchw):
    x = x_nchw
    for params, (cin, cout, k, stride) in zip(params_list, stage_config):
        use_res = (cin == cout) and (stride == 1)
        c1, c2, c3 = params['c1'], params['c2'], params['c3']
        h = _reference_conv_bn(x, c1['w'], c1['scale'], c1['shift'], 1, 1, False)
        h = _reference_conv_bn(h, c2['w'], c2['scale'], c2['shift'], k, stride, False)
        h = _reference_conv_bn(h, c3['w'], c3['scale'], c3['shift'], 1, 1, True)
        x = h + x if use_res else h
    return x


# ----------------------------------------------------------------------------
if __name__ == "__main__":
    # stageConfig entries: (in_channels, out_channels, kernel_size, stride)
    stage_config = [
        (4, 4, 3, 1),   # residual block (in == out, stride == 1)
        (4, 8, 3, 2),   # strided, channel-expanding block
    ]

    key = jax.random.PRNGKey(0)
    kx, kp = jax.random.split(key)
    x_nchw = jax.random.normal(kx, (2, 4, 16, 16), jnp.float32)

    params = init_conv_stage(kp, stage_config)

    fwd = jax.jit(lambda p, x: conv_stage_forward(p, stage_config, x))
    out = jax.block_until_ready(fwd(params, x_nchw))

    assert out.shape == (2, 8, 8, 8), out.shape     # N, C_out, H/2, W/2
    assert bool(jnp.all(jnp.isfinite(out)))

    ref = _reference_stage(params, stage_config, x_nchw)
    max_err = float(jnp.max(jnp.abs(out - ref)))
    assert max_err < 1e-2, max_err

    print("KERNEL_OK")
</pallas_src>

<mosaic_0001>
module attributes {stable_mosaic.version = 11 : i64} {
  func.func @_mobile_block_kernel(%arg0: i32, %arg1: memref<1x4x256xf32, #tpu.memory_space<vmem>>, %arg2: memref<4x6xf32, #tpu.memory_space<vmem>>, %arg3: memref<1x6xf32, #tpu.memory_space<vmem>>, %arg4: memref<54x6xf32, #tpu.memory_space<vmem>>, %arg5: memref<1x6xf32, #tpu.memory_space<vmem>>, %arg6: memref<4x6xf32, #tpu.memory_space<vmem>>, %arg7: memref<4x1xf32, #tpu.memory_space<vmem>>, %arg8: memref<1x4x256xf32, #tpu.memory_space<vmem>>, %arg9: memref<18x18x6xf32, #tpu.memory_space<vmem>>) attributes {dimension_semantics = [#tpu.dimension_semantics<parallel>], iteration_bounds = array<i64: 2>, scalar_prefetch = 0 : i64, scratch_operands = 1 : i64, tpu.core_type = #tpu.core_type<tc>, window_params = [{transform_indices = @transform_0, window_bounds = array<i64: 1, 4, 256>}, {pipeline_mode = #tpu.pipeline_mode<synchronous>, transform_indices = @transform_1, window_bounds = array<i64: 4, 6>}, {pipeline_mode = #tpu.pipeline_mode<synchronous>, transform_indices = @transform_2, window_bounds = array<i64: 1, 6>}, {pipeline_mode = #tpu.pipeline_mode<synchronous>, transform_indices = @transform_3, window_bounds = array<i64: 54, 6>}, {pipeline_mode = #tpu.pipeline_mode<synchronous>, transform_indices = @transform_4, window_bounds = array<i64: 1, 6>}, {pipeline_mode = #tpu.pipeline_mode<synchronous>, transform_indices = @transform_5, window_bounds = array<i64: 4, 6>}, {pipeline_mode = #tpu.pipeline_mode<synchronous>, transform_indices = @transform_6, window_bounds = array<i64: 4, 1>}, {transform_indices = @transform_7, window_bounds = array<i64: 1, 4, 256>}]} {
    %c0 = arith.constant 0 : index
    %c0_0 = arith.constant 0 : index
    %c0_1 = arith.constant 0 : index
    %0 = vector.load %arg1[%c0, %c0_0, %c0_1] : memref<1x4x256xf32, #tpu.memory_space<vmem>>, vector<1x4x256xf32>
    %1 = vector.shape_cast %0 : vector<1x4x256xf32> to vector<4x256xf32>
    %c0_2 = arith.constant 0 : index
    %c0_3 = arith.constant 0 : index
    %2 = vector.load %arg2[%c0_2, %c0_3] : memref<4x6xf32, #tpu.memory_space<vmem>>, vector<4x6xf32>
    %cst = arith.constant dense<0.000000e+00> : vector<256x6xf32>
    %3 = tpu.matmul %1, %2, %cst {dimension_numbers = #tpu.dot_dimension_numbers<[0], [0], [1], [1], [0, 1, 1, 1], [], []>} : vector<4x256xf32>, vector<4x6xf32>, vector<256x6xf32> -> vector<256x6xf32>
    %c0_4 = arith.constant 0 : index
    %c0_5 = arith.constant 0 : index
    %4 = vector.load %arg3[%c0_4, %c0_5] : memref<1x6xf32, #tpu.memory_space<vmem>>, vector<1x6xf32>
    %5 = vector.broadcast %4 : vector<1x6xf32> to vector<256x6xf32>
    %6 = arith.addf %3, %5 : vector<256x6xf32>
    %cst_6 = arith.constant 0.000000e+00 : f32
    %7 = vector.broadcast %cst_6 : f32 to vector<18x18x6xf32>
    %c0_7 = arith.constant 0 : index
    %c0_8 = arith.constant 0 : index
    %c0_9 = arith.constant 0 : index
    %8 = vector.load %arg9[%c0_7, %c0_8, %c0_9] : memref<18x18x6xf32, #tpu.memory_space<vmem>>, vector<18x18x6xf32>
    tpu.vector_store %arg9[%c0_7, %c0_8, %c0_9], %7 {strides = array<i32>} : memref<18x18x6xf32, #tpu.memory_space<vmem>>, vector<18x18x6xf32>,
    %9 = vector.shape_cast %6 : vector<256x6xf32> to vector<16x16x6xf32>
    %c1 = arith.constant 1 : index
    %c1_10 = arith.constant 1 : index
    %c0_11 = arith.constant 0 : index
    %10 = vector.load %arg9[%c1, %c1_10, %c0_11] : memref<18x18x6xf32, #tpu.memory_space<vmem>>, vector<16x16x6xf32>
    tpu.vector_store %arg9[%c1, %c1_10, %c0_11], %9 {strides = array<i32>} : memref<18x18x6xf32, #tpu.memory_space<vmem>>, vector<16x16x6xf32>,
    %c0_12 = arith.constant 0 : index
    %c0_13 = arith.constant 0 : index
    %c0_14 = arith.constant 0 : index
    %11 = vector.load %arg9[%c0_12, %c0_13, %c0_14] : memref<18x18x6xf32, #tpu.memory_space<vmem>>, vector<16x16x6xf32>
    %c0_15 = arith.constant 0 : index
    %c1_16 = arith.constant 1 : index
    %c0_17 = arith.constant 0 : index
    %12 = vector.load %arg9[%c0_15, %c1_16, %c0_17] : memref<18x18x6xf32, #tpu.memory_space<vmem>>, vector<16x16x6xf32>
    %c0_18 = arith.constant 0 : index
    %c2 = arith.constant 2 : index
    %c0_19 = arith.constant 0 : index
    %13 = vector.load %arg9[%c0_18, %c2, %c0_19] : memref<18x18x6xf32, #tpu.memory_space<vmem>>, vector<16x16x6xf32>
    %c1_20 = arith.constant 1 : index
    %c0_21 = arith.constant 0 : index
    %c0_22 = arith.constant 0 : index
    %14 = vector.load %arg9[%c1_20, %c0_21, %c0_22] : memref<18x18x6xf32, #tpu.memory_space<vmem>>, vector<16x16x6xf32>
    %c1_23 = arith.constant 1 : index
    %c1_24 = arith.constant 1 : index
    %c0_25 = arith.constant 0 : index
    %15 = vector.load %arg9[%c1_23, %c1_24, %c0_25] : memref<18x18x6xf32, #tpu.memory_space<vmem>>, vector<16x16x6xf32>
    %c1_26 = arith.constant 1 : index
    %c2_27 = arith.constant 2 : index
    %c0_28 = arith.constant 0 : index
    %16 = vector.load %arg9[%c1_26, %c2_27, %c0_28] : memref<18x18x6xf32, #tpu.memory_space<vmem>>, vector<16x16x6xf32>
    %c2_29 = arith.constant 2 : index
    %c0_30 = arith.constant 0 : index
    %c0_31 = arith.constant 0 : index
    %17 = vector.load %arg9[%c2_29, %c0_30, %c0_31] : memref<18x18x6xf32, #tpu.memory_space<vmem>>, vector<16x16x6xf32>
    %c2_32 = arith.constant 2 : index
    %c1_33 = arith.constant 1 : index
    %c0_34 = arith.constant 0 : index
    %18 = vector.load %arg9[%c2_32, %c1_33, %c0_34] : memref<18x18x6xf32, #tpu.memory_space<vmem>>, vector<16x16x6xf32>
    %c2_35 = arith.constant 2 : index
    %c2_36 = arith.constant 2 : index
    %c0_37 = arith.constant 0 : index
    %19 = vector.load %arg9[%c2_35, %c2_36, %c0_37] : memref<18x18x6xf32, #tpu.memory_space<vmem>>, vector<16x16x6xf32>
    %20 = tpu.concatenate %11, %12, %13, %14, %15, %16, %17, %18, %19 in 2 : vector<16x16x6xf32>, vector<16x16x6xf32>, vector<16x16x6xf32>, vector<16x16x6xf32>, vector<16x16x6xf32>, vector<16x16x6xf32>, vector<16x16x6xf32>, vector<16x16x6xf32>, vector<16x16x6xf32> -> vector<16x16x54xf32>
    %21 = vector.shape_cast %20 : vector<16x16x54xf32> to vector<256x54xf32>
    %c0_38 = arith.constant 0 : index
    %c0_39 = arith.constant 0 : index
    %22 = vector.load %arg4[%c0_38, %c0_39] : memref<54x6xf32, #tpu.memory_space<vmem>>, vector<54x6xf32>
    %cst_40 = arith.constant dense<0.000000e+00> : vector<256x6xf32>
    %23 = tpu.matmul %21, %22, %cst_40 {dimension_numbers = #tpu.dot_dimension_numbers<[1], [0], [0], [1], [0, 0, 1, 1], [], []>} : vector<256x54xf32>, vector<54x6xf32>, vector<256x6xf32> -> vector<256x6xf32>
    %c0_41 = arith.constant 0 : index
    %c0_42 = arith.constant 0 : index
    %24 = vector.load %arg5[%c0_41, %c0_42] : memref<1x6xf32, #tpu.memory_space<vmem>>, vector<1x6xf32>
    %25 = vector.broadcast %24 : vector<1x6xf32> to vector<256x6xf32>
    %26 = arith.addf %23, %25 : vector<256x6xf32>
    %c0_43 = arith.constant 0 : index
    %c0_44 = arith.constant 0 : index
    %27 = vector.load %arg6[%c0_43, %c0_44] : memref<4x6xf32, #tpu.memory_space<vmem>>, vector<4x6xf32>
    %cst_45 = arith.constant dense<0.000000e+00> : vector<4x256xf32>
    %28 = tpu.matmul %27, %26, %cst_45 {dimension_numbers = #tpu.dot_dimension_numbers<[1], [1], [0], [0], [0, 0, 1, 0], [], []>} : vector<4x6xf32>, vector<256x6xf32>, vector<4x256xf32> -> vector<4x256xf32>
    %c0_46 = arith.constant 0 : index
    %c0_47 = arith.constant 0 : index
    %29 = vector.load %arg7[%c0_46, %c0_47] : memref<4x1xf32, #tpu.memory_space<vmem>>, vector<4x1xf32>
    %30 = vector.broadcast %29 : vector<4x1xf32> to vector<4x256xf32>
    %31 = arith.addf %28, %30 : vector<4x256xf32>
    %cst_48 = arith.constant 0.000000e+00 : f32
    %cst_49 = arith.constant 6.000000e+00 : f32
    %32 = vector.broadcast %cst_48 : f32 to vector<4x256xf32>
    %33 = arith.maximumf %32, %31 : vector<4x256xf32>
    %34 = vector.broadcast %cst_49 : f32 to vector<4x256xf32>
    %35 = arith.minimumf %34, %33 : vector<4x256xf32>
    %36 = arith.addf %35, %1 : vector<4x256xf32>
    %c0_50 = arith.constant 0 : index
    %c0_51 = arith.constant 0 : index
    %c0_52 = arith.constant 0 : index
    %37 = vector.load %arg8[%c0_50, %c0_51, %c0_52] : memref<1x4x256xf32, #tpu.memory_space<vmem>>, vector<1x4x256xf32>
    %38 = vector.shape_cast %37 : vector<1x4x256xf32> to vector<4x256xf32>
    %39 = vector.shape_cast %36 : vector<4x256xf32> to vector<1x4x256xf32>
    tpu.vector_store %arg8[%c0_50, %c0_51, %c0_52], %39 {strides = array<i32>} : memref<1x4x256xf32, #tpu.memory_space<vmem>>, vector<1x4x256xf32>,
    return
  }
  func.func @transform_0(%arg0: i32) -> (i32, i32, i32) {
    %c0_i32 = arith.constant 0 : i32
    %c0_i32_0 = arith.constant 0 : i32
    %c0_i32_1 = arith.constant 0 : i32
    return %arg0, %c0_i32, %c0_i32_0 : i32, i32, i32
  }
  func.func @transform_1(%arg0: i32) -> (i32, i32) {
    %c0_i32 = arith.constant 0 : i32
    %c0_i32_0 = arith.constant 0 : i32
    %c0_i32_1 = arith.constant 0 : i32
    return %c0_i32, %c0_i32_0 : i32, i32
  }
  func.func @transform_2(%arg0: i32) -> (i32, i32) {
    %c0_i32 = arith.constant 0 : i32
    %c0_i32_0 = arith.constant 0 : i32
    %c0_i32_1 = arith.constant 0 : i32
    return %c0_i32, %c0_i32_0 : i32, i32
  }
  func.func @transform_3(%arg0: i32) -> (i32, i32) {
    %c0_i32 = arith.constant 0 : i32
    %c0_i32_0 = arith.constant 0 : i32
    %c0_i32_1 = arith.constant 0 : i32
    return %c0_i32, %c0_i32_0 : i32, i32
  }
  func.func @transform_4(%arg0: i32) -> (i32, i32) {
    %c0_i32 = arith.constant 0 : i32
    %c0_i32_0 = arith.constant 0 : i32
    %c0_i32_1 = arith.constant 0 : i32
    return %c0_i32, %c0_i32_0 : i32, i32
  }
  func.func @transform_5(%arg0: i32) -> (i32, i32) {
    %c0_i32 = arith.constant 0 : i32
    %c0_i32_0 = arith.constant 0 : i32
    %c0_i32_1 = arith.constant 0 : i32
    return %c0_i32, %c0_i32_0 : i32, i32
  }
  func.func @transform_6(%arg0: i32) -> (i32, i32) {
    %c0_i32 = arith.constant 0 : i32
    %c0_i32_0 = arith.constant 0 : i32
    %c0_i32_1 = arith.constant 0 : i32
    return %c0_i32, %c0_i32_0 : i32, i32
  }
  func.func @transform_7(%arg0: i32) -> (i32, i32, i32) {
    %c0_i32 = arith.constant 0 : i32
    %c0_i32_0 = arith.constant 0 : i32
    %c0_i32_1 = arith.constant 0 : i32
    return %arg0, %c0_i32, %c0_i32_0 : i32, i32, i32
  }
}

module attributes {stable_mosaic.version = 11 : i64} {
  func.func @_mobile_block_kernel(%arg0: i32, %arg1: memref<1x4x256xf32, #tpu.memory_space<vmem>>, %arg2: memref<4x8xf32, #tpu.memory_space<vmem>>, %arg3: memref<1x8xf32, #tpu.memory_space<vmem>>, %arg4: memref<72x8xf32, #tpu.memory_space<vmem>>, %arg5: memref<1x8xf32, #tpu.memory_space<vmem>>, %arg6: memref<8x8xf32, #tpu.memory_space<vmem>>, %arg7: memref<8x1xf32, #tpu.memory_space<vmem>>, %arg8: memref<1x8x64xf32, #tpu.memory_space<vmem>>, %arg9: memref<18x18x8xf32, #tpu.memory_space<vmem>>) attributes {dimension_semantics = [#tpu.dimension_semantics<parallel>], iteration_bounds = array<i64: 2>, scalar_prefetch = 0 : i64, scratch_operands = 1 : i64, tpu.core_type = #tpu.core_type<tc>, window_params = [{transform_indices = @transform_0, window_bounds = array<i64: 1, 4, 256>}, {pipeline_mode = #tpu.pipeline_mode<synchronous>, transform_indices = @transform_1, window_bounds = array<i64: 4, 8>}, {pipeline_mode = #tpu.pipeline_mode<synchronous>, transform_indices = @transform_2, window_bounds = array<i64: 1, 8>}, {pipeline_mode = #tpu.pipeline_mode<synchronous>, transform_indices = @transform_3, window_bounds = array<i64: 72, 8>}, {pipeline_mode = #tpu.pipeline_mode<synchronous>, transform_indices = @transform_4, window_bounds = array<i64: 1, 8>}, {pipeline_mode = #tpu.pipeline_mode<synchronous>, transform_indices = @transform_5, window_bounds = array<i64: 8, 8>}, {pipeline_mode = #tpu.pipeline_mode<synchronous>, transform_indices = @transform_6, window_bounds = array<i64: 8, 1>}, {transform_indices = @transform_7, window_bounds = array<i64: 1, 8, 64>}]} {
    %c0 = arith.constant 0 : index
    %c0_0 = arith.constant 0 : index
    %c0_1 = arith.constant 0 : index
    %0 = vector.load %arg1[%c0, %c0_0, %c0_1] : memref<1x4x256xf32, #tpu.memory_space<vmem>>, vector<1x4x256xf32>
    %1 = vector.shape_cast %0 : vector<1x4x256xf32> to vector<4x256xf32>
    %c0_2 = arith.constant 0 : index
    %c0_3 = arith.constant 0 : index
    %2 = vector.load %arg2[%c0_2, %c0_3] : memref<4x8xf32, #tpu.memory_space<vmem>>, vector<4x8xf32>
    %cst = arith.constant dense<0.000000e+00> : vector<256x8xf32>
    %3 = tpu.matmul %1, %2, %cst {dimension_numbers = #tpu.dot_dimension_numbers<[0], [0], [1], [1], [0, 1, 1, 1], [], []>} : vector<4x256xf32>, vector<4x8xf32>, vector<256x8xf32> -> vector<256x8xf32>
    %c0_4 = arith.constant 0 : index
    %c0_5 = arith.constant 0 : index
    %4 = vector.load %arg3[%c0_4, %c0_5] : memref<1x8xf32, #tpu.memory_space<vmem>>, vector<1x8xf32>
    %5 = vector.broadcast %4 : vector<1x8xf32> to vector<256x8xf32>
    %6 = arith.addf %3, %5 : vector<256x8xf32>
    %cst_6 = arith.constant 0.000000e+00 : f32
    %7 = vector.broadcast %cst_6 : f32 to vector<18x18x8xf32>
    %c0_7 = arith.constant 0 : index
    %c0_8 = arith.constant 0 : index
    %c0_9 = arith.constant 0 : index
    %8 = vector.load %arg9[%c0_7, %c0_8, %c0_9] : memref<18x18x8xf32, #tpu.memory_space<vmem>>, vector<18x18x8xf32>
    tpu.vector_store %arg9[%c0_7, %c0_8, %c0_9], %7 {strides = array<i32>} : memref<18x18x8xf32, #tpu.memory_space<vmem>>, vector<18x18x8xf32>,
    %9 = vector.shape_cast %6 : vector<256x8xf32> to vector<16x16x8xf32>
    %c1 = arith.constant 1 : index
    %c1_10 = arith.constant 1 : index
    %c0_11 = arith.constant 0 : index
    %10 = vector.load %arg9[%c1, %c1_10, %c0_11] : memref<18x18x8xf32, #tpu.memory_space<vmem>>, vector<16x16x8xf32>
    tpu.vector_store %arg9[%c1, %c1_10, %c0_11], %9 {strides = array<i32>} : memref<18x18x8xf32, #tpu.memory_space<vmem>>, vector<16x16x8xf32>,
    %c0_12 = arith.constant 0 : index
    %c0_13 = arith.constant 0 : index
    %c0_14 = arith.constant 0 : index
    %11 = tpu.strided_load %arg9[%c0_12, %c0_13, %c0_14] {strides = array<i32: 2, 2, 1>} : memref<18x18x8xf32, #tpu.memory_space<vmem>>, vector<8x8x8xf32>
    %c0_15 = arith.constant 0 : index
    %c1_16 = arith.constant 1 : index
    %c0_17 = arith.constant 0 : index
    %12 = tpu.strided_load %arg9[%c0_15, %c1_16, %c0_17] {strides = array<i32: 2, 2, 1>} : memref<18x18x8xf32, #tpu.memory_space<vmem>>, vector<8x8x8xf32>
    %c0_18 = arith.constant 0 : index
    %c2 = arith.constant 2 : index
    %c0_19 = arith.constant 0 : index
    %13 = tpu.strided_load %arg9[%c0_18, %c2, %c0_19] {strides = array<i32: 2, 2, 1>} : memref<18x18x8xf32, #tpu.memory_space<vmem>>, vector<8x8x8xf32>
    %c1_20 = arith.constant 1 : index
    %c0_21 = arith.constant 0 : index
    %c0_22 = arith.constant 0 : index
    %14 = tpu.strided_load %arg9[%c1_20, %c0_21, %c0_22] {strides = array<i32: 2, 2, 1>} : memref<18x18x8xf32, #tpu.memory_space<vmem>>, vector<8x8x8xf32>
    %c1_23 = arith.constant 1 : index
    %c1_24 = arith.constant 1 : index
    %c0_25 = arith.constant 0 : index
    %15 = tpu.strided_load %arg9[%c1_23, %c1_24, %c0_25] {strides = array<i32: 2, 2, 1>} : memref<18x18x8xf32, #tpu.memory_space<vmem>>, vector<8x8x8xf32>
    %c1_26 = arith.constant 1 : index
    %c2_27 = arith.constant 2 : index
    %c0_28 = arith.constant 0 : index
    %16 = tpu.strided_load %arg9[%c1_26, %c2_27, %c0_28] {strides = array<i32: 2, 2, 1>} : memref<18x18x8xf32, #tpu.memory_space<vmem>>, vector<8x8x8xf32>
    %c2_29 = arith.constant 2 : index
    %c0_30 = arith.constant 0 : index
    %c0_31 = arith.constant 0 : index
    %17 = tpu.strided_load %arg9[%c2_29, %c0_30, %c0_31] {strides = array<i32: 2, 2, 1>} : memref<18x18x8xf32, #tpu.memory_space<vmem>>, vector<8x8x8xf32>
    %c2_32 = arith.constant 2 : index
    %c1_33 = arith.constant 1 : index
    %c0_34 = arith.constant 0 : index
    %18 = tpu.strided_load %arg9[%c2_32, %c1_33, %c0_34] {strides = array<i32: 2, 2, 1>} : memref<18x18x8xf32, #tpu.memory_space<vmem>>, vector<8x8x8xf32>
    %c2_35 = arith.constant 2 : index
    %c2_36 = arith.constant 2 : index
    %c0_37 = arith.constant 0 : index
    %19 = tpu.strided_load %arg9[%c2_35, %c2_36, %c0_37] {strides = array<i32: 2, 2, 1>} : memref<18x18x8xf32, #tpu.memory_space<vmem>>, vector<8x8x8xf32>
    %20 = tpu.concatenate %11, %12, %13, %14, %15, %16, %17, %18, %19 in 2 : vector<8x8x8xf32>, vector<8x8x8xf32>, vector<8x8x8xf32>, vector<8x8x8xf32>, vector<8x8x8xf32>, vector<8x8x8xf32>, vector<8x8x8xf32>, vector<8x8x8xf32>, vector<8x8x8xf32> -> vector<8x8x72xf32>
    %21 = vector.shape_cast %20 : vector<8x8x72xf32> to vector<64x72xf32>
    %c0_38 = arith.constant 0 : index
    %c0_39 = arith.constant 0 : index
    %22 = vector.load %arg4[%c0_38, %c0_39] : memref<72x8xf32, #tpu.memory_space<vmem>>, vector<72x8xf32>
    %cst_40 = arith.constant dense<0.000000e+00> : vector<64x8xf32>
    %23 = tpu.matmul %21, %22, %cst_40 {dimension_numbers = #tpu.dot_dimension_numbers<[1], [0], [0], [1], [0, 0, 1, 1], [], []>} : vector<64x72xf32>, vector<72x8xf32>, vector<64x8xf32> -> vector<64x8xf32>
    %c0_41 = arith.constant 0 : index
    %c0_42 = arith.constant 0 : index
    %24 = vector.load %arg5[%c0_41, %c0_42] : memref<1x8xf32, #tpu.memory_space<vmem>>, vector<1x8xf32>
    %25 = vector.broadcast %24 : vector<1x8xf32> to vector<64x8xf32>
    %26 = arith.addf %23, %25 : vector<64x8xf32>
    %c0_43 = arith.constant 0 : index
    %c0_44 = arith.constant 0 : index
    %27 = vector.load %arg6[%c0_43, %c0_44] : memref<8x8xf32, #tpu.memory_space<vmem>>, vector<8x8xf32>
    %cst_45 = arith.constant dense<0.000000e+00> : vector<8x64xf32>
    %28 = tpu.matmul %27, %26, %cst_45 {dimension_numbers = #tpu.dot_dimension_numbers<[1], [1], [0], [0], [0, 0, 1, 0], [], []>} : vector<8x8xf32>, vector<64x8xf32>, vector<8x64xf32> -> vector<8x64xf32>
    %c0_46 = arith.constant 0 : index
    %c0_47 = arith.constant 0 : index
    %29 = vector.load %arg7[%c0_46, %c0_47] : memref<8x1xf32, #tpu.memory_space<vmem>>, vector<8x1xf32>
    %30 = vector.broadcast %29 : vector<8x1xf32> to vector<8x64xf32>
    %31 = arith.addf %28, %30 : vector<8x64xf32>
    %cst_48 = arith.constant 0.000000e+00 : f32
    %cst_49 = arith.constant 6.000000e+00 : f32
    %32 = vector.broadcast %cst_48 : f32 to vector<8x64xf32>
    %33 = arith.maximumf %32, %31 : vector<8x64xf32>
    %34 = vector.broadcast %cst_49 : f32 to vector<8x64xf32>
    %35 = arith.minimumf %34, %33 : vector<8x64xf32>
    %c0_50 = arith.constant 0 : index
    %c0_51 = arith.constant 0 : index
    %c0_52 = arith.constant 0 : index
    %36 = vector.load %arg8[%c0_50, %c0_51, %c0_52] : memref<1x8x64xf32, #tpu.memory_space<vmem>>, vector<1x8x64xf32>
    %37 = vector.shape_cast %36 : vector<1x8x64xf32> to vector<8x64xf32>
    %38 = vector.shape_cast %35 : vector<8x64xf32> to vector<1x8x64xf32>
    tpu.vector_store %arg8[%c0_50, %c0_51, %c0_52], %38 {strides = array<i32>} : memref<1x8x64xf32, #tpu.memory_space<vmem>>, vector<1x8x64xf32>,
    return
  }
  func.func @transform_0(%arg0: i32) -> (i32, i32, i32) {
    %c0_i32 = arith.constant 0 : i32
    %c0_i32_0 = arith.constant 0 : i32
    %c0_i32_1 = arith.constant 0 : i32
    return %arg0, %c0_i32, %c0_i32_0 : i32, i32, i32
  }
  func.func @transform_1(%arg0: i32) -> (i32, i32) {
    %c0_i32 = arith.constant 0 : i32
    %c0_i32_0 = arith.constant 0 : i32
    %c0_i32_1 = arith.constant 0 : i32
    return %c0_i32, %c0_i32_0 : i32, i32
  }
  func.func @transform_2(%arg0: i32) -> (i32, i32) {
    %c0_i32 = arith.constant 0 : i32
    %c0_i32_0 = arith.constant 0 : i32
    %c0_i32_1 = arith.constant 0 : i32
    return %c0_i32, %c0_i32_0 : i32, i32
  }
  func.func @transform_3(%arg0: i32) -> (i32, i32) {
    %c0_i32 = arith.constant 0 : i32
    %c0_i32_0 = arith.constant 0 : i32
    %c0_i32_1 = arith.constant 0 : i32
    return %c0_i32, %c0_i32_0 : i32, i32
  }
  func.func @transform_4(%arg0: i32) -> (i32, i32) {
    %c0_i32 = arith.constant 0 : i32
    %c0_i32_0 = arith.constant 0 : i32
    %c0_i32_1 = arith.constant 0 : i32
    return %c0_i32, %c0_i32_0 : i32, i32
  }
  func.func @transform_5(%arg0: i32) -> (i32, i32) {
    %c0_i32 = arith.constant 0 : i32
    %c0_i32_0 = arith.constant 0 : i32
    %c0_i32_1 = arith.constant 0 : i32
    return %c0_i32, %c0_i32_0 : i32, i32
  }
  func.func @transform_6(%arg0: i32) -> (i32, i32) {
    %c0_i32 = arith.constant 0 : i32
    %c0_i32_0 = arith.constant 0 : i32
    %c0_i32_1 = arith.constant 0 : i32
    return %c0_i32, %c0_i32_0 : i32, i32
  }
  func.func @transform_7(%arg0: i32) -> (i32, i32, i32) {
    %c0_i32 = arith.constant 0 : i32
    %c0_i32_0 = arith.constant 0 : i32
    %c0_i32_1 = arith.constant 0 : i32
    return %arg0, %c0_i32, %c0_i32_0 : i32, i32, i32
  }
}

</mosaic_0001>

<llo_original>
// kernel: _lambda_.3
$region0: #{_lambda_.3}
  #allocation0 [shape = 'u32[]', space=smem, size = 0x4, offset = 0x4, fixed_abs, tag = 'smem constant byte address 0x4 - core index']
  #allocation1 [shape = 'u32[144,128]{1,0:T(1,128)}', space=vmem, size = 0x12000, scoped, tag = 'internal scratch']
  #allocation2 [shape = 'f32[18,18,8]{2,1,0:T(8,128)}', space=vmem, size = 0x36000, scoped, tag = 'scratch operand']
  %s0 = inlined_call_operand.vmem [shape: f32[2,4,256], index: 0, kind: input, shape index: {}]
  %s1 = inlined_call_operand.vmem [shape: f32[4,8], index: 1, kind: input, shape index: {}]
  %s2 = inlined_call_operand.vmem [shape: f32[1,8], index: 2, kind: input, shape index: {}]
  %s3 = inlined_call_operand.vmem [shape: f32[72,8], index: 3, kind: input, shape index: {}]
  %s4 = inlined_call_operand.vmem [shape: f32[1,8], index: 4, kind: input, shape index: {}]
  %s5 = inlined_call_operand.vmem [shape: f32[8,8], index: 5, kind: input, shape index: {}]
  %s6 = inlined_call_operand.vmem [shape: f32[8,1], index: 6, kind: input, shape index: {}]
  %s7 = inlined_call_operand.vmem [shape: f32[2,8,64], index: 7, kind: output, shape index: {}]
  %s8 = sld [smem:[#allocation0]]
  $region61: #{_lambda_.3} parent=0
    _
  %s10 = ssub.s32 1, %s8
  %s11 = scalar_select 0, %s10, %s8
  loop: start=0, step=1, limit=4
  $region2: #{_lambda_.3} parent=0 // loop_pre_header
    _
  $region3: #{_lambda_.3} parent=0 // loop_header
    %s13 = sphi 0, %s17
    %p14 = scmp.ge.s32.totalorder %s13, 4
    %s23 = sphi 0, %s25
    %s26 = sphi 0, %s23
    %s27 = sphi 0, %s26
    %s43 = sphi 0, %s27
    %s47 = sphi 0, %s47
    %s49 = sphi 0, %s47
    %s50 = sphi 0, %s49
    %s64 = sphi 0, %s50
    %s68 = sphi 0, %s68
    %s70 = sphi 0, %s68
    %s71 = sphi 0, %s70
    %s85 = sphi 0, %s71
    %s89 = sphi 0, %s89
    %s91 = sphi 0, %s89
    %s92 = sphi 0, %s91
    %s106 = sphi 0, %s92
    %s110 = sphi 0, %s110
    %s112 = sphi 0, %s110
    %s113 = sphi 0, %s112
    %s127 = sphi 0, %s113
    %s131 = sphi 0, %s131
    %s133 = sphi 0, %s131
    %s134 = sphi 0, %s133
    %s148 = sphi 0, %s134
    %s152 = sphi 0, %s152
    %s154 = sphi 0, %s152
    %s155 = sphi 0, %s154
    %s169 = sphi 0, %s155
    %s175 = sphi 0, %s177
    %s178 = sphi 0, %s175
    %s179 = sphi 0, %s178
    %s195 = sphi 0, %s179
  $region4: #{_lambda_.3} parent=0 // loop_header_branch
    %16 = sbr.rel (%p14) target = $region8
  $region5: #{_lambda_.3} parent=0 // loop_body
    %s18 = ssub.s32 %s13, 1
    %s19 = ssub.s32 %s13, 2
    %s20 = sadd.s32 %s13, 1
    %s21 = ssub.s32 %s13, %s20
    %p22 = scmp.eq.s32.totalorder %s21, 0
    %s24 = sadd.s32 %s23, 1
    %s25 = scalar_select %p22, %s23, %s24
    %p28 = pneg %p22
    %p29 = scmp.eq.s32.totalorder %s13, 1
    %p30 = por %p28, %p29
    %p31 = scmp.ne.s32.totalorder %s23, %s26
    %p32 = scmp.eq.s32.totalorder %s13, 0
    %p33 = por %p31, %p32
    %p34 = scmp.ne.s32.totalorder %s23, %s26
    %p35 = scmp.eq.s32.totalorder %s18, 1
    %p36 = por %p34, %p35
    %p37 = scmp.ne.s32.totalorder %s26, %s27
    %p38 = scmp.eq.s32.totalorder %s18, 0
    %p39 = por %p37, %p38
    %p40 = scmp.ne.s32.totalorder %s26, %s27
    %p41 = scmp.eq.s32.totalorder %s19, 1
    %p42 = por %p40, %p41
    %p44 = scmp.ne.s32.totalorder %s27, %s43
    %p45 = scmp.eq.s32.totalorder %s19, 0
    %p46 = por %p44, %p45
    %s48 = sadd.s32 %s47, 1
    %p51 = scmp.eq.s32.totalorder %s13, 1
    %p52 = scmp.ne.s32.totalorder %s47, %s49
    %p53 = scmp.eq.s32.totalorder %s13, 0
    %p54 = por %p52, %p53
    %p55 = scmp.ne.s32.totalorder %s47, %s49
    %p56 = scmp.eq.s32.totalorder %s18, 1
    %p57 = por %p55, %p56
    %p58 = scmp.ne.s32.totalorder %s49, %s50
    %p59 = scmp.eq.s32.totalorder %s18, 0
    %p60 = por %p58, %p59
    %p61 = scmp.ne.s32.totalorder %s49, %s50
    %p62 = scmp.eq.s32.totalorder %s19, 1
    %p63 = por %p61, %p62
    %p65 = scmp.ne.s32.totalorder %s50, %s64
    %p66 = scmp.eq.s32.totalorder %s19, 0
    %p67 = por %p65, %p66
    %s69 = sadd.s32 %s68, 1
    %p72 = scmp.eq.s32.totalorder %s13, 1
    %p73 = scmp.ne.s32.totalorder %s68, %s70
    %p74 = scmp.eq.s32.totalorder %s13, 0
    %p75 = por %p73, %p74
    %p76 = scmp.ne.s32.totalorder %s68, %s70
    %p77 = scmp.eq.s32.totalorder %s18, 1
    %p78 = por %p76, %p77
    %p79 = scmp.ne.s32.totalorder %s70, %s71
    %p80 = scmp.eq.s32.totalorder %s18, 0
    %p81 = por %p79, %p80
    %p82 = scmp.ne.s32.totalorder %s70, %s71
    %p83 = scmp.eq.s32.totalorder %s19, 1
    %p84 = por %p82, %p83
    %p86 = scmp.ne.s32.totalorder %s71, %s85
    %p87 = scmp.eq.s32.totalorder %s19, 0
    %p88 = por %p86, %p87
    %s90 = sadd.s32 %s89, 1
    %p93 = scmp.eq.s32.totalorder %s13, 1
    %p94 = scmp.ne.s32.totalorder %s89, %s91
    %p95 = scmp.eq.s32.totalorder %s13, 0
    %p96 = por %p94, %p95
    %p97 = scmp.ne.s32.totalorder %s89, %s91
    %p98 = scmp.eq.s32.totalorder %s18, 1
    %p99 = por %p97, %p98
    %p100 = scmp.ne.s32.totalorder %s91, %s92
    %p101 = scmp.eq.s32.totalorder %s18, 0
    %p102 = por %p100, %p101
    %p103 = scmp.ne.s32.totalorder %s91, %s92
    %p104 = scmp.eq.s32.totalorder %s19, 1
    %p105 = por %p103, %p104
    %p107 = scmp.ne.s32.totalorder %s92, %s106
    %p108 = scmp.eq.s32.totalorder %s19, 0
    %p109 = por %p107, %p108
    %s111 = sadd.s32 %s110, 1
    %p114 = scmp.eq.s32.totalorder %s13, 1
    %p115 = scmp.ne.s32.totalorder %s110, %s112
    %p116 = scmp.eq.s32.totalorder %s13, 0
    %p117 = por %p115, %p116
    %p118 = scmp.ne.s32.totalorder %s110, %s112
    %p119 = scmp.eq.s32.totalorder %s18, 1
    %p120 = por %p118, %p119
    %p121 = scmp.ne.s32.totalorder %s112, %s113
    %p122 = scmp.eq.s32.totalorder %s18, 0
    %p123 = por %p121, %p122
    %p124 = scmp.ne.s32.totalorder %s112, %s113
    %p125 = scmp.eq.s32.totalorder %s19, 1
    %p126 = por %p124, %p125
    %p128 = scmp.ne.s32.totalorder %s113, %s127
    %p129 = scmp.eq.s32.totalorder %s19, 0
    %p130 = por %p128, %p129
    %s132 = sadd.s32 %s131, 1
    %p135 = scmp.eq.s32.totalorder %s13, 1
    %p136 = scmp.ne.s32.totalorder %s131, %s133
    %p137 = scmp.eq.s32.totalorder %s13, 0
    %p138 = por %p136, %p137
    %p139 = scmp.ne.s32.totalorder %s131, %s133
    %p140 = scmp.eq.s32.totalorder %s18, 1
    %p141 = por %p139, %p140
    %p142 = scmp.ne.s32.totalorder %s133, %s134
    %p143 = scmp.eq.s32.totalorder %s18, 0
    %p144 = por %p142, %p143
    %p145 = scmp.ne.s32.totalorder %s133, %s134
    %p146 = scmp.eq.s32.totalorder %s19, 1
    %p147 = por %p145, %p146
    %p149 = scmp.ne.s32.totalorder %s134, %s148
    %p150 = scmp.eq.s32.totalorder %s19, 0
    %p151 = por %p149, %p150
    %s153 = sadd.s32 %s152, 1
    %p156 = scmp.eq.s32.totalorder %s13, 1
    %p157 = scmp.ne.s32.totalorder %s152, %s154
    %p158 = scmp.eq.s32.totalorder %s13, 0
    %p159 = por %p157, %p158
    %p160 = scmp.ne.s32.totalorder %s152, %s154
    %p161 = scmp.eq.s32.totalorder %s18, 1
    %p162 = por %p160, %p161
    %p163 = scmp.ne.s32.totalorder %s154, %s155
    %p164 = scmp.eq.s32.totalorder %s18, 0
    %p165 = por %p163, %p164
    %p166 = scmp.ne.s32.totalorder %s154, %s155
    %p167 = scmp.eq.s32.totalorder %s19, 1
    %p168 = por %p166, %p167
    %p170 = scmp.ne.s32.totalorder %s155, %s169
    %p171 = scmp.eq.s32.totalorder %s19, 0
    %p172 = por %p170, %p171
    %s173 = ssub.s32 %s13, %s20
    %p174 = scmp.eq.s32.totalorder %s173, 0
    %s176 = sadd.s32 %s175, 1
    %s177 = scalar_select %p174, %s175, %s176
    %p180 = pneg %p174
    %p181 = scmp.eq.s32.totalorder %s13, 1
    %p182 = por %p180, %p181
    %p183 = scmp.ne.s32.totalorder %s175, %s178
    %p184 = scmp.eq.s32.totalorder %s13, 0
    %p185 = por %p183, %p184
    %p186 = scmp.ne.s32.totalorder %s175, %s178
    %p187 = scmp.eq.s32.totalorder %s18, 1
    %p188 = por %p186, %p187
    %p189 = scmp.ne.s32.totalorder %s178, %s179
    %p190 = scmp.eq.s32.totalorder %s18, 0
    %p191 = por %p189, %p190
    %p192 = scmp.ne.s32.totalorder %s178, %s179
    %p193 = scmp.eq.s32.totalorder %s19, 1
    %p194 = por %p192, %p193
    %p196 = scmp.ne.s32.totalorder %s179, %s195
    %p197 = scmp.eq.s32.totalorder %s19, 0
    %p198 = por %p196, %p197
    %p199 = scmp.le.s32.totalorder 1, %s13
    %p200 = scmp.lt.s32.totalorder %s13, 3
    %p201 = pnand %p199, %p200
    %p202 = pneg %p201
    // Predicated region
    $region9: #{_lambda_.3} parent=5 // pred_check
      _
    $region10: #{_lambda_.3} parent=5 // pred_check_branch
      %204 = sbr.rel (%p201) target = $region12
    $region11: #{_lambda_.3} parent=5 // pred_region
      %s205 = ssub.s32 %s13, 1
      // Predicated region
      $region13: #{_lambda_.3} parent=11 // pred_check
        %p206 = pneg %p60
      $region14: #{_lambda_.3} parent=11 // pred_check_branch
        %208 = sbr.rel (%p206) target = $region16
      $region15: #{_lambda_.3} parent=11 // pred_region
        _
      $region16: #{_lambda_.3} parent=11 // pred_fallthru
        _
      // Predicated region
      $region17: #{_lambda_.3} parent=11 // pred_check
        %p209 = pneg %p81
      $region18: #{_lambda_.3} parent=11 // pred_check_branch
        %211 = sbr.rel (%p209) target = $region20
      $region19: #{_lambda_.3} parent=11 // pred_region
        _
      $region20: #{_lambda_.3} parent=11 // pred_fallthru
        _
      // Predicated region
      $region21: #{_lambda_.3} parent=11 // pred_check
        %p212 = pneg %p102
      $region22: #{_lambda_.3} parent=11 // pred_check_branch
        %214 = sbr.rel (%p212) target = $region24
      $region23: #{_lambda_.3} parent=11 // pred_region
        _
      $region24: #{_lambda_.3} parent=11 // pred_fallthru
        _
      // Predicated region
      $region25: #{_lambda_.3} parent=11 // pred_check
        %p215 = pneg %p123
      $region26: #{_lambda_.3} parent=11 // pred_check_branch
        %217 = sbr.rel (%p215) target = $region28
      $region27: #{_lambda_.3} parent=11 // pred_region
        _
      $region28: #{_lambda_.3} parent=11 // pred_fallthru
        _
      // Predicated region
      $region29: #{_lambda_.3} parent=11 // pred_check
        %p218 = pneg %p144
      $region30: #{_lambda_.3} parent=11 // pred_check_branch
        %220 = sbr.rel (%p218) target = $region32
      $region31: #{_lambda_.3} parent=11 // pred_region
        _
      $region32: #{_lambda_.3} parent=11 // pred_fallthru
        _
      // Predicated region
      $region33: #{_lambda_.3} parent=11 // pred_check
        %p221 = pneg %p165
      $region34: #{_lambda_.3} parent=11 // pred_check_branch
        %223 = sbr.rel (%p221) target = $region36
      $region35: #{_lambda_.3} parent=11 // pred_region
        _
      $region36: #{_lambda_.3} parent=11 // pred_fallthru
        _
    $region12: #{_lambda_.3} parent=5 // pred_fallthru
      _
    %p224 = scmp.lt.s32.totalorder %s13, 2
    // Predicated region
    $region37: #{_lambda_.3} parent=5 // pred_check
      %p225 = pneg %p224
    $region38: #{_lambda_.3} parent=5 // pred_check_branch
      %227 = sbr.rel (%p225) target = $region40
    $region39: #{_lambda_.3} parent=5 // pred_region
      // Predicated region
      $region41: #{_lambda_.3} parent=39 // pred_check
        %p228 = pneg %p33
      $region42: #{_lambda_.3} parent=39 // pred_check_branch
        %230 = sbr.rel (%p228) target = $region44
      $region43: #{_lambda_.3} parent=39 // pred_region
        %p231 = scmp.lt.s32.totalorder %s13, 1
        %s232 = scalar_select %p231, %s13, 1
        %s233 = smul.addr %s232, 2
        %s234 = smul.addr %s233, 4
        %s235 = scalar_lea.vmem %s0, %s234
      $region44: #{_lambda_.3} parent=39 // pred_fallthru
        _
    $region40: #{_lambda_.3} parent=5 // pred_fallthru
      _
    %p236 = scmp.le.s32.totalorder 1, %s13
    %p237 = scmp.lt.s32.totalorder %s13, 3
    %p238 = pnand %p236, %p237
    %p239 = pneg %p238
    // Predicated region
    $region45: #{_lambda_.3} parent=5 // pred_check
      _
    $region46: #{_lambda_.3} parent=5 // pred_check_branch
      %241 = sbr.rel (%p238) target = $region48
    $region47: #{_lambda_.3} parent=5 // pred_region
      %s242 = ssub.s32 %s13, 1
      %p243 = scmp.lt.s32.totalorder %s18, 1
      %s244 = scalar_select %p243, %s18, 1
      %s245 = smul.addr %s244, 2
      %s246 = smul.addr %s245, 4
      %s247 = scalar_lea.vmem %s0, %s246
      %p248 = pneg %p39
      %p249 = pneg %p36
      %p250 = pneg %p60
      %p251 = pneg %p57
      %p252 = pneg %p81
      %p253 = pneg %p78
      %p254 = pneg %p102
      %p255 = pneg %p99
      %p256 = pneg %p123
      %p257 = pneg %p120
      %p258 = pneg %p144
      %p259 = pneg %p141
      %p260 = pneg %p165
      %p261 = pneg %p162
      %p262 = pneg %p191
      %p263 = pneg %p188
      %p264 = scmp.lt.s32.totalorder %s18, 1
      %s265 = scalar_select %p264, %s18, 1
      %s266 = smul.addr %s265, 8
      %s267 = scalar_lea.vmem %s7, %s266
      %p268 = scmp.lt.s32.totalorder %s18, 1
      %s269 = scalar_select %p268, %s18, 1
      %s270 = smul.addr %s269, 2
      %s271 = smul.addr %s270, 4
      %s272 = scalar_lea.vmem %s0, %s271
      %p273 = scmp.lt.s32.totalorder %s18, 1
      %s274 = scalar_select %p273, %s18, 1
      %s275 = smul.addr %s274, 8
      %s276 = scalar_lea.vmem %s7, %s275
      %v277 = vld [vmem:[%s272] sm:$0xff]
      %v278 = vld [vmem:[%s1] sm:$0xf]
      %v279 = vld [vmem:[%s2] sm:$0x1]
      %v281 = vlaneseq
      %v282 = vshrl.u32 %v281, 7
      %v283 = vsub.s32 0, %v282
      %v284 = vrot.slane %v279, %v283
      %v287 = vcombine.high %v277, %v277
      %289 = vxpose.xlu0.b32.start [1/16] %v277, 128
      %290 = vxpose.xlu0.b32.cont [2/16] 0.0, 128
      %291 = vxpose.xlu0.b32.cont [3/16] 0.0, 128
      %292 = vxpose.xlu0.b32.cont [4/16] 0.0, 128
      %293 = vxpose.xlu0.b32.cont [5/16] 0.0, 128
      %294 = vxpose.xlu0.b32.cont [6/16] 0.0, 128
      %295 = vxpose.xlu0.b32.cont [7/16] 0.0, 128
      %296 = vxpose.xlu0.b32.cont [8/16] 0.0, 128
      %297 = vxpose.xlu0.b32.cont [9/16] 0.0, 128
      %298 = vxpose.xlu0.b32.cont [10/16] 0.0, 128
      %299 = vxpose.xlu0.b32.cont [11/16] 0.0, 128
      %300 = vxpose.xlu0.b32.cont [12/16] 0.0, 128
      %301 = vxpose.xlu0.b32.cont [13/16] 0.0, 128
      %302 = vxpose.xlu0.b32.cont [14/16] 0.0, 128
      %303 = vxpose.xlu0.b32.cont [15/16] 0.0, 128
      %304 = vxpose.xlu0.b32.end [16/16] 0.0, 128
      %v305 = vpop.trf.xlu0
      %v306 = vpop.trf.xlu0
      %v307 = vpop.trf.xlu0
      %v308 = vpop.trf.xlu0
      %v309 = vpop.trf.xlu0
      %v310 = vpop.trf.xlu0
      %v311 = vpop.trf.xlu0
      %v312 = vpop.trf.xlu0
      %v313 = vpop.trf.xlu0
      %v314 = vpop.trf.xlu0
      %v315 = vpop.trf.xlu0
      %v316 = vpop.trf.xlu0
      %v317 = vpop.trf.xlu0
      %v318 = vpop.trf.xlu0
      %v319 = vpop.trf.xlu0
      %v320 = vpop.trf.xlu0
      %321 = vxpose.xlu0.b32.start [1/16] %v287, 128
      %322 = vxpose.xlu0.b32.cont [2/16] 0.0, 128
      %323 = vxpose.xlu0.b32.cont [3/16] 0.0, 128
      %324 = vxpose.xlu0.b32.cont [4/16] 0.0, 128
      %325 = vxpose.xlu0.b32.cont [5/16] 0.0, 128
      %326 = vxpose.xlu0.b32.cont [6/16] 0.0, 128
      %327 = vxpose.xlu0.b32.cont [7/16] 0.0, 128
      %328 = vxpose.xlu0.b32.cont [8/16] 0.0, 128
      %329 = vxpose.xlu0.b32.cont [9/16] 0.0, 128
      %330 = vxpose.xlu0.b32.cont [10/16] 0.0, 128
      %331 = vxpose.xlu0.b32.cont [11/16] 0.0, 128
      %332 = vxpose.xlu0.b32.cont [12/16] 0.0, 128
      %333 = vxpose.xlu0.b32.cont [13/16] 0.0, 128
      %334 = vxpose.xlu0.b32.cont [14/16] 0.0, 128
      %335 = vxpose.xlu0.b32.cont [15/16] 0.0, 128
      %336 = vxpose.xlu0.b32.end [16/16] 0.0, 128
      %v337 = vpop.trf.xlu0
      %v338 = vpop.trf.xlu0
      %v339 = vpop.trf.xlu0
      %v340 = vpop.trf.xlu0
      %v341 = vpop.trf.xlu0
      %v342 = vpop.trf.xlu0
      %v343 = vpop.trf.xlu0
      %v344 = vpop.trf.xlu0
      %v345 = vpop.trf.xlu0
      %v346 = vpop.trf.xlu0
      %v347 = vpop.trf.xlu0
      %v348 = vpop.trf.xlu0
      %v349 = vpop.trf.xlu0
      %v350 = vpop.trf.xlu0
      %v351 = vpop.trf.xlu0
      %v352 = vpop.trf.xlu0
      %vm353 = vcmask 31744
      %v355 = vsel %vm353, %v305, 0
      %v358 = vsel %vm353, %v306, 0
      %v361 = vsel %vm353, %v307, 0
      %v364 = vsel %vm353, %v308, 0
      %v367 = vsel %vm353, %v309, 0
      %v370 = vsel %vm353, %v310, 0
      %v373 = vsel %vm353, %v311, 0
      %v376 = vsel %vm353, %v312, 0
      %v379 = vsel %vm353, %v313, 0
      %v382 = vsel %vm353, %v314, 0
      %v385 = vsel %vm353, %v315, 0
      %v388 = vsel %vm353, %v316, 0
      %v391 = vsel %vm353, %v317, 0
      %v394 = vsel %vm353, %v318, 0
      %v397 = vsel %vm353, %v319, 0
      %v400 = vsel %vm353, %v320, 0
      %v403 = vsel %vm353, %v337, 0
      %v406 = vsel %vm353, %v338, 0
      %v409 = vsel %vm353, %v339, 0
      %v412 = vsel %vm353, %v340, 0
      %v415 = vsel %vm353, %v341, 0
      %v418 = vsel %vm353, %v342, 0
      %v421 = vsel %vm353, %v343, 0
      %v424 = vsel %vm353, %v344, 0
      %v427 = vsel %vm353, %v345, 0
      %v430 = vsel %vm353, %v346, 0
      %v433 = vsel %vm353, %v347, 0
      %v436 = vsel %vm353, %v348, 0
      %v439 = vsel %vm353, %v349, 0
      %v442 = vsel %vm353, %v350, 0
      %v445 = vsel %vm353, %v351, 0
      %v448 = vsel %vm353, %v352, 0
      %vm450 = vcmask 1043456
      %v452 = vsel %vm450, %v278, 0
      %454 = vmatprep.subr.mxu0 0.0
      %455 = vmatpush1.msra.mxu0 0.0
      %456 = vmatprep.subr.mxu0 0.0
      %457 = vmatpush1.msra.mxu0 0.0
      %458 = vmatprep.subr.mxu0 0.0
      %459 = vmatpush1.msra.mxu0 0.0
      %460 = vmatprep.subr.mxu0 0.0
      %461 = vmatpush1.msra.mxu0 0.0
      %462 = vmatprep.subr.mxu0 0.0
      %463 = vmatpush1.msra.mxu0 0.0
      %464 = vmatprep.subr.mxu0 0.0
      %465 = vmatpush1.msra.mxu0 0.0
      %466 = vmatprep.subr.mxu0 0.0
      %467 = vmatpush1.msra.mxu0 0.0
      %468 = vmatprep.subr.mxu0 0.0
      %469 = vmatpush1.msra.mxu0 0.0
      %470 = vmatprep.subr.mxu0 0.0
      %471 = vmatpush1.msra.mxu0 0.0
      %472 = vmatprep.subr.mxu0 0.0
      %473 = vmatpush1.msra.mxu0 0.0
      %474 = vmatprep.subr.mxu0 0.0
      %475 = vmatpush1.msra.mxu0 0.0
      %476 = vmatprep.subr.mxu0 0.0
      %477 = vmatpush1.msra.mxu0 0.0
      %478 = vmatprep.subr.mxu0 0.0
      %479 = vmatpush1.msra.mxu0 0.0
      %480 = vmatprep.subr.mxu0 0.0
      %481 = vmatpush1.msra.mxu0 0.0
      %482 = vmatprep.subr.mxu0 0.0
      %483 = vmatpush1.msra.mxu0 0.0
      %484 = vmatprep.subr.mxu0 0.0
      %485 = vmatpush1.msra.mxu0 %v452
      %486 = vmatprep.subr.mxu0 0.0
      %487 = vmatpush2.msra.mxu0 0.0
      %488 = vmatprep.subr.mxu0 0.0
      %489 = vmatpush2.msra.mxu0 0.0
      %490 = vmatprep.subr.mxu0 0.0
      %491 = vmatpush2.msra.mxu0 0.0
      %492 = vmatprep.subr.mxu0 0.0
      %493 = vmatpush2.msra.mxu0 0.0
      %494 = vmatprep.subr.mxu0 0.0
      %495 = vmatpush2.msra.mxu0 0.0
      %496 = vmatprep.subr.mxu0 0.0
      %497 = vmatpush2.msra.mxu0 0.0
      %498 = vmatprep.subr.mxu0 0.0
      %499 = vmatpush2.msra.mxu0 0.0
      %500 = vmatprep.subr.mxu0 0.0
      %501 = vmatpush2.msra.mxu0 0.0
      %502 = vmatprep.subr.mxu0 0.0
      %503 = vmatpush2.msra.mxu0 0.0
      %504 = vmatprep.subr.mxu0 0.0
      %505 = vmatpush2.msra.mxu0 0.0
      %506 = vmatprep.subr.mxu0 0.0
      %507 = vmatpush2.msra.mxu0 0.0
      %508 = vmatprep.subr.mxu0 0.0
      %509 = vmatpush2.msra.mxu0 0.0
      %510 = vmatprep.subr.mxu0 0.0
      %511 = vmatpush2.msra.mxu0 0.0
      %512 = vmatprep.subr.mxu0 0.0
      %513 = vmatpush2.msra.mxu0 0.0
      %514 = vmatprep.subr.mxu0 0.0
      %515 = vmatpush2.msra.mxu0 0.0
      %516 = vmatprep.subr.mxu0 0.0
      %517 = vmatpush2.msra.mxu0 0.0
      %518 = vmatprep.mubr.f32.mxu0 0.0
      %519 = vmatmul.mubr.f32.gmra.mxu0 %v355
      %v520 = vpop.f32.mrf.mxu0
      %v521 = vadd.f32 %v284, %v520
      %v522 = vpop.f32.mrf.mxu0
      %523 = vmatprep.mubr.f32.mxu0 0.0
      %524 = vmatmul.mubr.f32.gmra.mxu0 %v358
      %v525 = vpop.f32.mrf.mxu0
      %v526 = vadd.f32 %v284, %v525
      %v527 = vpop.f32.mrf.mxu0
      %528 = vmatprep.mubr.f32.mxu0 0.0
      %529 = vmatmul.mubr.f32.gmra.mxu0 %v361
      %v530 = vpop.f32.mrf.mxu0
      %v531 = vadd.f32 %v284, %v530
      %v532 = vpop.f32.mrf.mxu0
      %533 = vmatprep.mubr.f32.mxu0 0.0
      %534 = vmatmul.mubr.f32.gmra.mxu0 %v364
      %v535 = vpop.f32.mrf.mxu0
      %v536 = vadd.f32 %v284, %v535
      %v537 = vpop.f32.mrf.mxu0
      %538 = vmatprep.mubr.f32.mxu0 0.0
      %539 = vmatmul.mubr.f32.gmra.mxu0 %v367
      %v540 = vpop.f32.mrf.mxu0
      %v541 = vadd.f32 %v284, %v540
      %v542 = vpop.f32.mrf.mxu0
      %543 = vmatprep.mubr.f32.mxu0 0.0
      %544 = vmatmul.mubr.f32.gmra.mxu0 %v370
      %v545 = vpop.f32.mrf.mxu0
      %v546 = vadd.f32 %v284, %v545
      %v547 = vpop.f32.mrf.mxu0
      %548 = vmatprep.mubr.f32.mxu0 0.0
      %549 = vmatmul.mubr.f32.gmra.mxu0 %v373
      %v550 = vpop.f32.mrf.mxu0
      %v551 = vadd.f32 %v284, %v550
      %v552 = vpop.f32.mrf.mxu0
      %553 = vmatprep.mubr.f32.mxu0 0.0
      %554 = vmatmul.mubr.f32.gmra.mxu0 %v376
      %v555 = vpop.f32.mrf.mxu0
      %v556 = vadd.f32 %v284, %v555
      %v557 = vpop.f32.mrf.mxu0
      %558 = vmatprep.mubr.f32.mxu0 0.0
      %559 = vmatmul.mubr.f32.gmra.mxu0 %v379
      %v560 = vpop.f32.mrf.mxu0
      %v561 = vadd.f32 %v284, %v560
      %v562 = vpop.f32.mrf.mxu0
      %563 = vmatprep.mubr.f32.mxu0 0.0
      %564 = vmatmul.mubr.f32.gmra.mxu0 %v382
      %v565 = vpop.f32.mrf.mxu0
      %v566 = vadd.f32 %v284, %v565
      %v567 = vpop.f32.mrf.mxu0
      %568 = vmatprep.mubr.f32.mxu0 0.0
      %569 = vmatmul.mubr.f32.gmra.mxu0 %v385
      %v570 = vpop.f32.mrf.mxu0
      %v571 = vadd.f32 %v284, %v570
      %v572 = vpop.f32.mrf.mxu0
      %573 = vmatprep.mubr.f32.mxu0 0.0
      %574 = vmatmul.mubr.f32.gmra.mxu0 %v388
      %v575 = vpop.f32.mrf.mxu0
      %v576 = vadd.f32 %v284, %v575
      %v577 = vpop.f32.mrf.mxu0
      %578 = vmatprep.mubr.f32.mxu0 0.0
      %579 = vmatmul.mubr.f32.gmra.mxu0 %v391
      %v580 = vpop.f32.mrf.mxu0
      %v581 = vadd.f32 %v284, %v580
      %v582 = vpop.f32.mrf.mxu0
      %583 = vmatprep.mubr.f32.mxu0 0.0
      %584 = vmatmul.mubr.f32.gmra.mxu0 %v394
      %v585 = vpop.f32.mrf.mxu0
      %v586 = vadd.f32 %v284, %v585
      %v587 = vpop.f32.mrf.mxu0
      %588 = vmatprep.mubr.f32.mxu0 0.0
      %589 = vmatmul.mubr.f32.gmra.mxu0 %v397
      %v590 = vpop.f32.mrf.mxu0
      %v591 = vadd.f32 %v284, %v590
      %v592 = vpop.f32.mrf.mxu0
      %593 = vmatprep.mubr.f32.mxu0 0.0
      %594 = vmatmul.mubr.f32.gmra.mxu0 %v400
      %v595 = vpop.f32.mrf.mxu0
      %v596 = vadd.f32 %v284, %v595
      %v597 = vpop.f32.mrf.mxu0
      %598 = vmatprep.mubr.f32.mxu0 0.0
      %599 = vmatmul.mubr.f32.gmra.mxu0 %v403
      %v600 = vpop.f32.mrf.mxu0
      %v601 = vadd.f32 %v284, %v600
      %v602 = vpop.f32.mrf.mxu0
      %603 = vmatprep.mubr.f32.mxu0 0.0
      %604 = vmatmul.mubr.f32.gmra.mxu0 %v406
      %v605 = vpop.f32.mrf.mxu0
      %v606 = vadd.f32 %v284, %v605
      %v607 = vpop.f32.mrf.mxu0
      %608 = vmatprep.mubr.f32.mxu0 0.0
      %609 = vmatmul.mubr.f32.gmra.mxu0 %v409
      %v610 = vpop.f32.mrf.mxu0
      %v611 = vadd.f32 %v284, %v610
      %v612 = vpop.f32.mrf.mxu0
      %613 = vmatprep.mubr.f32.mxu0 0.0
      %614 = vmatmul.mubr.f32.gmra.mxu0 %v412
      %v615 = vpop.f32.mrf.mxu0
      %v616 = vadd.f32 %v284, %v615
      %v617 = vpop.f32.mrf.mxu0
      %618 = vmatprep.mubr.f32.mxu0 0.0
      %619 = vmatmul.mubr.f32.gmra.mxu0 %v415
      %v620 = vpop.f32.mrf.mxu0
      %v621 = vadd.f32 %v284, %v620
      %v622 = vpop.f32.mrf.mxu0
      %623 = vmatprep.mubr.f32.mxu0 0.0
      %624 = vmatmul.mubr.f32.gmra.mxu0 %v418
      %v625 = vpop.f32.mrf.mxu0
      %v626 = vadd.f32 %v284, %v625
      %v627 = vpop.f32.mrf.mxu0
      %628 = vmatprep.mubr.f32.mxu0 0.0
      %629 = vmatmul.mubr.f32.gmra.mxu0 %v421
      %v630 = vpop.f32.mrf.mxu0
      %v631 = vadd.f32 %v284, %v630
      %v632 = vpop.f32.mrf.mxu0
      %633 = vmatprep.mubr.f32.mxu0 0.0
      %634 = vmatmul.mubr.f32.gmra.mxu0 %v424
      %v635 = vpop.f32.mrf.mxu0
      %v636 = vadd.f32 %v284, %v635
      %v637 = vpop.f32.mrf.mxu0
      %638 = vmatprep.mubr.f32.mxu0 0.0
      %639 = vmatmul.mubr.f32.gmra.mxu0 %v427
      %v640 = vpop.f32.mrf.mxu0
      %v641 = vadd.f32 %v284, %v640
      %v642 = vpop.f32.mrf.mxu0
      %643 = vmatprep.mubr.f32.mxu0 0.0
      %644 = vmatmul.mubr.f32.gmra.mxu0 %v430
      %v645 = vpop.f32.mrf.mxu0
      %v646 = vadd.f32 %v284, %v645
      %v647 = vpop.f32.mrf.mxu0
      %648 = vmatprep.mubr.f32.mxu0 0.0
      %649 = vmatmul.mubr.f32.gmra.mxu0 %v433
      %v650 = vpop.f32.mrf.mxu0
      %v651 = vadd.f32 %v284, %v650
      %v652 = vpop.f32.mrf.mxu0
      %653 = vmatprep.mubr.f32.mxu0 0.0
      %654 = vmatmul.mubr.f32.gmra.mxu0 %v436
      %v655 = vpop.f32.mrf.mxu0
      %v656 = vadd.f32 %v284, %v655
      %v657 = vpop.f32.mrf.mxu0
      %658 = vmatprep.mubr.f32.mxu0 0.0
      %659 = vmatmul.mubr.f32.gmra.mxu0 %v439
      %v660 = vpop.f32.mrf.mxu0
      %v661 = vadd.f32 %v284, %v660
      %v662 = vpop.f32.mrf.mxu0
      %663 = vmatprep.mubr.f32.mxu0 0.0
      %664 = vmatmul.mubr.f32.gmra.mxu0 %v442
      %v665 = vpop.f32.mrf.mxu0
      %v666 = vadd.f32 %v284, %v665
      %v667 = vpop.f32.mrf.mxu0
      %668 = vmatprep.mubr.f32.mxu0 0.0
      %669 = vmatmul.mubr.f32.gmra.mxu0 %v445
      %v670 = vpop.f32.mrf.mxu0
      %v671 = vadd.f32 %v284, %v670
      %v672 = vpop.f32.mrf.mxu0
      %673 = vmatprep.mubr.f32.mxu0 0.0
      %674 = vmatmul.mubr.f32.gmra.mxu0 %v448
      %v675 = vpop.f32.mrf.mxu0
      %v676 = vadd.f32 %v284, %v675
      %v677 = vpop.f32.mrf.mxu0
      %678 = vdwg.mxu0
      %vm679 = vcmask 64512
      %680 = vst.msk [vmem:[#allocation2] sm:$0xff] %vm679, 0.0
      %681 = vst.msk [vmem:[#allocation2 + $0x8] sm:$0xff] %vm679, 0.0
      %vm682 = vcmask 58368
      %683 = vst.msk [vmem:[#allocation2 + $0x10] sm:$0x3] %vm682, 0.0
      %684 = vst.msk [vmem:[#allocation2 + $0x18] sm:$0xff] %vm679, 0.0
      %685 = vst.msk [vmem:[#allocation2 + $0x20] sm:$0xff] %vm679, 0.0
      %686 = vst.msk [vmem:[#allocation2 + $0x28] sm:$0x3] %vm682, 0.0
      %687 = vst.msk [vmem:[#allocation2 + $0x30] sm:$0xff] %vm679, 0.0
      %688 = vst.msk [vmem:[#allocation2 + $0x38] sm:$0xff] %vm679, 0.0
      %689 = vst.msk [vmem:[#allocation2 + $0x40] sm:$0x3] %vm682, 0.0
      %690 = vst.msk [vmem:[#allocation2 + $0x48] sm:$0xff] %vm679, 0.0
      %691 = vst.msk [vmem:[#allocation2 + $0x50] sm:$0xff] %vm679, 0.0
      %692 = vst.msk [vmem:[#allocation2 + $0x58] sm:$0x3] %vm682, 0.0
      %693 = vst.msk [vmem:[#allocation2 + $0x60] sm:$0xff] %vm679, 0.0
      %694 = vst.msk [vmem:[#allocation2 + $0x68] sm:$0xff] %vm679, 0.0
      %695 = vst.msk [vmem:[#allocation2 + $0x70] sm:$0x3] %vm682, 0.0
      %696 = vst.msk [vmem:[#allocation2 + $0x78] sm:$0xff] %vm679, 0.0
      %697 = vst.msk [vmem:[#allocation2 + $0x80] sm:$0xff] %vm679, 0.0
      %698 = vst.msk [vmem:[#allocation2 + $0x88] sm:$0x3] %vm682, 0.0
      %699 = vst.msk [vmem:[#allocation2 + $0x90] sm:$0xff] %vm679, 0.0
      %700 = vst.msk [vmem:[#allocation2 + $0x98] sm:$0xff] %vm679, 0.0
      %701 = vst.msk [vmem:[#allocation2 + $0xa0] sm:$0x3] %vm682, 0.0
      %702 = vst.msk [vmem:[#allocation2 + $0xa8] sm:$0xff] %vm679, 0.0
      %703 = vst.msk [vmem:[#allocation2 + $0xb0] sm:$0xff] %vm679, 0.0
      %704 = vst.msk [vmem:[#allocation2 + $0xb8] sm:$0x3] %vm682, 0.0
      %705 = vst.msk [vmem:[#allocation2 + $0xc0] sm:$0xff] %vm679, 0.0
      %706 = vst.msk [vmem:[#allocation2 + $0xc8] sm:$0xff] %vm679, 0.0
      %707 = vst.msk [vmem:[#allocation2 + $0xd0] sm:$0x3] %vm682, 0.0
      %708 = vst.msk [vmem:[#allocation2 + $0xd8] sm:$0xff] %vm679, 0.0
      %709 = vst.msk [vmem:[#allocation2 + $0xe0] sm:$0xff] %vm679, 0.0
      %710 = vst.msk [vmem:[#allocation2 + $0xe8] sm:$0x3] %vm682, 0.0
      %711 = vst.msk [vmem:[#allocation2 + $0xf0] sm:$0xff] %vm679, 0.0
      %712 = vst.msk [vmem:[#allocation2 + $0xf8] sm:$0xff] %vm679, 0.0
      %713 = vst.msk [vmem:[#allocation2 + $0x100] sm:$0x3] %vm682, 0.0
      %714 = vst.msk [vmem:[#allocation2 + $0x108] sm:$0xff] %vm679, 0.0
      %715 = vst.msk [vmem:[#allocation2 + $0x110] sm:$0xff] %vm679, 0.0
      %716 = vst.msk [vmem:[#allocation2 + $0x118] sm:$0x3] %vm682, 0.0
      %717 = vst.msk [vmem:[#allocation2 + $0x120] sm:$0xff] %vm679, 0.0
      %718 = vst.msk [vmem:[#allocation2 + $0x128] sm:$0xff] %vm679, 0.0
      %719 = vst.msk [vmem:[#allocation2 + $0x130] sm:$0x3] %vm682, 0.0
      %720 = vst.msk [vmem:[#allocation2 + $0x138] sm:$0xff] %vm679, 0.0
      %721 = vst.msk [vmem:[#allocation2 + $0x140] sm:$0xff] %vm679, 0.0
      %722 = vst.msk [vmem:[#allocation2 + $0x148] sm:$0x3] %vm682, 0.0
      %723 = vst.msk [vmem:[#allocation2 + $0x150] sm:$0xff] %vm679, 0.0
      %724 = vst.msk [vmem:[#allocation2 + $0x158] sm:$0xff] %vm679, 0.0
      %725 = vst.msk [vmem:[#allocation2 + $0x160] sm:$0x3] %vm682, 0.0
      %726 = vst.msk [vmem:[#allocation2 + $0x168] sm:$0xff] %vm679, 0.0
      %727 = vst.msk [vmem:[#allocation2 + $0x170] sm:$0xff] %vm679, 0.0
      %728 = vst.msk [vmem:[#allocation2 + $0x178] sm:$0x3] %vm682, 0.0
      %729 = vst.msk [vmem:[#allocation2 + $0x180] sm:$0xff] %vm679, 0.0
      %730 = vst.msk [vmem:[#allocation2 + $0x188] sm:$0xff] %vm679, 0.0
      %731 = vst.msk [vmem:[#allocation2 + $0x190] sm:$0x3] %vm682, 0.0
      %732 = vst.msk [vmem:[#allocation2 + $0x198] sm:$0xff] %vm679, 0.0
      %733 = vst.msk [vmem:[#allocation2 + $0x1a0] sm:$0xff] %vm679, 0.0
      %734 = vst.msk [vmem:[#allocation2 + $0x1a8] sm:$0x3] %vm682, 0.0
      %s735 = scalar_lea.vmem [#allocation2], 24
      %736 = vst.msk [vmem:[%s735 + $0x1] sm:$0xff] %vm679, %v521
      %737 = vst.msk [vmem:[%s735 + $0x9] sm:$0xff] %vm679, %v526
      %738 = vst.msk [vmem:[%s735 + $0x19] sm:$0xff] %vm679, %v531
      %739 = vst.msk [vmem:[%s735 + $0x21] sm:$0xff] %vm679, %v536
      %740 = vst.msk [vmem:[%s735 + $0x31] sm:$0xff] %vm679, %v541
      %741 = vst.msk [vmem:[%s735 + $0x39] sm:$0xff] %vm679, %v546
      %742 = vst.msk [vmem:[%s735 + $0x49] sm:$0xff] %vm679, %v551
      %743 = vst.msk [vmem:[%s735 + $0x51] sm:$0xff] %vm679, %v556
      %744 = vst.msk [vmem:[%s735 + $0x61] sm:$0xff] %vm679, %v561
      %745 = vst.msk [vmem:[%s735 + $0x69] sm:$0xff] %vm679, %v566
      %746 = vst.msk [vmem:[%s735 + $0x79] sm:$0xff] %vm679, %v571
      %747 = vst.msk [vmem:[%s735 + $0x81] sm:$0xff] %vm679, %v576
      %748 = vst.msk [vmem:[%s735 + $0x91] sm:$0xff] %vm679, %v581
      %749 = vst.msk [vmem:[%s735 + $0x99] sm:$0xff] %vm679, %v586
      %750 = vst.msk [vmem:[%s735 + $0xa9] sm:$0xff] %vm679, %v591
      %751 = vst.msk [vmem:[%s735 + $0xb1] sm:$0xff] %vm679, %v596
      %752 = vst.msk [vmem:[%s735 + $0xc1] sm:$0xff] %vm679, %v601
      %753 = vst.msk [vmem:[%s735 + $0xc9] sm:$0xff] %vm679, %v606
      %754 = vst.msk [vmem:[%s735 + $0xd9] sm:$0xff] %vm679, %v611
      %755 = vst.msk [vmem:[%s735 + $0xe1] sm:$0xff] %vm679, %v616
      %756 = vst.msk [vmem:[%s735 + $0xf1] sm:$0xff] %vm679, %v621
      %757 = vst.msk [vmem:[%s735 + $0xf9] sm:$0xff] %vm679, %v626
      %758 = vst.msk [vmem:[%s735 + $0x109] sm:$0xff] %vm679, %v631
      %759 = vst.msk [vmem:[%s735 + $0x111] sm:$0xff] %vm679, %v636
      %760 = vst.msk [vmem:[%s735 + $0x121] sm:$0xff] %vm679, %v641
      %761 = vst.msk [vmem:[%s735 + $0x129] sm:$0xff] %vm679, %v646
      %762 = vst.msk [vmem:[%s735 + $0x139] sm:$0xff] %vm679, %v651
      %763 = vst.msk [vmem:[%s735 + $0x141] sm:$0xff] %vm679, %v656
      %764 = vst.msk [vmem:[%s735 + $0x151] sm:$0xff] %vm679, %v661
      %765 = vst.msk [vmem:[%s735 + $0x159] sm:$0xff] %vm679, %v666
      %766 = vst.msk [vmem:[%s735 + $0x169] sm:$0xff] %vm679, %v671
      %767 = vst.msk [vmem:[%s735 + $0x171] sm:$0xff] %vm679, %v676
      %v768 = vld [vmem:[#allocation2] ss:$2 sm:$0xff]
      %s769 = scalar_lea.vmem [#allocation2], 48
      %v770 = vld [vmem:[%s769] ss:$2 sm:$0xff]
      %s771 = scalar_lea.vmem [#allocation2], 96
      %v772 = vld [vmem:[%s771] ss:$2 sm:$0xff]
      %s773 = scalar_lea.vmem [#allocation2], 144
      %v774 = vld [vmem:[%s773] ss:$2 sm:$0xff]
      %s775 = scalar_lea.vmem [#allocation2], 192
      %v776 = vld [vmem:[%s775] ss:$2 sm:$0xff]
      %s777 = scalar_lea.vmem [#allocation2], 240
      %v778 = vld [vmem:[%s777] ss:$2 sm:$0xff]
      %s779 = scalar_lea.vmem [#allocation2], 288
      %v780 = vld [vmem:[%s779] ss:$2 sm:$0xff]
      %s781 = scalar_lea.vmem [#allocation2], 336
      %v782 = vld [vmem:[%s781] ss:$2 sm:$0xff]
      %s783 = scalar_lea.vmem [#allocation2], 1
      %v784 = vld [vmem:[%s783] ss:$2 sm:$0xff]
      %s785 = scalar_lea.vmem [#allocation2], 49
      %v786 = vld [vmem:[%s785] ss:$2 sm:$0xff]
      %s787 = scalar_lea.vmem [#allocation2], 97
      %v788 = vld [vmem:[%s787] ss:$2 sm:$0xff]
      %s789 = scalar_lea.vmem [#allocation2], 145
      %v790 = vld [vmem:[%s789] ss:$2 sm:$0xff]
      %s791 = scalar_lea.vmem [#allocation2], 193
      %v792 = vld [vmem:[%s791] ss:$2 sm:$0xff]
      %s793 = scalar_lea.vmem [#allocation2], 241
      %v794 = vld [vmem:[%s793] ss:$2 sm:$0xff]
      %s795 = scalar_lea.vmem [#allocation2], 289
      %v796 = vld [vmem:[%s795] ss:$2 sm:$0xff]
      %s797 = scalar_lea.vmem [#allocation2], 337
      %v798 = vld [vmem:[%s797] ss:$2 sm:$0xff]
      %s799 = scalar_lea.vmem [#allocation2], 2
      %v800 = vld [vmem:[%s799] ss:$2 sm:$0xff]
      %s801 = scalar_lea.vmem [#allocation2], 50
      %v802 = vld [vmem:[%s801] ss:$2 sm:$0xff]
      %s803 = scalar_lea.vmem [#allocation2], 98
      %v804 = vld [vmem:[%s803] ss:$2 sm:$0xff]
      %s805 = scalar_lea.vmem [#allocation2], 146
      %v806 = vld [vmem:[%s805] ss:$2 sm:$0xff]
      %s807 = scalar_lea.vmem [#allocation2], 194
      %v808 = vld [vmem:[%s807] ss:$2 sm:$0xff]
      %s809 = scalar_lea.vmem [#allocation2], 242
      %v810 = vld [vmem:[%s809] ss:$2 sm:$0xff]
      %s811 = scalar_lea.vmem [#allocation2], 290
      %v812 = vld [vmem:[%s811] ss:$2 sm:$0xff]
      %s813 = scalar_lea.vmem [#allocation2], 338
      %v814 = vld [vmem:[%s813] ss:$2 sm:$0xff]
      %v815 = vld [vmem:[%s735] ss:$2 sm:$0xff]
      %s816 = scalar_lea.vmem %s735, 48 [#allocation2]
      %v817 = vld [vmem:[%s816] ss:$2 sm:$0xff]
      %s818 = scalar_lea.vmem %s735, 96 [#allocation2]
      %v819 = vld [vmem:[%s818] ss:$2 sm:$0xff]
      %s820 = scalar_lea.vmem %s735, 144 [#allocation2]
      %v821 = vld [vmem:[%s820] ss:$2 sm:$0xff]
      %s822 = scalar_lea.vmem %s735, 192 [#allocation2]
      %v823 = vld [vmem:[%s822] ss:$2 sm:$0xff]
      %s824 = scalar_lea.vmem %s735, 240 [#allocation2]
      %v825 = vld [vmem:[%s824] ss:$2 sm:$0xff]
      %s826 = scalar_lea.vmem %s735, 288 [#allocation2]
      %v827 = vld [vmem:[%s826] ss:$2 sm:$0xff]
      %s828 = scalar_lea.vmem %s735, 336 [#allocation2]
      %v829 = vld [vmem:[%s828] ss:$2 sm:$0xff]
      %s830 = scalar_lea.vmem %s735, 1 [#allocation2]
      %v831 = vld [vmem:[%s830] ss:$2 sm:$0xff]
      %s832 = scalar_lea.vmem %s735, 49 [#allocation2]
      %v833 = vld [vmem:[%s832] ss:$2 sm:$0xff]
      %s834 = scalar_lea.vmem %s735, 97 [#allocation2]
      %v835 = vld [vmem:[%s834] ss:$2 sm:$0xff]
      %s836 = scalar_lea.vmem %s735, 145 [#allocation2]
      %v837 = vld [vmem:[%s836] ss:$2 sm:$0xff]
      %s838 = scalar_lea.vmem %s735, 193 [#allocation2]
      %v839 = vld [vmem:[%s838] ss:$2 sm:$0xff]
      %s840 = scalar_lea.vmem %s735, 241 [#allocation2]
      %v841 = vld [vmem:[%s840] ss:$2 sm:$0xff]
      %s842 = scalar_lea.vmem %s735, 289 [#allocation2]
      %v843 = vld [vmem:[%s842] ss:$2 sm:$0xff]
      %s844 = scalar_lea.vmem %s735, 337 [#allocation2]
      %v845 = vld [vmem:[%s844] ss:$2 sm:$0xff]
      %s846 = scalar_lea.vmem %s735, 2 [#allocation2]
      %v847 = vld [vmem:[%s846] ss:$2 sm:$0xff]
      %s848 = scalar_lea.vmem %s735, 50 [#allocation2]
      %v849 = vld [vmem:[%s848] ss:$2 sm:$0xff]
      %s850 = scalar_lea.vmem %s735, 98 [#allocation2]
      %v851 = vld [vmem:[%s850] ss:$2 sm:$0xff]
      %s852 = scalar_lea.vmem %s735, 146 [#allocation2]
      %v853 = vld [vmem:[%s852] ss:$2 sm:$0xff]
      %s854 = scalar_lea.vmem %s735, 194 [#allocation2]
      %v855 = vld [vmem:[%s854] ss:$2 sm:$0xff]
      %s856 = scalar_lea.vmem %s735, 242 [#allocation2]
      %v857 = vld [vmem:[%s856] ss:$2 sm:$0xff]
      %s858 = scalar_lea.vmem %s735, 290 [#allocation2]
      %v859 = vld [vmem:[%s858] ss:$2 sm:$0xff]
      %s860 = scalar_lea.vmem %s735, 338 [#allocation2]
      %v861 = vld [vmem:[%s860] ss:$2 sm:$0xff]
      %s862 = scalar_lea.vmem [#allocation2], 48
      %v863 = vld [vmem:[%s862] ss:$2 sm:$0xff]
      %s864 = scalar_lea.vmem %s862, 48 [#allocation2]
      %v865 = vld [vmem:[%s864] ss:$2 sm:$0xff]
      %s866 = scalar_lea.vmem %s862, 96 [#allocation2]
      %v867 = vld [vmem:[%s866] ss:$2 sm:$0xff]
      %s868 = scalar_lea.vmem %s862, 144 [#allocation2]
      %v869 = vld [vmem:[%s868] ss:$2 sm:$0xff]
      %s870 = scalar_lea.vmem %s862, 192 [#allocation2]
      %v871 = vld [vmem:[%s870] ss:$2 sm:$0xff]
      %s872 = scalar_lea.vmem %s862, 240 [#allocation2]
      %v873 = vld [vmem:[%s872] ss:$2 sm:$0xff]
      %s874 = scalar_lea.vmem %s862, 288 [#allocation2]
      %v875 = vld [vmem:[%s874] ss:$2 sm:$0xff]
      %s876 = scalar_lea.vmem %s862, 336 [#allocation2]
      %v877 = vld [vmem:[%s876] ss:$2 sm:$0xff]
      %s878 = scalar_lea.vmem %s862, 1 [#allocation2]
      %v879 = vld [vmem:[%s878] ss:$2 sm:$0xff]
      %s880 = scalar_lea.vmem %s862, 49 [#allocation2]
      %v881 = vld [vmem:[%s880] ss:$2 sm:$0xff]
      %s882 = scalar_lea.vmem %s862, 97 [#allocation2]
      %v883 = vld [vmem:[%s882] ss:$2 sm:$0xff]
      %s884 = scalar_lea.vmem %s862, 145 [#allocation2]
      %v885 = vld [vmem:[%s884] ss:$2 sm:$0xff]
      %s886 = scalar_lea.vmem %s862, 193 [#allocation2]
      %v887 = vld [vmem:[%s886] ss:$2 sm:$0xff]
      %s888 = scalar_lea.vmem %s862, 241 [#allocation2]
      %v889 = vld [vmem:[%s888] ss:$2 sm:$0xff]
      %s890 = scalar_lea.vmem %s862, 289 [#allocation2]
      %v891 = vld [vmem:[%s890] ss:$2 sm:$0xff]
      %s892 = scalar_lea.vmem %s862, 337 [#allocation2]
      %v893 = vld [vmem:[%s892] ss:$2 sm:$0xff]
      %s894 = scalar_lea.vmem %s862, 2 [#allocation2]
      %v895 = vld [vmem:[%s894] ss:$2 sm:$0xff]
      %s896 = scalar_lea.vmem %s862, 50 [#allocation2]
      %v897 = vld [vmem:[%s896] ss:$2 sm:$0xff]
      %s898 = scalar_lea.vmem %s862, 98 [#allocation2]
      %v899 = vld [vmem:[%s898] ss:$2 sm:$0xff]
      %s900 = scalar_lea.vmem %s862, 146 [#allocation2]
      %v901 = vld [vmem:[%s900] ss:$2 sm:$0xff]
      %s902 = scalar_lea.vmem %s862, 194 [#allocation2]
      %v903 = vld [vmem:[%s902] ss:$2 sm:$0xff]
      %s904 = scalar_lea.vmem %s862, 242 [#allocation2]
      %v905 = vld [vmem:[%s904] ss:$2 sm:$0xff]
      %s906 = scalar_lea.vmem %s862, 290 [#allocation2]
      %v907 = vld [vmem:[%s906] ss:$2 sm:$0xff]
      %s908 = scalar_lea.vmem %s862, 338 [#allocation2]
      %v909 = vld [vmem:[%s908] ss:$2 sm:$0xff]
      %918 = vrot.lane.b32.xlu0 %v784, 8
      %v919 = vpop.permute.xlu0 %918
      %920 = vrot.lane.b32.xlu0 %v786, 8
      %v921 = vpop.permute.xlu0 %920
      %922 = vrot.lane.b32.xlu0 %v788, 8
      %v923 = vpop.permute.xlu0 %922
      %924 = vrot.lane.b32.xlu0 %v790, 8
      %v925 = vpop.permute.xlu0 %924
      %926 = vrot.lane.b32.xlu0 %v792, 8
      %v927 = vpop.permute.xlu0 %926
      %928 = vrot.lane.b32.xlu0 %v794, 8
      %v929 = vpop.permute.xlu0 %928
      %930 = vrot.lane.b32.xlu0 %v796, 8
      %v931 = vpop.permute.xlu0 %930
      %932 = vrot.lane.b32.xlu0 %v798, 8
      %v933 = vpop.permute.xlu0 %932
      %950 = vrot.lane.b32.xlu0 %v800, 16
      %v951 = vpop.permute.xlu0 %950
      %952 = vrot.lane.b32.xlu0 %v802, 16
      %v953 = vpop.permute.xlu0 %952
      %954 = vrot.lane.b32.xlu0 %v804, 16
      %v955 = vpop.permute.xlu0 %954
      %956 = vrot.lane.b32.xlu0 %v806, 16
      %v957 = vpop.permute.xlu0 %956
      %958 = vrot.lane.b32.xlu0 %v808, 16
      %v959 = vpop.permute.xlu0 %958
      %960 = vrot.lane.b32.xlu0 %v810, 16
      %v961 = vpop.permute.xlu0 %960
      %962 = vrot.lane.b32.xlu0 %v812, 16
      %v963 = vpop.permute.xlu0 %962
      %964 = vrot.lane.b32.xlu0 %v814, 16
      %v965 = vpop.permute.xlu0 %964
      %982 = vrot.lane.b32.xlu0 %v815, 24
      %v983 = vpop.permute.xlu0 %982
      %984 = vrot.lane.b32.xlu0 %v817, 24
      %v985 = vpop.permute.xlu0 %984
      %986 = vrot.lane.b32.xlu0 %v819, 24
      %v987 = vpop.permute.xlu0 %986
      %988 = vrot.lane.b32.xlu0 %v821, 24
      %v989 = vpop.permute.xlu0 %988
      %990 = vrot.lane.b32.xlu0 %v823, 24
      %v991 = vpop.permute.xlu0 %990
      %992 = vrot.lane.b32.xlu0 %v825, 24
      %v993 = vpop.permute.xlu0 %992
      %994 = vrot.lane.b32.xlu0 %v827, 24
      %v995 = vpop.permute.xlu0 %994
      %996 = vrot.lane.b32.xlu0 %v829, 24
      %v997 = vpop.permute.xlu0 %996
      %1014 = vrot.lane.b32.xlu0 %v831, 32
      %v1015 = vpop.permute.xlu0 %1014
      %1016 = vrot.lane.b32.xlu0 %v833, 32
      %v1017 = vpop.permute.xlu0 %1016
      %1018 = vrot.lane.b32.xlu0 %v835, 32
      %v1019 = vpop.permute.xlu0 %1018
      %1020 = vrot.lane.b32.xlu0 %v837, 32
      %v1021 = vpop.permute.xlu0 %1020
      %1022 = vrot.lane.b32.xlu0 %v839, 32
      %v1023 = vpop.permute.xlu0 %1022
      %1024 = vrot.lane.b32.xlu0 %v841, 32
      %v1025 = vpop.permute.xlu0 %1024
      %1026 = vrot.lane.b32.xlu0 %v843, 32
      %v1027 = vpop.permute.xlu0 %1026
      %1028 = vrot.lane.b32.xlu0 %v845, 32
      %v1029 = vpop.permute.xlu0 %1028
      %1046 = vrot.lane.b32.xlu0 %v847, 40
      %v1047 = vpop.permute.xlu0 %1046
      %1048 = vrot.lane.b32.xlu0 %v849, 40
      %v1049 = vpop.permute.xlu0 %1048
      %1050 = vrot.lane.b32.xlu0 %v851, 40
      %v1051 = vpop.permute.xlu0 %1050
      %1052 = vrot.lane.b32.xlu0 %v853, 40
      %v1053 = vpop.permute.xlu0 %1052
      %1054 = vrot.lane.b32.xlu0 %v855, 40
      %v1055 = vpop.permute.xlu0 %1054
      %1056 = vrot.lane.b32.xlu0 %v857, 40
      %v1057 = vpop.permute.xlu0 %1056
      %1058 = vrot.lane.b32.xlu0 %v859, 40
      %v1059 = vpop.permute.xlu0 %1058
      %1060 = vrot.lane.b32.xlu0 %v861, 40
      %v1061 = vpop.permute.xlu0 %1060
      %1078 = vrot.lane.b32.xlu0 %v863, 48
      %v1079 = vpop.permute.xlu0 %1078
      %1080 = vrot.lane.b32.xlu0 %v865, 48
      %v1081 = vpop.permute.xlu0 %1080
      %1082 = vrot.lane.b32.xlu0 %v867, 48
      %v1083 = vpop.permute.xlu0 %1082
      %1084 = vrot.lane.b32.xlu0 %v869, 48
      %v1085 = vpop.permute.xlu0 %1084
      %1086 = vrot.lane.b32.xlu0 %v871, 48
      %v1087 = vpop.permute.xlu0 %1086
      %1088 = vrot.lane.b32.xlu0 %v873, 48
      %v1089 = vpop.permute.xlu0 %1088
      %1090 = vrot.lane.b32.xlu0 %v875, 48
      %v1091 = vpop.permute.xlu0 %1090
      %1092 = vrot.lane.b32.xlu0 %v877, 48
      %v1093 = vpop.permute.xlu0 %1092
      %1110 = vrot.lane.b32.xlu0 %v879, 56
      %v1111 = vpop.permute.xlu0 %1110
      %1112 = vrot.lane.b32.xlu0 %v881, 56
      %v1113 = vpop.permute.xlu0 %1112
      %1114 = vrot.lane.b32.xlu0 %v883, 56
      %v1115 = vpop.permute.xlu0 %1114
      %1116 = vrot.lane.b32.xlu0 %v885, 56
      %v1117 = vpop.permute.xlu0 %1116
      %1118 = vrot.lane.b32.xlu0 %v887, 56
      %v1119 = vpop.permute.xlu0 %1118
      %1120 = vrot.lane.b32.xlu0 %v889, 56
      %v1121 = vpop.permute.xlu0 %1120
      %1122 = vrot.lane.b32.xlu0 %v891, 56
      %v1123 = vpop.permute.xlu0 %1122
      %1124 = vrot.lane.b32.xlu0 %v893, 56
      %v1125 = vpop.permute.xlu0 %1124
      %1142 = vrot.lane.b32.xlu0 %v895, 64
      %v1143 = vpop.permute.xlu0 %1142
      %1144 = vrot.lane.b32.xlu0 %v897, 64
      %v1145 = vpop.permute.xlu0 %1144
      %1146 = vrot.lane.b32.xlu0 %v899, 64
      %v1147 = vpop.permute.xlu0 %1146
      %1148 = vrot.lane.b32.xlu0 %v901, 64
      %v1149 = vpop.permute.xlu0 %1148
      %1150 = vrot.lane.b32.xlu0 %v903, 64
      %v1151 = vpop.permute.xlu0 %1150
      %1152 = vrot.lane.b32.xlu0 %v905, 64
      %v1153 = vpop.permute.xlu0 %1152
      %1154 = vrot.lane.b32.xlu0 %v907, 64
      %v1155 = vpop.permute.xlu0 %1154
      %1156 = vrot.lane.b32.xlu0 %v909, 64
      %v1157 = vpop.permute.xlu0 %1156
      %v1166 = vsel %vm679, %v768, %v919
      %v1167 = vsel %vm679, %v770, %v921
      %v1168 = vsel %vm679, %v772, %v923
      %v1169 = vsel %vm679, %v774, %v925
      %v1170 = vsel %vm679, %v776, %v927
      %v1171 = vsel %vm679, %v778, %v929
      %v1172 = vsel %vm679, %v780, %v931
      %v1173 = vsel %vm679, %v782, %v933
      %vm1174 = vcmask 130048
      %v1175 = vsel %vm1174, %v1166, %v951
      %v1176 = vsel %vm1174, %v1167, %v953
      %v1177 = vsel %vm1174, %v1168, %v955
      %v1178 = vsel %vm1174, %v1169, %v957
      %v1179 = vsel %vm1174, %v1170, %v959
      %v1180 = vsel %vm1174, %v1171, %v961
      %v1181 = vsel %vm1174, %v1172, %v963
      %v1182 = vsel %vm1174, %v1173, %v965
      %vm1183 = vcmask 195584
      %v1184 = vsel %vm1183, %v1175, %v983
      %v1185 = vsel %vm1183, %v1176, %v985
      %v1186 = vsel %vm1183, %v1177, %v987
      %v1187 = vsel %vm1183, %v1178, %v989
      %v1188 = vsel %vm1183, %v1179, %v991
      %v1189 = vsel %vm1183, %v1180, %v993
      %v1190 = vsel %vm1183, %v1181, %v995
      %v1191 = vsel %vm1183, %v1182, %v997
      %vm1192 = vcmask 261120
      %v1193 = vsel %vm1192, %v1184, %v1015
      %v1194 = vsel %vm1192, %v1185, %v1017
      %v1195 = vsel %vm1192, %v1186, %v1019
      %v1196 = vsel %vm1192, %v1187, %v1021
      %v1197 = vsel %vm1192, %v1188, %v1023
      %v1198 = vsel %vm1192, %v1189, %v1025
      %v1199 = vsel %vm1192, %v1190, %v1027
      %v1200 = vsel %vm1192, %v1191, %v1029
      %vm1201 = vcmask 326656
      %v1202 = vsel %vm1201, %v1193, %v1047
      %v1203 = vsel %vm1201, %v1194, %v1049
      %v1204 = vsel %vm1201, %v1195, %v1051
      %v1205 = vsel %vm1201, %v1196, %v1053
      %v1206 = vsel %vm1201, %v1197, %v1055
      %v1207 = vsel %vm1201, %v1198, %v1057
      %v1208 = vsel %vm1201, %v1199, %v1059
      %v1209 = vsel %vm1201, %v1200, %v1061
      %vm1210 = vcmask 392192
      %v1211 = vsel %vm1210, %v1202, %v1079
      %v1212 = vsel %vm1210, %v1203, %v1081
      %v1213 = vsel %vm1210, %v1204, %v1083
      %v1214 = vsel %vm1210, %v1205, %v1085
      %v1215 = vsel %vm1210, %v1206, %v1087
      %v1216 = vsel %vm1210, %v1207, %v1089
      %v1217 = vsel %vm1210, %v1208, %v1091
      %v1218 = vsel %vm1210, %v1209, %v1093
      %vm1219 = vcmask 457728
      %v1220 = vsel %vm1219, %v1211, %v1111
      %v1221 = vsel %vm1219, %v1212, %v1113
      %v1222 = vsel %vm1219, %v1213, %v1115
      %v1223 = vsel %vm1219, %v1214, %v1117
      %v1224 = vsel %vm1219, %v1215, %v1119
      %v1225 = vsel %vm1219, %v1216, %v1121
      %v1226 = vsel %vm1219, %v1217, %v1123
      %v1227 = vsel %vm1219, %v1218, %v1125
      %vm1228 = vcmask 523264
      %v1229 = vsel %vm1228, %v1220, %v1143
      %v1230 = vsel %vm1228, %v1221, %v1145
      %v1231 = vsel %vm1228, %v1222, %v1147
      %v1232 = vsel %vm1228, %v1223, %v1149
      %v1233 = vsel %vm1228, %v1224, %v1151
      %v1234 = vsel %vm1228, %v1225, %v1153
      %v1235 = vsel %vm1228, %v1226, %v1155
      %v1236 = vsel %vm1228, %v1227, %v1157
      %v1237 = vld [vmem:[%s3] sm:$0xff]
      %v1238 = vld [vmem:[%s3 + $0x8] sm:$0xff]
      %v1239 = vld [vmem:[%s3 + $0x10] sm:$0xff]
      %v1240 = vld [vmem:[%s3 + $0x18] sm:$0xff]
      %v1241 = vld [vmem:[%s3 + $0x20] sm:$0xff]
      %v1242 = vld [vmem:[%s3 + $0x28] sm:$0xff]
      %v1243 = vld [vmem:[%s3 + $0x30] sm:$0xff]
      %v1244 = vld [vmem:[%s3 + $0x38] sm:$0xff]
      %v1245 = vld [vmem:[%s3 + $0x40] sm:$0xff]
      %v1246 = vld [vmem:[%s4] sm:$0x1]
      %v1248 = vlaneseq
      %v1249 = vshrl.u32 %v1248, 7
      %v1250 = vsub.s32 0, %v1249
      %v1251 = vrot.slane %v1246, %v1250
      %vm1253 = vcmask 588800
      %v1255 = vsel %vm1253, %v1229, 0
      %v1258 = vsel %vm1253, %v1230, 0
      %v1261 = vsel %vm1253, %v1231, 0
      %v1264 = vsel %vm1253, %v1232, 0
      %v1267 = vsel %vm1253, %v1233, 0
      %v1270 = vsel %vm1253, %v1234, 0
      %v1273 = vsel %vm1253, %v1235, 0
      %v1276 = vsel %vm1253, %v1236, 0
      %1278 = vmatprep.subr.mxu0 0.0
      %1279 = vmatpush1.msra.mxu0 0.0
      %1280 = vmatprep.subr.mxu0 0.0
      %1281 = vmatpush1.msra.mxu0 0.0
      %1282 = vmatprep.subr.mxu0 0.0
      %1283 = vmatpush1.msra.mxu0 0.0
      %1284 = vmatprep.subr.mxu0 0.0
      %1285 = vmatpush1.msra.mxu0 0.0
      %1286 = vmatprep.subr.mxu0 0.0
      %1287 = vmatpush1.msra.mxu0 0.0
      %1288 = vmatprep.subr.mxu0 0.0
      %1289 = vmatpush1.msra.mxu0 0.0
      %1290 = vmatprep.subr.mxu0 0.0
      %1291 = vmatpush1.msra.mxu0 0.0
      %1292 = vmatprep.subr.mxu0 0.0
      %1293 = vmatpush1.msra.mxu0 %v1245
      %1294 = vmatprep.subr.mxu0 0.0
      %1295 = vmatpush1.msra.mxu0 %v1244
      %1296 = vmatprep.subr.mxu0 0.0
      %1297 = vmatpush1.msra.mxu0 %v1243
      %1298 = vmatprep.subr.mxu0 0.0
      %1299 = vmatpush1.msra.mxu0 %v1242
      %1300 = vmatprep.subr.mxu0 0.0
      %1301 = vmatpush1.msra.mxu0 %v1241
      %1302 = vmatprep.subr.mxu0 0.0
      %1303 = vmatpush1.msra.mxu0 %v1240
      %1304 = vmatprep.subr.mxu0 0.0
      %1305 = vmatpush1.msra.mxu0 %v1239
      %1306 = vmatprep.subr.mxu0 0.0
      %1307 = vmatpush1.msra.mxu0 %v1238
      %1308 = vmatprep.subr.mxu0 0.0
      %1309 = vmatpush1.msra.mxu0 %v1237
      %1310 = vmatprep.subr.mxu0 0.0
      %1311 = vmatpush2.msra.mxu0 0.0
      %1312 = vmatprep.subr.mxu0 0.0
      %1313 = vmatpush2.msra.mxu0 0.0
      %1314 = vmatprep.subr.mxu0 0.0
      %1315 = vmatpush2.msra.mxu0 0.0
      %1316 = vmatprep.subr.mxu0 0.0
      %1317 = vmatpush2.msra.mxu0 0.0
      %1318 = vmatprep.subr.mxu0 0.0
      %1319 = vmatpush2.msra.mxu0 0.0
      %1320 = vmatprep.subr.mxu0 0.0
      %1321 = vmatpush2.msra.mxu0 0.0
      %1322 = vmatprep.subr.mxu0 0.0
      %1323 = vmatpush2.msra.mxu0 0.0
      %1324 = vmatprep.subr.mxu0 0.0
      %1325 = vmatpush2.msra.mxu0 0.0
      %1326 = vmatprep.subr.mxu0 0.0
      %1327 = vmatpush2.msra.mxu0 0.0
      %1328 = vmatprep.subr.mxu0 0.0
      %1329 = vmatpush2.msra.mxu0 0.0
      %1330 = vmatprep.subr.mxu0 0.0
      %1331 = vmatpush2.msra.mxu0 0.0
      %1332 = vmatprep.subr.mxu0 0.0
      %1333 = vmatpush2.msra.mxu0 0.0
      %1334 = vmatprep.subr.mxu0 0.0
      %1335 = vmatpush2.msra.mxu0 0.0
      %1336 = vmatprep.subr.mxu0 0.0
      %1337 = vmatpush2.msra.mxu0 0.0
      %1338 = vmatprep.subr.mxu0 0.0
      %1339 = vmatpush2.msra.mxu0 0.0
      %1340 = vmatprep.subr.mxu0 0.0
      %1341 = vmatpush2.msra.mxu0 0.0
      %1342 = vmatprep.mubr.f32.mxu0 0.0
      %1343 = vmatmul.mubr.f32.gmra.mxu0 %v1255
      %v1344 = vpop.f32.mrf.mxu0
      %v1345 = vadd.f32 %v1251, %v1344
      %v1346 = vpop.f32.mrf.mxu0
      %1347 = vmatprep.mubr.f32.mxu0 0.0
      %1348 = vmatmul.mubr.f32.gmra.mxu0 %v1258
      %v1349 = vpop.f32.mrf.mxu0
      %v1350 = vadd.f32 %v1251, %v1349
      %v1351 = vpop.f32.mrf.mxu0
      %1352 = vmatprep.mubr.f32.mxu0 0.0
      %1353 = vmatmul.mubr.f32.gmra.mxu0 %v1261
      %v1354 = vpop.f32.mrf.mxu0
      %v1355 = vadd.f32 %v1251, %v1354
      %v1356 = vpop.f32.mrf.mxu0
      %1357 = vmatprep.mubr.f32.mxu0 0.0
      %1358 = vmatmul.mubr.f32.gmra.mxu0 %v1264
      %v1359 = vpop.f32.mrf.mxu0
      %v1360 = vadd.f32 %v1251, %v1359
      %v1361 = vpop.f32.mrf.mxu0
      %1362 = vmatprep.mubr.f32.mxu0 0.0
      %1363 = vmatmul.mubr.f32.gmra.mxu0 %v1267
      %v1364 = vpop.f32.mrf.mxu0
      %v1365 = vadd.f32 %v1251, %v1364
      %v1366 = vpop.f32.mrf.mxu0
      %1367 = vmatprep.mubr.f32.mxu0 0.0
      %1368 = vmatmul.mubr.f32.gmra.mxu0 %v1270
      %v1369 = vpop.f32.mrf.mxu0
      %v1370 = vadd.f32 %v1251, %v1369
      %v1371 = vpop.f32.mrf.mxu0
      %1372 = vmatprep.mubr.f32.mxu0 0.0
      %1373 = vmatmul.mubr.f32.gmra.mxu0 %v1273
      %v1374 = vpop.f32.mrf.mxu0
      %v1375 = vadd.f32 %v1251, %v1374
      %v1376 = vpop.f32.mrf.mxu0
      %1377 = vmatprep.mubr.f32.mxu0 0.0
      %1378 = vmatmul.mubr.f32.gmra.mxu0 %v1276
      %v1379 = vpop.f32.mrf.mxu0
      %v1380 = vadd.f32 %v1251, %v1379
      %v1381 = vpop.f32.mrf.mxu0
      %1382 = vdwg.mxu0
      %v1383 = vld [vmem:[%s5] sm:$0xff]
      %v1384 = vld [vmem:[%s6] sm:$0xff]
      %1386 = vset.pattern.permute.xlu0 0
      %1387 = vperm.xlu0 %1386, %v1384
      %v1388 = vpop.permute.xlu0 %1387
      %v1391 = vsel %vm679, %v1383, 0
      %v1394 = vsel %vm679, %v1345, 0
      %v1397 = vsel %vm679, %v1350, 0
      %v1400 = vsel %vm679, %v1355, 0
      %v1403 = vsel %vm679, %v1360, 0
      %v1406 = vsel %vm679, %v1365, 0
      %v1409 = vsel %vm679, %v1370, 0
      %v1412 = vsel %vm679, %v1375, 0
      %v1415 = vsel %vm679, %v1380, 0
      %1417 = vmatprep.subr.mxu0 0.0
      %1418 = vmatpush1.xpose.msra.mxu0 0.0
      %1419 = vmatprep.subr.mxu0 0.0
      %1420 = vmatpush1.xpose.msra.mxu0 0.0
      %1421 = vmatprep.subr.mxu0 0.0
      %1422 = vmatpush1.xpose.msra.mxu0 0.0
      %1423 = vmatprep.subr.mxu0 0.0
      %1424 = vmatpush1.xpose.msra.mxu0 0.0
      %1425 = vmatprep.subr.mxu0 0.0
      %1426 = vmatpush1.xpose.msra.mxu0 0.0
      %1427 = vmatprep.subr.mxu0 0.0
      %1428 = vmatpush1.xpose.msra.mxu0 0.0
      %1429 = vmatprep.subr.mxu0 0.0
      %1430 = vmatpush1.xpose.msra.mxu0 0.0
      %1431 = vmatprep.subr.mxu0 0.0
      %1432 = vmatpush1.xpose.msra.mxu0 0.0
      %1433 = vmatprep.subr.mxu0 0.0
      %1434 = vmatpush1.xpose.msra.mxu0 %v1415
      %1435 = vmatprep.subr.mxu0 0.0
      %1436 = vmatpush1.xpose.msra.mxu0 %v1412
      %1437 = vmatprep.subr.mxu0 0.0
      %1438 = vmatpush1.xpose.msra.mxu0 %v1409
      %1439 = vmatprep.subr.mxu0 0.0
      %1440 = vmatpush1.xpose.msra.mxu0 %v1406
      %1441 = vmatprep.subr.mxu0 0.0
      %1442 = vmatpush1.xpose.msra.mxu0 %v1403
      %1443 = vmatprep.subr.mxu0 0.0
      %1444 = vmatpush1.xpose.msra.mxu0 %v1400
      %1445 = vmatprep.subr.mxu0 0.0
      %1446 = vmatpush1.xpose.msra.mxu0 %v1397
      %1447 = vmatprep.subr.mxu0 0.0
      %1448 = vmatpush1.xpose.msra.mxu0 %v1394
      %1449 = vmatprep.subr.mxu0 0.0
      %1450 = vmatpush2.xpose.msra.mxu0 0.0
      %1451 = vmatprep.subr.mxu0 0.0
      %1452 = vmatpush2.xpose.msra.mxu0 0.0
      %1453 = vmatprep.subr.mxu0 0.0
      %1454 = vmatpush2.xpose.msra.mxu0 0.0
      %1455 = vmatprep.subr.mxu0 0.0
      %1456 = vmatpush2.xpose.msra.mxu0 0.0
      %1457 = vmatprep.subr.mxu0 0.0
      %1458 = vmatpush2.xpose.msra.mxu0 0.0
      %1459 = vmatprep.subr.mxu0 0.0
      %1460 = vmatpush2.xpose.msra.mxu0 0.0
      %1461 = vmatprep.subr.mxu0 0.0
      %1462 = vmatpush2.xpose.msra.mxu0 0.0
      %1463 = vmatprep.subr.mxu0 0.0
      %1464 = vmatpush2.xpose.msra.mxu0 0.0
      %1465 = vmatprep.subr.mxu0 0.0
      %1466 = vmatpush2.xpose.msra.mxu0 0.0
      %1467 = vmatprep.subr.mxu0 0.0
      %1468 = vmatpush2.xpose.msra.mxu0 0.0
      %1469 = vmatprep.subr.mxu0 0.0
      %1470 = vmatpush2.xpose.msra.mxu0 0.0
      %1471 = vmatprep.subr.mxu0 0.0
      %1472 = vmatpush2.xpose.msra.mxu0 0.0
      %1473 = vmatprep.subr.mxu0 0.0
      %1474 = vmatpush2.xpose.msra.mxu0 0.0
      %1475 = vmatprep.subr.mxu0 0.0
      %1476 = vmatpush2.xpose.msra.mxu0 0.0
      %1477 = vmatprep.subr.mxu0 0.0
      %1478 = vmatpush2.xpose.msra.mxu0 0.0
      %1479 = vmatprep.subr.mxu0 0.0
      %1480 = vmatpush2.xpose.msra.mxu0 0.0
      %1481 = vmatprep.mubr.f32.mxu0 0.0
      %1482 = vmatmul.mubr.f32.gmra.mxu0 %v1391
      %v1483 = vpop.f32.mrf.mxu0
      %v1484 = vadd.f32 %v1388, %v1483
      %v1485 = vpop.f32.mrf.mxu0
      %1486 = vdwg.mxu0
      %v1487 = vmax.f32 %v1484, 0.0
      %v1488 = vmin.f32 %v1487, 6.0
      %1489 = vst.msk [vmem:[%s276] sm:$0xff] %vm1228, %v1488
      %p1490 = scmp.lt.s32.totalorder %s18, 1
      %s1491 = scalar_select %p1490, %s18, 1
      %s1492 = smul.addr %s1491, 8
      %s1493 = scalar_lea.vmem %s7, %s1492
      // Predicated region
      $region49: #{_lambda_.3} parent=47 // pred_check
        %p1494 = pneg %p188
      $region50: #{_lambda_.3} parent=47 // pred_check_branch
        %1496 = sbr.rel (%p1494) target = $region52
      $region51: #{_lambda_.3} parent=47 // pred_region
        _
      $region52: #{_lambda_.3} parent=47 // pred_fallthru
        _
    $region48: #{_lambda_.3} parent=5 // pred_fallthru
      _
    %p1497 = scmp.le.s32.totalorder 2, %s13
    // Predicated region
    $region53: #{_lambda_.3} parent=5 // pred_check
      %p1498 = pneg %p1497
    $region54: #{_lambda_.3} parent=5 // pred_check_branch
      %1500 = sbr.rel (%p1498) target = $region56
    $region55: #{_lambda_.3} parent=5 // pred_region
      %s1501 = ssub.s32 %s13, 2
      // Predicated region
      $region57: #{_lambda_.3} parent=55 // pred_check
        %p1502 = pneg %p194
      $region58: #{_lambda_.3} parent=55 // pred_check_branch
        %1504 = sbr.rel (%p1502) target = $region60
      $region59: #{_lambda_.3} parent=55 // pred_region
        %p1505 = scmp.lt.s32.totalorder %s19, 1
        %s1506 = scalar_select %p1505, %s19, 1
        %s1507 = smul.addr %s1506, 8
        %s1508 = scalar_lea.vmem %s7, %s1507
      $region60: #{_lambda_.3} parent=55 // pred_fallthru
        _
    $region56: #{_lambda_.3} parent=5 // pred_fallthru
      _
  $region6: #{_lambda_.3} parent=0 // loop_footer
    %s17 = sadd.s32 1, %s13
  $region7: #{_lambda_.3} parent=0 // loop_footer_branch
    %12 = sbr.rel target = $region3
  $region8: #{_lambda_.3} parent=0 // loop_exit
    _

// kernel: _lambda_.2
$region0: #{_lambda_.2}
  #allocation0 [shape = 'u32[]', space=smem, size = 0x4, offset = 0x4, fixed_abs, tag = 'smem constant byte address 0x4 - core index']
  #allocation1 [shape = 'u32[144,128]{1,0:T(1,128)}', space=vmem, size = 0x12000, scoped, tag = 'internal scratch']
  #allocation2 [shape = 'f32[18,18,6]{2,1,0:T(8,128)}', space=vmem, size = 0x36000, scoped, tag = 'scratch operand']
  %s0 = inlined_call_operand.vmem [shape: f32[2,4,256], index: 0, kind: input, shape index: {}]
  %s1 = inlined_call_operand.vmem [shape: f32[4,6], index: 1, kind: input, shape index: {}]
  %s2 = inlined_call_operand.vmem [shape: f32[1,6], index: 2, kind: input, shape index: {}]
  %s3 = inlined_call_operand.vmem [shape: f32[54,6], index: 3, kind: input, shape index: {}]
  %s4 = inlined_call_operand.vmem [shape: f32[1,6], index: 4, kind: input, shape index: {}]
  %s5 = inlined_call_operand.vmem [shape: f32[4,6], index: 5, kind: input, shape index: {}]
  %s6 = inlined_call_operand.vmem [shape: f32[4,1], index: 6, kind: input, shape index: {}]
  %s7 = inlined_call_operand.vmem [shape: f32[2,4,256], index: 7, kind: output, shape index: {}]
  %s8 = sld [smem:[#allocation0]]
  $region61: #{_lambda_.2} parent=0
    _
  %s10 = ssub.s32 1, %s8
  %s11 = scalar_select 0, %s10, %s8
  loop: start=0, step=1, limit=4
  $region2: #{_lambda_.2} parent=0 // loop_pre_header
    _
  $region3: #{_lambda_.2} parent=0 // loop_header
    %s13 = sphi 0, %s17
    %p14 = scmp.ge.s32.totalorder %s13, 4
    %s23 = sphi 0, %s25
    %s26 = sphi 0, %s23
    %s27 = sphi 0, %s26
    %s43 = sphi 0, %s27
    %s47 = sphi 0, %s47
    %s49 = sphi 0, %s47
    %s50 = sphi 0, %s49
    %s64 = sphi 0, %s50
    %s68 = sphi 0, %s68
    %s70 = sphi 0, %s68
    %s71 = sphi 0, %s70
    %s85 = sphi 0, %s71
    %s89 = sphi 0, %s89
    %s91 = sphi 0, %s89
    %s92 = sphi 0, %s91
    %s106 = sphi 0, %s92
    %s110 = sphi 0, %s110
    %s112 = sphi 0, %s110
    %s113 = sphi 0, %s112
    %s127 = sphi 0, %s113
    %s131 = sphi 0, %s131
    %s133 = sphi 0, %s131
    %s134 = sphi 0, %s133
    %s148 = sphi 0, %s134
    %s152 = sphi 0, %s152
    %s154 = sphi 0, %s152
    %s155 = sphi 0, %s154
    %s169 = sphi 0, %s155
    %s175 = sphi 0, %s177
    %s178 = sphi 0, %s175
    %s179 = sphi 0, %s178
    %s195 = sphi 0, %s179
  $region4: #{_lambda_.2} parent=0 // loop_header_branch
    %16 = sbr.rel (%p14) target = $region8
  $region5: #{_lambda_.2} parent=0 // loop_body
    %s18 = ssub.s32 %s13, 1
    %s19 = ssub.s32 %s13, 2
    %s20 = sadd.s32 %s13, 1
    %s21 = ssub.s32 %s13, %s20
    %p22 = scmp.eq.s32.totalorder %s21, 0
    %s24 = sadd.s32 %s23, 1
    %s25 = scalar_select %p22, %s23, %s24
    %p28 = pneg %p22
    %p29 = scmp.eq.s32.totalorder %s13, 1
    %p30 = por %p28, %p29
    %p31 = scmp.ne.s32.totalorder %s23, %s26
    %p32 = scmp.eq.s32.totalorder %s13, 0
    %p33 = por %p31, %p32
    %p34 = scmp.ne.s32.totalorder %s23, %s26
    %p35 = scmp.eq.s32.totalorder %s18, 1
    %p36 = por %p34, %p35
    %p37 = scmp.ne.s32.totalorder %s26, %s27
    %p38 = scmp.eq.s32.totalorder %s18, 0
    %p39 = por %p37, %p38
    %p40 = scmp.ne.s32.totalorder %s26, %s27
    %p41 = scmp.eq.s32.totalorder %s19, 1
    %p42 = por %p40, %p41
    %p44 = scmp.ne.s32.totalorder %s27, %s43
    %p45 = scmp.eq.s32.totalorder %s19, 0
    %p46 = por %p44, %p45
    %s48 = sadd.s32 %s47, 1
    %p51 = scmp.eq.s32.totalorder %s13, 1
    %p52 = scmp.ne.s32.totalorder %s47, %s49
    %p53 = scmp.eq.s32.totalorder %s13, 0
    %p54 = por %p52, %p53
    %p55 = scmp.ne.s32.totalorder %s47, %s49
    %p56 = scmp.eq.s32.totalorder %s18, 1
    %p57 = por %p55, %p56
    %p58 = scmp.ne.s32.totalorder %s49, %s50
    %p59 = scmp.eq.s32.totalorder %s18, 0
    %p60 = por %p58, %p59
    %p61 = scmp.ne.s32.totalorder %s49, %s50
    %p62 = scmp.eq.s32.totalorder %s19, 1
    %p63 = por %p61, %p62
    %p65 = scmp.ne.s32.totalorder %s50, %s64
    %p66 = scmp.eq.s32.totalorder %s19, 0
    %p67 = por %p65, %p66
    %s69 = sadd.s32 %s68, 1
    %p72 = scmp.eq.s32.totalorder %s13, 1
    %p73 = scmp.ne.s32.totalorder %s68, %s70
    %p74 = scmp.eq.s32.totalorder %s13, 0
    %p75 = por %p73, %p74
    %p76 = scmp.ne.s32.totalorder %s68, %s70
    %p77 = scmp.eq.s32.totalorder %s18, 1
    %p78 = por %p76, %p77
    %p79 = scmp.ne.s32.totalorder %s70, %s71
    %p80 = scmp.eq.s32.totalorder %s18, 0
    %p81 = por %p79, %p80
    %p82 = scmp.ne.s32.totalorder %s70, %s71
    %p83 = scmp.eq.s32.totalorder %s19, 1
    %p84 = por %p82, %p83
    %p86 = scmp.ne.s32.totalorder %s71, %s85
    %p87 = scmp.eq.s32.totalorder %s19, 0
    %p88 = por %p86, %p87
    %s90 = sadd.s32 %s89, 1
    %p93 = scmp.eq.s32.totalorder %s13, 1
    %p94 = scmp.ne.s32.totalorder %s89, %s91
    %p95 = scmp.eq.s32.totalorder %s13, 0
    %p96 = por %p94, %p95
    %p97 = scmp.ne.s32.totalorder %s89, %s91
    %p98 = scmp.eq.s32.totalorder %s18, 1
    %p99 = por %p97, %p98
    %p100 = scmp.ne.s32.totalorder %s91, %s92
    %p101 = scmp.eq.s32.totalorder %s18, 0
    %p102 = por %p100, %p101
    %p103 = scmp.ne.s32.totalorder %s91, %s92
    %p104 = scmp.eq.s32.totalorder %s19, 1
    %p105 = por %p103, %p104
    %p107 = scmp.ne.s32.totalorder %s92, %s106
    %p108 = scmp.eq.s32.totalorder %s19, 0
    %p109 = por %p107, %p108
    %s111 = sadd.s32 %s110, 1
    %p114 = scmp.eq.s32.totalorder %s13, 1
    %p115 = scmp.ne.s32.totalorder %s110, %s112
    %p116 = scmp.eq.s32.totalorder %s13, 0
    %p117 = por %p115, %p116
    %p118 = scmp.ne.s32.totalorder %s110, %s112
    %p119 = scmp.eq.s32.totalorder %s18, 1
    %p120 = por %p118, %p119
    %p121 = scmp.ne.s32.totalorder %s112, %s113
    %p122 = scmp.eq.s32.totalorder %s18, 0
    %p123 = por %p121, %p122
    %p124 = scmp.ne.s32.totalorder %s112, %s113
    %p125 = scmp.eq.s32.totalorder %s19, 1
    %p126 = por %p124, %p125
    %p128 = scmp.ne.s32.totalorder %s113, %s127
    %p129 = scmp.eq.s32.totalorder %s19, 0
    %p130 = por %p128, %p129
    %s132 = sadd.s32 %s131, 1
    %p135 = scmp.eq.s32.totalorder %s13, 1
    %p136 = scmp.ne.s32.totalorder %s131, %s133
    %p137 = scmp.eq.s32.totalorder %s13, 0
    %p138 = por %p136, %p137
    %p139 = scmp.ne.s32.totalorder %s131, %s133
    %p140 = scmp.eq.s32.totalorder %s18, 1
    %p141 = por %p139, %p140
    %p142 = scmp.ne.s32.totalorder %s133, %s134
    %p143 = scmp.eq.s32.totalorder %s18, 0
    %p144 = por %p142, %p143
    %p145 = scmp.ne.s32.totalorder %s133, %s134
    %p146 = scmp.eq.s32.totalorder %s19, 1
    %p147 = por %p145, %p146
    %p149 = scmp.ne.s32.totalorder %s134, %s148
    %p150 = scmp.eq.s32.totalorder %s19, 0
    %p151 = por %p149, %p150
    %s153 = sadd.s32 %s152, 1
    %p156 = scmp.eq.s32.totalorder %s13, 1
    %p157 = scmp.ne.s32.totalorder %s152, %s154
    %p158 = scmp.eq.s32.totalorder %s13, 0
    %p159 = por %p157, %p158
    %p160 = scmp.ne.s32.totalorder %s152, %s154
    %p161 = scmp.eq.s32.totalorder %s18, 1
    %p162 = por %p160, %p161
    %p163 = scmp.ne.s32.totalorder %s154, %s155
    %p164 = scmp.eq.s32.totalorder %s18, 0
    %p165 = por %p163, %p164
    %p166 = scmp.ne.s32.totalorder %s154, %s155
    %p167 = scmp.eq.s32.totalorder %s19, 1
    %p168 = por %p166, %p167
    %p170 = scmp.ne.s32.totalorder %s155, %s169
    %p171 = scmp.eq.s32.totalorder %s19, 0
    %p172 = por %p170, %p171
    %s173 = ssub.s32 %s13, %s20
    %p174 = scmp.eq.s32.totalorder %s173, 0
    %s176 = sadd.s32 %s175, 1
    %s177 = scalar_select %p174, %s175, %s176
    %p180 = pneg %p174
    %p181 = scmp.eq.s32.totalorder %s13, 1
    %p182 = por %p180, %p181
    %p183 = scmp.ne.s32.totalorder %s175, %s178
    %p184 = scmp.eq.s32.totalorder %s13, 0
    %p185 = por %p183, %p184
    %p186 = scmp.ne.s32.totalorder %s175, %s178
    %p187 = scmp.eq.s32.totalorder %s18, 1
    %p188 = por %p186, %p187
    %p189 = scmp.ne.s32.totalorder %s178, %s179
    %p190 = scmp.eq.s32.totalorder %s18, 0
    %p191 = por %p189, %p190
    %p192 = scmp.ne.s32.totalorder %s178, %s179
    %p193 = scmp.eq.s32.totalorder %s19, 1
    %p194 = por %p192, %p193
    %p196 = scmp.ne.s32.totalorder %s179, %s195
    %p197 = scmp.eq.s32.totalorder %s19, 0
    %p198 = por %p196, %p197
    %p199 = scmp.le.s32.totalorder 1, %s13
    %p200 = scmp.lt.s32.totalorder %s13, 3
    %p201 = pnand %p199, %p200
    %p202 = pneg %p201
    // Predicated region
    $region9: #{_lambda_.2} parent=5 // pred_check
      _
    $region10: #{_lambda_.2} parent=5 // pred_check_branch
      %204 = sbr.rel (%p201) target = $region12
    $region11: #{_lambda_.2} parent=5 // pred_region
      %s205 = ssub.s32 %s13, 1
      // Predicated region
      $region13: #{_lambda_.2} parent=11 // pred_check
        %p206 = pneg %p60
      $region14: #{_lambda_.2} parent=11 // pred_check_branch
        %208 = sbr.rel (%p206) target = $region16
      $region15: #{_lambda_.2} parent=11 // pred_region
        _
      $region16: #{_lambda_.2} parent=11 // pred_fallthru
        _
      // Predicated region
      $region17: #{_lambda_.2} parent=11 // pred_check
        %p209 = pneg %p81
      $region18: #{_lambda_.2} parent=11 // pred_check_branch
        %211 = sbr.rel (%p209) target = $region20
      $region19: #{_lambda_.2} parent=11 // pred_region
        _
      $region20: #{_lambda_.2} parent=11 // pred_fallthru
        _
      // Predicated region
      $region21: #{_lambda_.2} parent=11 // pred_check
        %p212 = pneg %p102
      $region22: #{_lambda_.2} parent=11 // pred_check_branch
        %214 = sbr.rel (%p212) target = $region24
      $region23: #{_lambda_.2} parent=11 // pred_region
        _
      $region24: #{_lambda_.2} parent=11 // pred_fallthru
        _
      // Predicated region
      $region25: #{_lambda_.2} parent=11 // pred_check
        %p215 = pneg %p123
      $region26: #{_lambda_.2} parent=11 // pred_check_branch
        %217 = sbr.rel (%p215) target = $region28
      $region27: #{_lambda_.2} parent=11 // pred_region
        _
      $region28: #{_lambda_.2} parent=11 // pred_fallthru
        _
      // Predicated region
      $region29: #{_lambda_.2} parent=11 // pred_check
        %p218 = pneg %p144
      $region30: #{_lambda_.2} parent=11 // pred_check_branch
        %220 = sbr.rel (%p218) target = $region32
      $region31: #{_lambda_.2} parent=11 // pred_region
        _
      $region32: #{_lambda_.2} parent=11 // pred_fallthru
        _
      // Predicated region
      $region33: #{_lambda_.2} parent=11 // pred_check
        %p221 = pneg %p165
      $region34: #{_lambda_.2} parent=11 // pred_check_branch
        %223 = sbr.rel (%p221) target = $region36
      $region35: #{_lambda_.2} parent=11 // pred_region
        _
      $region36: #{_lambda_.2} parent=11 // pred_fallthru
        _
    $region12: #{_lambda_.2} parent=5 // pred_fallthru
      _
    %p224 = scmp.lt.s32.totalorder %s13, 2
    // Predicated region
    $region37: #{_lambda_.2} parent=5 // pred_check
      %p225 = pneg %p224
    $region38: #{_lambda_.2} parent=5 // pred_check_branch
      %227 = sbr.rel (%p225) target = $region40
    $region39: #{_lambda_.2} parent=5 // pred_region
      // Predicated region
      $region41: #{_lambda_.2} parent=39 // pred_check
        %p228 = pneg %p33
      $region42: #{_lambda_.2} parent=39 // pred_check_branch
        %230 = sbr.rel (%p228) target = $region44
      $region43: #{_lambda_.2} parent=39 // pred_region
        %p231 = scmp.lt.s32.totalorder %s13, 1
        %s232 = scalar_select %p231, %s13, 1
        %s233 = smul.addr %s232, 2
        %s234 = smul.addr %s233, 4
        %s235 = scalar_lea.vmem %s0, %s234
      $region44: #{_lambda_.2} parent=39 // pred_fallthru
        _
    $region40: #{_lambda_.2} parent=5 // pred_fallthru
      _
    %p236 = scmp.le.s32.totalorder 1, %s13
    %p237 = scmp.lt.s32.totalorder %s13, 3
    %p238 = pnand %p236, %p237
    %p239 = pneg %p238
    // Predicated region
    $region45: #{_lambda_.2} parent=5 // pred_check
      _
    $region46: #{_lambda_.2} parent=5 // pred_check_branch
      %241 = sbr.rel (%p238) target = $region48
    $region47: #{_lambda_.2} parent=5 // pred_region
      %s242 = ssub.s32 %s13, 1
      %p243 = scmp.lt.s32.totalorder %s18, 1
      %s244 = scalar_select %p243, %s18, 1
      %s245 = smul.addr %s244, 2
      %s246 = smul.addr %s245, 4
      %s247 = scalar_lea.vmem %s0, %s246
      %p248 = pneg %p39
      %p249 = pneg %p36
      %p250 = pneg %p60
      %p251 = pneg %p57
      %p252 = pneg %p81
      %p253 = pneg %p78
      %p254 = pneg %p102
      %p255 = pneg %p99
      %p256 = pneg %p123
      %p257 = pneg %p120
      %p258 = pneg %p144
      %p259 = pneg %p141
      %p260 = pneg %p165
      %p261 = pneg %p162
      %p262 = pneg %p191
      %p263 = pneg %p188
      %p264 = scmp.lt.s32.totalorder %s18, 1
      %s265 = scalar_select %p264, %s18, 1
      %s266 = smul.addr %s265, 2
      %s267 = smul.addr %s266, 4
      %s268 = scalar_lea.vmem %s7, %s267
      %p269 = scmp.lt.s32.totalorder %s18, 1
      %s270 = scalar_select %p269, %s18, 1
      %s271 = smul.addr %s270, 2
      %s272 = smul.addr %s271, 4
      %s273 = scalar_lea.vmem %s0, %s272
      %p274 = scmp.lt.s32.totalorder %s18, 1
      %s275 = scalar_select %p274, %s18, 1
      %s276 = smul.addr %s275, 2
      %s277 = smul.addr %s276, 4
      %s278 = scalar_lea.vmem %s7, %s277
      %v279 = vld [vmem:[%s273] sm:$0xff]
      %v280 = vld [vmem:[%s1] sm:$0xf]
      %v281 = vld [vmem:[%s2] sm:$0x1]
      %v283 = vlaneseq
      %v284 = vshrl.u32 %v283, 7
      %v285 = vsub.s32 0, %v284
      %v286 = vrot.slane %v281, %v285
      %v289 = vcombine.high %v279, %v279
      %291 = vxpose.xlu0.b32.start [1/16] %v279, 128
      %292 = vxpose.xlu0.b32.cont [2/16] 0.0, 128
      %293 = vxpose.xlu0.b32.cont [3/16] 0.0, 128
      %294 = vxpose.xlu0.b32.cont [4/16] 0.0, 128
      %295 = vxpose.xlu0.b32.cont [5/16] 0.0, 128
      %296 = vxpose.xlu0.b32.cont [6/16] 0.0, 128
      %297 = vxpose.xlu0.b32.cont [7/16] 0.0, 128
      %298 = vxpose.xlu0.b32.cont [8/16] 0.0, 128
      %299 = vxpose.xlu0.b32.cont [9/16] 0.0, 128
      %300 = vxpose.xlu0.b32.cont [10/16] 0.0, 128
      %301 = vxpose.xlu0.b32.cont [11/16] 0.0, 128
      %302 = vxpose.xlu0.b32.cont [12/16] 0.0, 128
      %303 = vxpose.xlu0.b32.cont [13/16] 0.0, 128
      %304 = vxpose.xlu0.b32.cont [14/16] 0.0, 128
      %305 = vxpose.xlu0.b32.cont [15/16] 0.0, 128
      %306 = vxpose.xlu0.b32.end [16/16] 0.0, 128
      %v307 = vpop.trf.xlu0
      %v308 = vpop.trf.xlu0
      %v309 = vpop.trf.xlu0
      %v310 = vpop.trf.xlu0
      %v311 = vpop.trf.xlu0
      %v312 = vpop.trf.xlu0
      %v313 = vpop.trf.xlu0
      %v314 = vpop.trf.xlu0
      %v315 = vpop.trf.xlu0
      %v316 = vpop.trf.xlu0
      %v317 = vpop.trf.xlu0
      %v318 = vpop.trf.xlu0
      %v319 = vpop.trf.xlu0
      %v320 = vpop.trf.xlu0
      %v321 = vpop.trf.xlu0
      %v322 = vpop.trf.xlu0
      %323 = vxpose.xlu0.b32.start [1/16] %v289, 128
      %324 = vxpose.xlu0.b32.cont [2/16] 0.0, 128
      %325 = vxpose.xlu0.b32.cont [3/16] 0.0, 128
      %326 = vxpose.xlu0.b32.cont [4/16] 0.0, 128
      %327 = vxpose.xlu0.b32.cont [5/16] 0.0, 128
      %328 = vxpose.xlu0.b32.cont [6/16] 0.0, 128
      %329 = vxpose.xlu0.b32.cont [7/16] 0.0, 128
      %330 = vxpose.xlu0.b32.cont [8/16] 0.0, 128
      %331 = vxpose.xlu0.b32.cont [9/16] 0.0, 128
      %332 = vxpose.xlu0.b32.cont [10/16] 0.0, 128
      %333 = vxpose.xlu0.b32.cont [11/16] 0.0, 128
      %334 = vxpose.xlu0.b32.cont [12/16] 0.0, 128
      %335 = vxpose.xlu0.b32.cont [13/16] 0.0, 128
      %336 = vxpose.xlu0.b32.cont [14/16] 0.0, 128
      %337 = vxpose.xlu0.b32.cont [15/16] 0.0, 128
      %338 = vxpose.xlu0.b32.end [16/16] 0.0, 128
      %v339 = vpop.trf.xlu0
      %v340 = vpop.trf.xlu0
      %v341 = vpop.trf.xlu0
      %v342 = vpop.trf.xlu0
      %v343 = vpop.trf.xlu0
      %v344 = vpop.trf.xlu0
      %v345 = vpop.trf.xlu0
      %v346 = vpop.trf.xlu0
      %v347 = vpop.trf.xlu0
      %v348 = vpop.trf.xlu0
      %v349 = vpop.trf.xlu0
      %v350 = vpop.trf.xlu0
      %v351 = vpop.trf.xlu0
      %v352 = vpop.trf.xlu0
      %v353 = vpop.trf.xlu0
      %v354 = vpop.trf.xlu0
      %vm355 = vcmask 31744
      %v357 = vsel %vm355, %v307, 0
      %v360 = vsel %vm355, %v308, 0
      %v363 = vsel %vm355, %v309, 0
      %v366 = vsel %vm355, %v310, 0
      %v369 = vsel %vm355, %v311, 0
      %v372 = vsel %vm355, %v312, 0
      %v375 = vsel %vm355, %v313, 0
      %v378 = vsel %vm355, %v314, 0
      %v381 = vsel %vm355, %v315, 0
      %v384 = vsel %vm355, %v316, 0
      %v387 = vsel %vm355, %v317, 0
      %v390 = vsel %vm355, %v318, 0
      %v393 = vsel %vm355, %v319, 0
      %v396 = vsel %vm355, %v320, 0
      %v399 = vsel %vm355, %v321, 0
      %v402 = vsel %vm355, %v322, 0
      %v405 = vsel %vm355, %v339, 0
      %v408 = vsel %vm355, %v340, 0
      %v411 = vsel %vm355, %v341, 0
      %v414 = vsel %vm355, %v342, 0
      %v417 = vsel %vm355, %v343, 0
      %v420 = vsel %vm355, %v344, 0
      %v423 = vsel %vm355, %v345, 0
      %v426 = vsel %vm355, %v346, 0
      %v429 = vsel %vm355, %v347, 0
      %v432 = vsel %vm355, %v348, 0
      %v435 = vsel %vm355, %v349, 0
      %v438 = vsel %vm355, %v350, 0
      %v441 = vsel %vm355, %v351, 0
      %v444 = vsel %vm355, %v352, 0
      %v447 = vsel %vm355, %v353, 0
      %v450 = vsel %vm355, %v354, 0
      %vm452 = vcmask 1043456
      %v454 = vsel %vm452, %v280, 0
      %456 = vmatprep.subr.mxu0 0.0
      %457 = vmatpush1.msra.mxu0 0.0
      %458 = vmatprep.subr.mxu0 0.0
      %459 = vmatpush1.msra.mxu0 0.0
      %460 = vmatprep.subr.mxu0 0.0
      %461 = vmatpush1.msra.mxu0 0.0
      %462 = vmatprep.subr.mxu0 0.0
      %463 = vmatpush1.msra.mxu0 0.0
      %464 = vmatprep.subr.mxu0 0.0
      %465 = vmatpush1.msra.mxu0 0.0
      %466 = vmatprep.subr.mxu0 0.0
      %467 = vmatpush1.msra.mxu0 0.0
      %468 = vmatprep.subr.mxu0 0.0
      %469 = vmatpush1.msra.mxu0 0.0
      %470 = vmatprep.subr.mxu0 0.0
      %471 = vmatpush1.msra.mxu0 0.0
      %472 = vmatprep.subr.mxu0 0.0
      %473 = vmatpush1.msra.mxu0 0.0
      %474 = vmatprep.subr.mxu0 0.0
      %475 = vmatpush1.msra.mxu0 0.0
      %476 = vmatprep.subr.mxu0 0.0
      %477 = vmatpush1.msra.mxu0 0.0
      %478 = vmatprep.subr.mxu0 0.0
      %479 = vmatpush1.msra.mxu0 0.0
      %480 = vmatprep.subr.mxu0 0.0
      %481 = vmatpush1.msra.mxu0 0.0
      %482 = vmatprep.subr.mxu0 0.0
      %483 = vmatpush1.msra.mxu0 0.0
      %484 = vmatprep.subr.mxu0 0.0
      %485 = vmatpush1.msra.mxu0 0.0
      %486 = vmatprep.subr.mxu0 0.0
      %487 = vmatpush1.msra.mxu0 %v454
      %488 = vmatprep.subr.mxu0 0.0
      %489 = vmatpush2.msra.mxu0 0.0
      %490 = vmatprep.subr.mxu0 0.0
      %491 = vmatpush2.msra.mxu0 0.0
      %492 = vmatprep.subr.mxu0 0.0
      %493 = vmatpush2.msra.mxu0 0.0
      %494 = vmatprep.subr.mxu0 0.0
      %495 = vmatpush2.msra.mxu0 0.0
      %496 = vmatprep.subr.mxu0 0.0
      %497 = vmatpush2.msra.mxu0 0.0
      %498 = vmatprep.subr.mxu0 0.0
      %499 = vmatpush2.msra.mxu0 0.0
      %500 = vmatprep.subr.mxu0 0.0
      %501 = vmatpush2.msra.mxu0 0.0
      %502 = vmatprep.subr.mxu0 0.0
      %503 = vmatpush2.msra.mxu0 0.0
      %504 = vmatprep.subr.mxu0 0.0
      %505 = vmatpush2.msra.mxu0 0.0
      %506 = vmatprep.subr.mxu0 0.0
      %507 = vmatpush2.msra.mxu0 0.0
      %508 = vmatprep.subr.mxu0 0.0
      %509 = vmatpush2.msra.mxu0 0.0
      %510 = vmatprep.subr.mxu0 0.0
      %511 = vmatpush2.msra.mxu0 0.0
      %512 = vmatprep.subr.mxu0 0.0
      %513 = vmatpush2.msra.mxu0 0.0
      %514 = vmatprep.subr.mxu0 0.0
      %515 = vmatpush2.msra.mxu0 0.0
      %516 = vmatprep.subr.mxu0 0.0
      %517 = vmatpush2.msra.mxu0 0.0
      %518 = vmatprep.subr.mxu0 0.0
      %519 = vmatpush2.msra.mxu0 0.0
      %520 = vmatprep.mubr.f32.mxu0 0.0
      %521 = vmatmul.mubr.f32.gmra.mxu0 %v357
      %v522 = vpop.f32.mrf.mxu0
      %v523 = vadd.f32 %v286, %v522
      %v524 = vpop.f32.mrf.mxu0
      %525 = vmatprep.mubr.f32.mxu0 0.0
      %526 = vmatmul.mubr.f32.gmra.mxu0 %v360
      %v527 = vpop.f32.mrf.mxu0
      %v528 = vadd.f32 %v286, %v527
      %v529 = vpop.f32.mrf.mxu0
      %530 = vmatprep.mubr.f32.mxu0 0.0
      %531 = vmatmul.mubr.f32.gmra.mxu0 %v363
      %v532 = vpop.f32.mrf.mxu0
      %v533 = vadd.f32 %v286, %v532
      %v534 = vpop.f32.mrf.mxu0
      %535 = vmatprep.mubr.f32.mxu0 0.0
      %536 = vmatmul.mubr.f32.gmra.mxu0 %v366
      %v537 = vpop.f32.mrf.mxu0
      %v538 = vadd.f32 %v286, %v537
      %v539 = vpop.f32.mrf.mxu0
      %540 = vmatprep.mubr.f32.mxu0 0.0
      %541 = vmatmul.mubr.f32.gmra.mxu0 %v369
      %v542 = vpop.f32.mrf.mxu0
      %v543 = vadd.f32 %v286, %v542
      %v544 = vpop.f32.mrf.mxu0
      %545 = vmatprep.mubr.f32.mxu0 0.0
      %546 = vmatmul.mubr.f32.gmra.mxu0 %v372
      %v547 = vpop.f32.mrf.mxu0
      %v548 = vadd.f32 %v286, %v547
      %v549 = vpop.f32.mrf.mxu0
      %550 = vmatprep.mubr.f32.mxu0 0.0
      %551 = vmatmul.mubr.f32.gmra.mxu0 %v375
      %v552 = vpop.f32.mrf.mxu0
      %v553 = vadd.f32 %v286, %v552
      %v554 = vpop.f32.mrf.mxu0
      %555 = vmatprep.mubr.f32.mxu0 0.0
      %556 = vmatmul.mubr.f32.gmra.mxu0 %v378
      %v557 = vpop.f32.mrf.mxu0
      %v558 = vadd.f32 %v286, %v557
      %v559 = vpop.f32.mrf.mxu0
      %560 = vmatprep.mubr.f32.mxu0 0.0
      %561 = vmatmul.mubr.f32.gmra.mxu0 %v381
      %v562 = vpop.f32.mrf.mxu0
      %v563 = vadd.f32 %v286, %v562
      %v564 = vpop.f32.mrf.mxu0
      %565 = vmatprep.mubr.f32.mxu0 0.0
      %566 = vmatmul.mubr.f32.gmra.mxu0 %v384
      %v567 = vpop.f32.mrf.mxu0
      %v568 = vadd.f32 %v286, %v567
      %v569 = vpop.f32.mrf.mxu0
      %570 = vmatprep.mubr.f32.mxu0 0.0
      %571 = vmatmul.mubr.f32.gmra.mxu0 %v387
      %v572 = vpop.f32.mrf.mxu0
      %v573 = vadd.f32 %v286, %v572
      %v574 = vpop.f32.mrf.mxu0
      %575 = vmatprep.mubr.f32.mxu0 0.0
      %576 = vmatmul.mubr.f32.gmra.mxu0 %v390
      %v577 = vpop.f32.mrf.mxu0
      %v578 = vadd.f32 %v286, %v577
      %v579 = vpop.f32.mrf.mxu0
      %580 = vmatprep.mubr.f32.mxu0 0.0
      %581 = vmatmul.mubr.f32.gmra.mxu0 %v393
      %v582 = vpop.f32.mrf.mxu0
      %v583 = vadd.f32 %v286, %v582
      %v584 = vpop.f32.mrf.mxu0
      %585 = vmatprep.mubr.f32.mxu0 0.0
      %586 = vmatmul.mubr.f32.gmra.mxu0 %v396
      %v587 = vpop.f32.mrf.mxu0
      %v588 = vadd.f32 %v286, %v587
      %v589 = vpop.f32.mrf.mxu0
      %590 = vmatprep.mubr.f32.mxu0 0.0
      %591 = vmatmul.mubr.f32.gmra.mxu0 %v399
      %v592 = vpop.f32.mrf.mxu0
      %v593 = vadd.f32 %v286, %v592
      %v594 = vpop.f32.mrf.mxu0
      %595 = vmatprep.mubr.f32.mxu0 0.0
      %596 = vmatmul.mubr.f32.gmra.mxu0 %v402
      %v597 = vpop.f32.mrf.mxu0
      %v598 = vadd.f32 %v286, %v597
      %v599 = vpop.f32.mrf.mxu0
      %600 = vmatprep.mubr.f32.mxu0 0.0
      %601 = vmatmul.mubr.f32.gmra.mxu0 %v405
      %v602 = vpop.f32.mrf.mxu0
      %v603 = vadd.f32 %v286, %v602
      %v604 = vpop.f32.mrf.mxu0
      %605 = vmatprep.mubr.f32.mxu0 0.0
      %606 = vmatmul.mubr.f32.gmra.mxu0 %v408
      %v607 = vpop.f32.mrf.mxu0
      %v608 = vadd.f32 %v286, %v607
      %v609 = vpop.f32.mrf.mxu0
      %610 = vmatprep.mubr.f32.mxu0 0.0
      %611 = vmatmul.mubr.f32.gmra.mxu0 %v411
      %v612 = vpop.f32.mrf.mxu0
      %v613 = vadd.f32 %v286, %v612
      %v614 = vpop.f32.mrf.mxu0
      %615 = vmatprep.mubr.f32.mxu0 0.0
      %616 = vmatmul.mubr.f32.gmra.mxu0 %v414
      %v617 = vpop.f32.mrf.mxu0
      %v618 = vadd.f32 %v286, %v617
      %v619 = vpop.f32.mrf.mxu0
      %620 = vmatprep.mubr.f32.mxu0 0.0
      %621 = vmatmul.mubr.f32.gmra.mxu0 %v417
      %v622 = vpop.f32.mrf.mxu0
      %v623 = vadd.f32 %v286, %v622
      %v624 = vpop.f32.mrf.mxu0
      %625 = vmatprep.mubr.f32.mxu0 0.0
      %626 = vmatmul.mubr.f32.gmra.mxu0 %v420
      %v627 = vpop.f32.mrf.mxu0
      %v628 = vadd.f32 %v286, %v627
      %v629 = vpop.f32.mrf.mxu0
      %630 = vmatprep.mubr.f32.mxu0 0.0
      %631 = vmatmul.mubr.f32.gmra.mxu0 %v423
      %v632 = vpop.f32.mrf.mxu0
      %v633 = vadd.f32 %v286, %v632
      %v634 = vpop.f32.mrf.mxu0
      %635 = vmatprep.mubr.f32.mxu0 0.0
      %636 = vmatmul.mubr.f32.gmra.mxu0 %v426
      %v637 = vpop.f32.mrf.mxu0
      %v638 = vadd.f32 %v286, %v637
      %v639 = vpop.f32.mrf.mxu0
      %640 = vmatprep.mubr.f32.mxu0 0.0
      %641 = vmatmul.mubr.f32.gmra.mxu0 %v429
      %v642 = vpop.f32.mrf.mxu0
      %v643 = vadd.f32 %v286, %v642
      %v644 = vpop.f32.mrf.mxu0
      %645 = vmatprep.mubr.f32.mxu0 0.0
      %646 = vmatmul.mubr.f32.gmra.mxu0 %v432
      %v647 = vpop.f32.mrf.mxu0
      %v648 = vadd.f32 %v286, %v647
      %v649 = vpop.f32.mrf.mxu0
      %650 = vmatprep.mubr.f32.mxu0 0.0
      %651 = vmatmul.mubr.f32.gmra.mxu0 %v435
      %v652 = vpop.f32.mrf.mxu0
      %v653 = vadd.f32 %v286, %v652
      %v654 = vpop.f32.mrf.mxu0
      %655 = vmatprep.mubr.f32.mxu0 0.0
      %656 = vmatmul.mubr.f32.gmra.mxu0 %v438
      %v657 = vpop.f32.mrf.mxu0
      %v658 = vadd.f32 %v286, %v657
      %v659 = vpop.f32.mrf.mxu0
      %660 = vmatprep.mubr.f32.mxu0 0.0
      %661 = vmatmul.mubr.f32.gmra.mxu0 %v441
      %v662 = vpop.f32.mrf.mxu0
      %v663 = vadd.f32 %v286, %v662
      %v664 = vpop.f32.mrf.mxu0
      %665 = vmatprep.mubr.f32.mxu0 0.0
      %666 = vmatmul.mubr.f32.gmra.mxu0 %v444
      %v667 = vpop.f32.mrf.mxu0
      %v668 = vadd.f32 %v286, %v667
      %v669 = vpop.f32.mrf.mxu0
      %670 = vmatprep.mubr.f32.mxu0 0.0
      %671 = vmatmul.mubr.f32.gmra.mxu0 %v447
      %v672 = vpop.f32.mrf.mxu0
      %v673 = vadd.f32 %v286, %v672
      %v674 = vpop.f32.mrf.mxu0
      %675 = vmatprep.mubr.f32.mxu0 0.0
      %676 = vmatmul.mubr.f32.gmra.mxu0 %v450
      %v677 = vpop.f32.mrf.mxu0
      %v678 = vadd.f32 %v286, %v677
      %v679 = vpop.f32.mrf.mxu0
      %680 = vdwg.mxu0
      %vm681 = vcmask 48128
      %682 = vst.msk [vmem:[#allocation2] sm:$0xff] %vm681, 0.0
      %683 = vst.msk [vmem:[#allocation2 + $0x8] sm:$0xff] %vm681, 0.0
      %vm684 = vcmask 41984
      %685 = vst.msk [vmem:[#allocation2 + $0x10] sm:$0x3] %vm684, 0.0
      %686 = vst.msk [vmem:[#allocation2 + $0x18] sm:$0xff] %vm681, 0.0
      %687 = vst.msk [vmem:[#allocation2 + $0x20] sm:$0xff] %vm681, 0.0
      %688 = vst.msk [vmem:[#allocation2 + $0x28] sm:$0x3] %vm684, 0.0
      %689 = vst.msk [vmem:[#allocation2 + $0x30] sm:$0xff] %vm681, 0.0
      %690 = vst.msk [vmem:[#allocation2 + $0x38] sm:$0xff] %vm681, 0.0
      %691 = vst.msk [vmem:[#allocation2 + $0x40] sm:$0x3] %vm684, 0.0
      %692 = vst.msk [vmem:[#allocation2 + $0x48] sm:$0xff] %vm681, 0.0
      %693 = vst.msk [vmem:[#allocation2 + $0x50] sm:$0xff] %vm681, 0.0
      %694 = vst.msk [vmem:[#allocation2 + $0x58] sm:$0x3] %vm684, 0.0
      %695 = vst.msk [vmem:[#allocation2 + $0x60] sm:$0xff] %vm681, 0.0
      %696 = vst.msk [vmem:[#allocation2 + $0x68] sm:$0xff] %vm681, 0.0
      %697 = vst.msk [vmem:[#allocation2 + $0x70] sm:$0x3] %vm684, 0.0
      %698 = vst.msk [vmem:[#allocation2 + $0x78] sm:$0xff] %vm681, 0.0
      %699 = vst.msk [vmem:[#allocation2 + $0x80] sm:$0xff] %vm681, 0.0
      %700 = vst.msk [vmem:[#allocation2 + $0x88] sm:$0x3] %vm684, 0.0
      %701 = vst.msk [vmem:[#allocation2 + $0x90] sm:$0xff] %vm681, 0.0
      %702 = vst.msk [vmem:[#allocation2 + $0x98] sm:$0xff] %vm681, 0.0
      %703 = vst.msk [vmem:[#allocation2 + $0xa0] sm:$0x3] %vm684, 0.0
      %704 = vst.msk [vmem:[#allocation2 + $0xa8] sm:$0xff] %vm681, 0.0
      %705 = vst.msk [vmem:[#allocation2 + $0xb0] sm:$0xff] %vm681, 0.0
      %706 = vst.msk [vmem:[#allocation2 + $0xb8] sm:$0x3] %vm684, 0.0
      %707 = vst.msk [vmem:[#allocation2 + $0xc0] sm:$0xff] %vm681, 0.0
      %708 = vst.msk [vmem:[#allocation2 + $0xc8] sm:$0xff] %vm681, 0.0
      %709 = vst.msk [vmem:[#allocation2 + $0xd0] sm:$0x3] %vm684, 0.0
      %710 = vst.msk [vmem:[#allocation2 + $0xd8] sm:$0xff] %vm681, 0.0
      %711 = vst.msk [vmem:[#allocation2 + $0xe0] sm:$0xff] %vm681, 0.0
      %712 = vst.msk [vmem:[#allocation2 + $0xe8] sm:$0x3] %vm684, 0.0
      %713 = vst.msk [vmem:[#allocation2 + $0xf0] sm:$0xff] %vm681, 0.0
      %714 = vst.msk [vmem:[#allocation2 + $0xf8] sm:$0xff] %vm681, 0.0
      %715 = vst.msk [vmem:[#allocation2 + $0x100] sm:$0x3] %vm684, 0.0
      %716 = vst.msk [vmem:[#allocation2 + $0x108] sm:$0xff] %vm681, 0.0
      %717 = vst.msk [vmem:[#allocation2 + $0x110] sm:$0xff] %vm681, 0.0
      %718 = vst.msk [vmem:[#allocation2 + $0x118] sm:$0x3] %vm684, 0.0
      %719 = vst.msk [vmem:[#allocation2 + $0x120] sm:$0xff] %vm681, 0.0
      %720 = vst.msk [vmem:[#allocation2 + $0x128] sm:$0xff] %vm681, 0.0
      %721 = vst.msk [vmem:[#allocation2 + $0x130] sm:$0x3] %vm684, 0.0
      %722 = vst.msk [vmem:[#allocation2 + $0x138] sm:$0xff] %vm681, 0.0
      %723 = vst.msk [vmem:[#allocation2 + $0x140] sm:$0xff] %vm681, 0.0
      %724 = vst.msk [vmem:[#allocation2 + $0x148] sm:$0x3] %vm684, 0.0
      %725 = vst.msk [vmem:[#allocation2 + $0x150] sm:$0xff] %vm681, 0.0
      %726 = vst.msk [vmem:[#allocation2 + $0x158] sm:$0xff] %vm681, 0.0
      %727 = vst.msk [vmem:[#allocation2 + $0x160] sm:$0x3] %vm684, 0.0
      %728 = vst.msk [vmem:[#allocation2 + $0x168] sm:$0xff] %vm681, 0.0
      %729 = vst.msk [vmem:[#allocation2 + $0x170] sm:$0xff] %vm681, 0.0
      %730 = vst.msk [vmem:[#allocation2 + $0x178] sm:$0x3] %vm684, 0.0
      %731 = vst.msk [vmem:[#allocation2 + $0x180] sm:$0xff] %vm681, 0.0
      %732 = vst.msk [vmem:[#allocation2 + $0x188] sm:$0xff] %vm681, 0.0
      %733 = vst.msk [vmem:[#allocation2 + $0x190] sm:$0x3] %vm684, 0.0
      %734 = vst.msk [vmem:[#allocation2 + $0x198] sm:$0xff] %vm681, 0.0
      %735 = vst.msk [vmem:[#allocation2 + $0x1a0] sm:$0xff] %vm681, 0.0
      %736 = vst.msk [vmem:[#allocation2 + $0x1a8] sm:$0x3] %vm684, 0.0
      %s737 = scalar_lea.vmem [#allocation2], 24
      %738 = vst.msk [vmem:[%s737 + $0x1] sm:$0xff] %vm681, %v523
      %739 = vst.msk [vmem:[%s737 + $0x9] sm:$0xff] %vm681, %v528
      %740 = vst.msk [vmem:[%s737 + $0x19] sm:$0xff] %vm681, %v533
      %741 = vst.msk [vmem:[%s737 + $0x21] sm:$0xff] %vm681, %v538
      %742 = vst.msk [vmem:[%s737 + $0x31] sm:$0xff] %vm681, %v543
      %743 = vst.msk [vmem:[%s737 + $0x39] sm:$0xff] %vm681, %v548
      %744 = vst.msk [vmem:[%s737 + $0x49] sm:$0xff] %vm681, %v553
      %745 = vst.msk [vmem:[%s737 + $0x51] sm:$0xff] %vm681, %v558
      %746 = vst.msk [vmem:[%s737 + $0x61] sm:$0xff] %vm681, %v563
      %747 = vst.msk [vmem:[%s737 + $0x69] sm:$0xff] %vm681, %v568
      %748 = vst.msk [vmem:[%s737 + $0x79] sm:$0xff] %vm681, %v573
      %749 = vst.msk [vmem:[%s737 + $0x81] sm:$0xff] %vm681, %v578
      %750 = vst.msk [vmem:[%s737 + $0x91] sm:$0xff] %vm681, %v583
      %751 = vst.msk [vmem:[%s737 + $0x99] sm:$0xff] %vm681, %v588
      %752 = vst.msk [vmem:[%s737 + $0xa9] sm:$0xff] %vm681, %v593
      %753 = vst.msk [vmem:[%s737 + $0xb1] sm:$0xff] %vm681, %v598
      %754 = vst.msk [vmem:[%s737 + $0xc1] sm:$0xff] %vm681, %v603
      %755 = vst.msk [vmem:[%s737 + $0xc9] sm:$0xff] %vm681, %v608
      %756 = vst.msk [vmem:[%s737 + $0xd9] sm:$0xff] %vm681, %v613
      %757 = vst.msk [vmem:[%s737 + $0xe1] sm:$0xff] %vm681, %v618
      %758 = vst.msk [vmem:[%s737 + $0xf1] sm:$0xff] %vm681, %v623
      %759 = vst.msk [vmem:[%s737 + $0xf9] sm:$0xff] %vm681, %v628
      %760 = vst.msk [vmem:[%s737 + $0x109] sm:$0xff] %vm681, %v633
      %761 = vst.msk [vmem:[%s737 + $0x111] sm:$0xff] %vm681, %v638
      %762 = vst.msk [vmem:[%s737 + $0x121] sm:$0xff] %vm681, %v643
      %763 = vst.msk [vmem:[%s737 + $0x129] sm:$0xff] %vm681, %v648
      %764 = vst.msk [vmem:[%s737 + $0x139] sm:$0xff] %vm681, %v653
      %765 = vst.msk [vmem:[%s737 + $0x141] sm:$0xff] %vm681, %v658
      %766 = vst.msk [vmem:[%s737 + $0x151] sm:$0xff] %vm681, %v663
      %767 = vst.msk [vmem:[%s737 + $0x159] sm:$0xff] %vm681, %v668
      %768 = vst.msk [vmem:[%s737 + $0x169] sm:$0xff] %vm681, %v673
      %769 = vst.msk [vmem:[%s737 + $0x171] sm:$0xff] %vm681, %v678
      %v770 = vld [vmem:[#allocation2] sm:$0xff]
      %v771 = vld [vmem:[#allocation2 + $0x8] sm:$0xff]
      %v772 = vld [vmem:[#allocation2 + $0x18] sm:$0xff]
      %v773 = vld [vmem:[#allocation2 + $0x20] sm:$0xff]
      %v774 = vld [vmem:[#allocation2 + $0x30] sm:$0xff]
      %v775 = vld [vmem:[#allocation2 + $0x38] sm:$0xff]
      %v776 = vld [vmem:[#allocation2 + $0x48] sm:$0xff]
      %v777 = vld [vmem:[#allocation2 + $0x50] sm:$0xff]
      %v778 = vld [vmem:[#allocation2 + $0x60] sm:$0xff]
      %v779 = vld [vmem:[#allocation2 + $0x68] sm:$0xff]
      %v780 = vld [vmem:[#allocation2 + $0x78] sm:$0xff]
      %v781 = vld [vmem:[#allocation2 + $0x80] sm:$0xff]
      %v782 = vld [vmem:[#allocation2 + $0x90] sm:$0xff]
      %v783 = vld [vmem:[#allocation2 + $0x98] sm:$0xff]
      %v784 = vld [vmem:[#allocation2 + $0xa8] sm:$0xff]
      %v785 = vld [vmem:[#allocation2 + $0xb0] sm:$0xff]
      %v786 = vld [vmem:[#allocation2 + $0xc0] sm:$0xff]
      %v787 = vld [vmem:[#allocation2 + $0xc8] sm:$0xff]
      %v788 = vld [vmem:[#allocation2 + $0xd8] sm:$0xff]
      %v789 = vld [vmem:[#allocation2 + $0xe0] sm:$0xff]
      %v790 = vld [vmem:[#allocation2 + $0xf0] sm:$0xff]
      %v791 = vld [vmem:[#allocation2 + $0xf8] sm:$0xff]
      %v792 = vld [vmem:[#allocation2 + $0x108] sm:$0xff]
      %v793 = vld [vmem:[#allocation2 + $0x110] sm:$0xff]
      %v794 = vld [vmem:[#allocation2 + $0x120] sm:$0xff]
      %v795 = vld [vmem:[#allocation2 + $0x128] sm:$0xff]
      %v796 = vld [vmem:[#allocation2 + $0x138] sm:$0xff]
      %v797 = vld [vmem:[#allocation2 + $0x140] sm:$0xff]
      %v798 = vld [vmem:[#allocation2 + $0x150] sm:$0xff]
      %v799 = vld [vmem:[#allocation2 + $0x158] sm:$0xff]
      %v800 = vld [vmem:[#allocation2 + $0x168] sm:$0xff]
      %v801 = vld [vmem:[#allocation2 + $0x170] sm:$0xff]
      %v802 = vld [vmem:[#allocation2 + $0x1] sm:$0xff]
      %v803 = vld [vmem:[#allocation2 + $0x9] sm:$0xff]
      %v804 = vld [vmem:[#allocation2 + $0x19] sm:$0xff]
      %v805 = vld [vmem:[#allocation2 + $0x21] sm:$0xff]
      %v806 = vld [vmem:[#allocation2 + $0x31] sm:$0xff]
      %v807 = vld [vmem:[#allocation2 + $0x39] sm:$0xff]
      %v808 = vld [vmem:[#allocation2 + $0x49] sm:$0xff]
      %v809 = vld [vmem:[#allocation2 + $0x51] sm:$0xff]
      %v810 = vld [vmem:[#allocation2 + $0x61] sm:$0xff]
      %v811 = vld [vmem:[#allocation2 + $0x69] sm:$0xff]
      %v812 = vld [vmem:[#allocation2 + $0x79] sm:$0xff]
      %v813 = vld [vmem:[#allocation2 + $0x81] sm:$0xff]
      %v814 = vld [vmem:[#allocation2 + $0x91] sm:$0xff]
      %v815 = vld [vmem:[#allocation2 + $0x99] sm:$0xff]
      %v816 = vld [vmem:[#allocation2 + $0xa9] sm:$0xff]
      %v817 = vld [vmem:[#allocation2 + $0xb1] sm:$0xff]
      %v818 = vld [vmem:[#allocation2 + $0xc1] sm:$0xff]
      %v819 = vld [vmem:[#allocation2 + $0xc9] sm:$0xff]
      %v820 = vld [vmem:[#allocation2 + $0xd9] sm:$0xff]
      %v821 = vld [vmem:[#allocation2 + $0xe1] sm:$0xff]
      %v822 = vld [vmem:[#allocation2 + $0xf1] sm:$0xff]
      %v823 = vld [vmem:[#allocation2 + $0xf9] sm:$0xff]
      %v824 = vld [vmem:[#allocation2 + $0x109] sm:$0xff]
      %v825 = vld [vmem:[#allocation2 + $0x111] sm:$0xff]
      %v826 = vld [vmem:[#allocation2 + $0x121] sm:$0xff]
      %v827 = vld [vmem:[#allocation2 + $0x129] sm:$0xff]
      %v828 = vld [vmem:[#allocation2 + $0x139] sm:$0xff]
      %v829 = vld [vmem:[#allocation2 + $0x141] sm:$0xff]
      %v830 = vld [vmem:[#allocation2 + $0x151] sm:$0xff]
      %v831 = vld [vmem:[#allocation2 + $0x159] sm:$0xff]
      %v832 = vld [vmem:[#allocation2 + $0x169] sm:$0xff]
      %v833 = vld [vmem:[#allocation2 + $0x171] sm:$0xff]
      %v834 = vld [vmem:[#allocation2 + $0x2] sm:$0xff]
      %v835 = vld [vmem:[#allocation2 + $0xa] sm:$0xff]
      %v836 = vld [vmem:[#allocation2 + $0x1a] sm:$0xff]
      %v837 = vld [vmem:[#allocation2 + $0x22] sm:$0xff]
      %v838 = vld [vmem:[#allocation2 + $0x32] sm:$0xff]
      %v839 = vld [vmem:[#allocation2 + $0x3a] sm:$0xff]
      %v840 = vld [vmem:[#allocation2 + $0x4a] sm:$0xff]
      %v841 = vld [vmem:[#allocation2 + $0x52] sm:$0xff]
      %v842 = vld [vmem:[#allocation2 + $0x62] sm:$0xff]
      %v843 = vld [vmem:[#allocation2 + $0x6a] sm:$0xff]
      %v844 = vld [vmem:[#allocation2 + $0x7a] sm:$0xff]
      %v845 = vld [vmem:[#allocation2 + $0x82] sm:$0xff]
      %v846 = vld [vmem:[#allocation2 + $0x92] sm:$0xff]
      %v847 = vld [vmem:[#allocation2 + $0x9a] sm:$0xff]
      %v848 = vld [vmem:[#allocation2 + $0xaa] sm:$0xff]
      %v849 = vld [vmem:[#allocation2 + $0xb2] sm:$0xff]
      %v850 = vld [vmem:[#allocation2 + $0xc2] sm:$0xff]
      %v851 = vld [vmem:[#allocation2 + $0xca] sm:$0xff]
      %v852 = vld [vmem:[#allocation2 + $0xda] sm:$0xff]
      %v853 = vld [vmem:[#allocation2 + $0xe2] sm:$0xff]
      %v854 = vld [vmem:[#allocation2 + $0xf2] sm:$0xff]
      %v855 = vld [vmem:[#allocation2 + $0xfa] sm:$0xff]
      %v856 = vld [vmem:[#allocation2 + $0x10a] sm:$0xff]
      %v857 = vld [vmem:[#allocation2 + $0x112] sm:$0xff]
      %v858 = vld [vmem:[#allocation2 + $0x122] sm:$0xff]
      %v859 = vld [vmem:[#allocation2 + $0x12a] sm:$0xff]
      %v860 = vld [vmem:[#allocation2 + $0x13a] sm:$0xff]
      %v861 = vld [vmem:[#allocation2 + $0x142] sm:$0xff]
      %v862 = vld [vmem:[#allocation2 + $0x152] sm:$0xff]
      %v863 = vld [vmem:[#allocation2 + $0x15a] sm:$0xff]
      %v864 = vld [vmem:[#allocation2 + $0x16a] sm:$0xff]
      %v865 = vld [vmem:[#allocation2 + $0x172] sm:$0xff]
      %v866 = vld [vmem:[%s737] sm:$0xff]
      %v867 = vld [vmem:[%s737 + $0x8] sm:$0xff]
      %v868 = vld [vmem:[%s737 + $0x18] sm:$0xff]
      %v869 = vld [vmem:[%s737 + $0x20] sm:$0xff]
      %v870 = vld [vmem:[%s737 + $0x30] sm:$0xff]
      %v871 = vld [vmem:[%s737 + $0x38] sm:$0xff]
      %v872 = vld [vmem:[%s737 + $0x48] sm:$0xff]
      %v873 = vld [vmem:[%s737 + $0x50] sm:$0xff]
      %v874 = vld [vmem:[%s737 + $0x60] sm:$0xff]
      %v875 = vld [vmem:[%s737 + $0x68] sm:$0xff]
      %v876 = vld [vmem:[%s737 + $0x78] sm:$0xff]
      %v877 = vld [vmem:[%s737 + $0x80] sm:$0xff]
      %v878 = vld [vmem:[%s737 + $0x90] sm:$0xff]
      %v879 = vld [vmem:[%s737 + $0x98] sm:$0xff]
      %v880 = vld [vmem:[%s737 + $0xa8] sm:$0xff]
      %v881 = vld [vmem:[%s737 + $0xb0] sm:$0xff]
      %v882 = vld [vmem:[%s737 + $0xc0] sm:$0xff]
      %v883 = vld [vmem:[%s737 + $0xc8] sm:$0xff]
      %v884 = vld [vmem:[%s737 + $0xd8] sm:$0xff]
      %v885 = vld [vmem:[%s737 + $0xe0] sm:$0xff]
      %v886 = vld [vmem:[%s737 + $0xf0] sm:$0xff]
      %v887 = vld [vmem:[%s737 + $0xf8] sm:$0xff]
      %v888 = vld [vmem:[%s737 + $0x108] sm:$0xff]
      %v889 = vld [vmem:[%s737 + $0x110] sm:$0xff]
      %v890 = vld [vmem:[%s737 + $0x120] sm:$0xff]
      %v891 = vld [vmem:[%s737 + $0x128] sm:$0xff]
      %v892 = vld [vmem:[%s737 + $0x138] sm:$0xff]
      %v893 = vld [vmem:[%s737 + $0x140] sm:$0xff]
      %v894 = vld [vmem:[%s737 + $0x150] sm:$0xff]
      %v895 = vld [vmem:[%s737 + $0x158] sm:$0xff]
      %v896 = vld [vmem:[%s737 + $0x168] sm:$0xff]
      %v897 = vld [vmem:[%s737 + $0x170] sm:$0xff]
      %v898 = vld [vmem:[%s737 + $0x1] sm:$0xff]
      %v899 = vld [vmem:[%s737 + $0x9] sm:$0xff]
      %v900 = vld [vmem:[%s737 + $0x19] sm:$0xff]
      %v901 = vld [vmem:[%s737 + $0x21] sm:$0xff]
      %v902 = vld [vmem:[%s737 + $0x31] sm:$0xff]
      %v903 = vld [vmem:[%s737 + $0x39] sm:$0xff]
      %v904 = vld [vmem:[%s737 + $0x49] sm:$0xff]
      %v905 = vld [vmem:[%s737 + $0x51] sm:$0xff]
      %v906 = vld [vmem:[%s737 + $0x61] sm:$0xff]
      %v907 = vld [vmem:[%s737 + $0x69] sm:$0xff]
      %v908 = vld [vmem:[%s737 + $0x79] sm:$0xff]
      %v909 = vld [vmem:[%s737 + $0x81] sm:$0xff]
      %v910 = vld [vmem:[%s737 + $0x91] sm:$0xff]
      %v911 = vld [vmem:[%s737 + $0x99] sm:$0xff]
      %v912 = vld [vmem:[%s737 + $0xa9] sm:$0xff]
      %v913 = vld [vmem:[%s737 + $0xb1] sm:$0xff]
      %v914 = vld [vmem:[%s737 + $0xc1] sm:$0xff]
      %v915 = vld [vmem:[%s737 + $0xc9] sm:$0xff]
      %v916 = vld [vmem:[%s737 + $0xd9] sm:$0xff]
      %v917 = vld [vmem:[%s737 + $0xe1] sm:$0xff]
      %v918 = vld [vmem:[%s737 + $0xf1] sm:$0xff]
      %v919 = vld [vmem:[%s737 + $0xf9] sm:$0xff]
      %v920 = vld [vmem:[%s737 + $0x109] sm:$0xff]
      %v921 = vld [vmem:[%s737 + $0x111] sm:$0xff]
      %v922 = vld [vmem:[%s737 + $0x121] sm:$0xff]
      %v923 = vld [vmem:[%s737 + $0x129] sm:$0xff]
      %v924 = vld [vmem:[%s737 + $0x139] sm:$0xff]
      %v925 = vld [vmem:[%s737 + $0x141] sm:$0xff]
      %v926 = vld [vmem:[%s737 + $0x151] sm:$0xff]
      %v927 = vld [vmem:[%s737 + $0x159] sm:$0xff]
      %v928 = vld [vmem:[%s737 + $0x169] sm:$0xff]
      %v929 = vld [vmem:[%s737 + $0x171] sm:$0xff]
      %v930 = vld [vmem:[%s737 + $0x2] sm:$0xff]
      %v931 = vld [vmem:[%s737 + $0xa] sm:$0xff]
      %v932 = vld [vmem:[%s737 + $0x1a] sm:$0xff]
      %v933 = vld [vmem:[%s737 + $0x22] sm:$0xff]
      %v934 = vld [vmem:[%s737 + $0x32] sm:$0xff]
      %v935 = vld [vmem:[%s737 + $0x3a] sm:$0xff]
      %v936 = vld [vmem:[%s737 + $0x4a] sm:$0xff]
      %v937 = vld [vmem:[%s737 + $0x52] sm:$0xff]
      %v938 = vld [vmem:[%s737 + $0x62] sm:$0xff]
      %v939 = vld [vmem:[%s737 + $0x6a] sm:$0xff]
      %v940 = vld [vmem:[%s737 + $0x7a] sm:$0xff]
      %v941 = vld [vmem:[%s737 + $0x82] sm:$0xff]
      %v942 = vld [vmem:[%s737 + $0x92] sm:$0xff]
      %v943 = vld [vmem:[%s737 + $0x9a] sm:$0xff]
      %v944 = vld [vmem:[%s737 + $0xaa] sm:$0xff]
      %v945 = vld [vmem:[%s737 + $0xb2] sm:$0xff]
      %v946 = vld [vmem:[%s737 + $0xc2] sm:$0xff]
      %v947 = vld [vmem:[%s737 + $0xca] sm:$0xff]
      %v948 = vld [vmem:[%s737 + $0xda] sm:$0xff]
      %v949 = vld [vmem:[%s737 + $0xe2] sm:$0xff]
      %v950 = vld [vmem:[%s737 + $0xf2] sm:$0xff]
      %v951 = vld [vmem:[%s737 + $0xfa] sm:$0xff]
      %v952 = vld [vmem:[%s737 + $0x10a] sm:$0xff]
      %v953 = vld [vmem:[%s737 + $0x112] sm:$0xff]
      %v954 = vld [vmem:[%s737 + $0x122] sm:$0xff]
      %v955 = vld [vmem:[%s737 + $0x12a] sm:$0xff]
      %v956 = vld [vmem:[%s737 + $0x13a] sm:$0xff]
      %v957 = vld [vmem:[%s737 + $0x142] sm:$0xff]
      %v958 = vld [vmem:[%s737 + $0x152] sm:$0xff]
      %v959 = vld [vmem:[%s737 + $0x15a] sm:$0xff]
      %v960 = vld [vmem:[%s737 + $0x16a] sm:$0xff]
      %v961 = vld [vmem:[%s737 + $0x172] sm:$0xff]
      %s962 = scalar_lea.vmem [#allocation2], 48
      %v963 = vld [vmem:[%s962] sm:$0xff]
      %v964 = vld [vmem:[%s962 + $0x8] sm:$0xff]
      %v965 = vld [vmem:[%s962 + $0x18] sm:$0xff]
      %v966 = vld [vmem:[%s962 + $0x20] sm:$0xff]
      %v967 = vld [vmem:[%s962 + $0x30] sm:$0xff]
      %v968 = vld [vmem:[%s962 + $0x38] sm:$0xff]
      %v969 = vld [vmem:[%s962 + $0x48] sm:$0xff]
      %v970 = vld [vmem:[%s962 + $0x50] sm:$0xff]
      %v971 = vld [vmem:[%s962 + $0x60] sm:$0xff]
      %v972 = vld [vmem:[%s962 + $0x68] sm:$0xff]
      %v973 = vld [vmem:[%s962 + $0x78] sm:$0xff]
      %v974 = vld [vmem:[%s962 + $0x80] sm:$0xff]
      %v975 = vld [vmem:[%s962 + $0x90] sm:$0xff]
      %v976 = vld [vmem:[%s962 + $0x98] sm:$0xff]
      %v977 = vld [vmem:[%s962 + $0xa8] sm:$0xff]
      %v978 = vld [vmem:[%s962 + $0xb0] sm:$0xff]
      %v979 = vld [vmem:[%s962 + $0xc0] sm:$0xff]
      %v980 = vld [vmem:[%s962 + $0xc8] sm:$0xff]
      %v981 = vld [vmem:[%s962 + $0xd8] sm:$0xff]
      %v982 = vld [vmem:[%s962 + $0xe0] sm:$0xff]
      %v983 = vld [vmem:[%s962 + $0xf0] sm:$0xff]
      %v984 = vld [vmem:[%s962 + $0xf8] sm:$0xff]
      %v985 = vld [vmem:[%s962 + $0x108] sm:$0xff]
      %v986 = vld [vmem:[%s962 + $0x110] sm:$0xff]
      %v987 = vld [vmem:[%s962 + $0x120] sm:$0xff]
      %v988 = vld [vmem:[%s962 + $0x128] sm:$0xff]
      %v989 = vld [vmem:[%s962 + $0x138] sm:$0xff]
      %v990 = vld [vmem:[%s962 + $0x140] sm:$0xff]
      %v991 = vld [vmem:[%s962 + $0x150] sm:$0xff]
      %v992 = vld [vmem:[%s962 + $0x158] sm:$0xff]
      %v993 = vld [vmem:[%s962 + $0x168] sm:$0xff]
      %v994 = vld [vmem:[%s962 + $0x170] sm:$0xff]
      %v995 = vld [vmem:[%s962 + $0x1] sm:$0xff]
      %v996 = vld [vmem:[%s962 + $0x9] sm:$0xff]
      %v997 = vld [vmem:[%s962 + $0x19] sm:$0xff]
      %v998 = vld [vmem:[%s962 + $0x21] sm:$0xff]
      %v999 = vld [vmem:[%s962 + $0x31] sm:$0xff]
      %v1000 = vld [vmem:[%s962 + $0x39] sm:$0xff]
      %v1001 = vld [vmem:[%s962 + $0x49] sm:$0xff]
      %v1002 = vld [vmem:[%s962 + $0x51] sm:$0xff]
      %v1003 = vld [vmem:[%s962 + $0x61] sm:$0xff]
      %v1004 = vld [vmem:[%s962 + $0x69] sm:$0xff]
      %v1005 = vld [vmem:[%s962 + $0x79] sm:$0xff]
      %v1006 = vld [vmem:[%s962 + $0x81] sm:$0xff]
      %v1007 = vld [vmem:[%s962 + $0x91] sm:$0xff]
      %v1008 = vld [vmem:[%s962 + $0x99] sm:$0xff]
      %v1009 = vld [vmem:[%s962 + $0xa9] sm:$0xff]
      %v1010 = vld [vmem:[%s962 + $0xb1] sm:$0xff]
      %v1011 = vld [vmem:[%s962 + $0xc1] sm:$0xff]
      %v1012 = vld [vmem:[%s962 + $0xc9] sm:$0xff]
      %v1013 = vld [vmem:[%s962 + $0xd9] sm:$0xff]
      %v1014 = vld [vmem:[%s962 + $0xe1] sm:$0xff]
      %v1015 = vld [vmem:[%s962 + $0xf1] sm:$0xff]
      %v1016 = vld [vmem:[%s962 + $0xf9] sm:$0xff]
      %v1017 = vld [vmem:[%s962 + $0x109] sm:$0xff]
      %v1018 = vld [vmem:[%s962 + $0x111] sm:$0xff]
      %v1019 = vld [vmem:[%s962 + $0x121] sm:$0xff]
      %v1020 = vld [vmem:[%s962 + $0x129] sm:$0xff]
      %v1021 = vld [vmem:[%s962 + $0x139] sm:$0xff]
      %v1022 = vld [vmem:[%s962 + $0x141] sm:$0xff]
      %v1023 = vld [vmem:[%s962 + $0x151] sm:$0xff]
      %v1024 = vld [vmem:[%s962 + $0x159] sm:$0xff]
      %v1025 = vld [vmem:[%s962 + $0x169] sm:$0xff]
      %v1026 = vld [vmem:[%s962 + $0x171] sm:$0xff]
      %v1027 = vld [vmem:[%s962 + $0x2] sm:$0xff]
      %v1028 = vld [vmem:[%s962 + $0xa] sm:$0xff]
      %v1029 = vld [vmem:[%s962 + $0x1a] sm:$0xff]
      %v1030 = vld [vmem:[%s962 + $0x22] sm:$0xff]
      %v1031 = vld [vmem:[%s962 + $0x32] sm:$0xff]
      %v1032 = vld [vmem:[%s962 + $0x3a] sm:$0xff]
      %v1033 = vld [vmem:[%s962 + $0x4a] sm:$0xff]
      %v1034 = vld [vmem:[%s962 + $0x52] sm:$0xff]
      %v1035 = vld [vmem:[%s962 + $0x62] sm:$0xff]
      %v1036 = vld [vmem:[%s962 + $0x6a] sm:$0xff]
      %v1037 = vld [vmem:[%s962 + $0x7a] sm:$0xff]
      %v1038 = vld [vmem:[%s962 + $0x82] sm:$0xff]
      %v1039 = vld [vmem:[%s962 + $0x92] sm:$0xff]
      %v1040 = vld [vmem:[%s962 + $0x9a] sm:$0xff]
      %v1041 = vld [vmem:[%s962 + $0xaa] sm:$0xff]
      %v1042 = vld [vmem:[%s962 + $0xb2] sm:$0xff]
      %v1043 = vld [vmem:[%s962 + $0xc2] sm:$0xff]
      %v1044 = vld [vmem:[%s962 + $0xca] sm:$0xff]
      %v1045 = vld [vmem:[%s962 + $0xda] sm:$0xff]
      %v1046 = vld [vmem:[%s962 + $0xe2] sm:$0xff]
      %v1047 = vld [vmem:[%s962 + $0xf2] sm:$0xff]
      %v1048 = vld [vmem:[%s962 + $0xfa] sm:$0xff]
      %v1049 = vld [vmem:[%s962 + $0x10a] sm:$0xff]
      %v1050 = vld [vmem:[%s962 + $0x112] sm:$0xff]
      %v1051 = vld [vmem:[%s962 + $0x122] sm:$0xff]
      %v1052 = vld [vmem:[%s962 + $0x12a] sm:$0xff]
      %v1053 = vld [vmem:[%s962 + $0x13a] sm:$0xff]
      %v1054 = vld [vmem:[%s962 + $0x142] sm:$0xff]
      %v1055 = vld [vmem:[%s962 + $0x152] sm:$0xff]
      %v1056 = vld [vmem:[%s962 + $0x15a] sm:$0xff]
      %v1057 = vld [vmem:[%s962 + $0x16a] sm:$0xff]
      %v1058 = vld [vmem:[%s962 + $0x172] sm:$0xff]
      %1091 = vrot.lane.b32.xlu0 %v802, 6
      %v1092 = vpop.permute.xlu0 %1091
      %1093 = vrot.lane.b32.xlu0 %v803, 6
      %v1094 = vpop.permute.xlu0 %1093
      %1095 = vrot.lane.b32.xlu0 %v804, 6
      %v1096 = vpop.permute.xlu0 %1095
      %1097 = vrot.lane.b32.xlu0 %v805, 6
      %v1098 = vpop.permute.xlu0 %1097
      %1099 = vrot.lane.b32.xlu0 %v806, 6
      %v1100 = vpop.permute.xlu0 %1099
      %1101 = vrot.lane.b32.xlu0 %v807, 6
      %v1102 = vpop.permute.xlu0 %1101
      %1103 = vrot.lane.b32.xlu0 %v808, 6
      %v1104 = vpop.permute.xlu0 %1103
      %1105 = vrot.lane.b32.xlu0 %v809, 6
      %v1106 = vpop.permute.xlu0 %1105
      %1107 = vrot.lane.b32.xlu0 %v810, 6
      %v1108 = vpop.permute.xlu0 %1107
      %1109 = vrot.lane.b32.xlu0 %v811, 6
      %v1110 = vpop.permute.xlu0 %1109
      %1111 = vrot.lane.b32.xlu0 %v812, 6
      %v1112 = vpop.permute.xlu0 %1111
      %1113 = vrot.lane.b32.xlu0 %v813, 6
      %v1114 = vpop.permute.xlu0 %1113
      %1115 = vrot.lane.b32.xlu0 %v814, 6
      %v1116 = vpop.permute.xlu0 %1115
      %1117 = vrot.lane.b32.xlu0 %v815, 6
      %v1118 = vpop.permute.xlu0 %1117
      %1119 = vrot.lane.b32.xlu0 %v816, 6
      %v1120 = vpop.permute.xlu0 %1119
      %1121 = vrot.lane.b32.xlu0 %v817, 6
      %v1122 = vpop.permute.xlu0 %1121
      %1123 = vrot.lane.b32.xlu0 %v818, 6
      %v1124 = vpop.permute.xlu0 %1123
      %1125 = vrot.lane.b32.xlu0 %v819, 6
      %v1126 = vpop.permute.xlu0 %1125
      %1127 = vrot.lane.b32.xlu0 %v820, 6
      %v1128 = vpop.permute.xlu0 %1127
      %1129 = vrot.lane.b32.xlu0 %v821, 6
      %v1130 = vpop.permute.xlu0 %1129
      %1131 = vrot.lane.b32.xlu0 %v822, 6
      %v1132 = vpop.permute.xlu0 %1131
      %1133 = vrot.lane.b32.xlu0 %v823, 6
      %v1134 = vpop.permute.xlu0 %1133
      %1135 = vrot.lane.b32.xlu0 %v824, 6
      %v1136 = vpop.permute.xlu0 %1135
      %1137 = vrot.lane.b32.xlu0 %v825, 6
      %v1138 = vpop.permute.xlu0 %1137
      %1139 = vrot.lane.b32.xlu0 %v826, 6
      %v1140 = vpop.permute.xlu0 %1139
      %1141 = vrot.lane.b32.xlu0 %v827, 6
      %v1142 = vpop.permute.xlu0 %1141
      %1143 = vrot.lane.b32.xlu0 %v828, 6
      %v1144 = vpop.permute.xlu0 %1143
      %1145 = vrot.lane.b32.xlu0 %v829, 6
      %v1146 = vpop.permute.xlu0 %1145
      %1147 = vrot.lane.b32.xlu0 %v830, 6
      %v1148 = vpop.permute.xlu0 %1147
      %1149 = vrot.lane.b32.xlu0 %v831, 6
      %v1150 = vpop.permute.xlu0 %1149
      %1151 = vrot.lane.b32.xlu0 %v832, 6
      %v1152 = vpop.permute.xlu0 %1151
      %1153 = vrot.lane.b32.xlu0 %v833, 6
      %v1154 = vpop.permute.xlu0 %1153
      %1219 = vrot.lane.b32.xlu0 %v834, 12
      %v1220 = vpop.permute.xlu0 %1219
      %1221 = vrot.lane.b32.xlu0 %v835, 12
      %v1222 = vpop.permute.xlu0 %1221
      %1223 = vrot.lane.b32.xlu0 %v836, 12
      %v1224 = vpop.permute.xlu0 %1223
      %1225 = vrot.lane.b32.xlu0 %v837, 12
      %v1226 = vpop.permute.xlu0 %1225
      %1227 = vrot.lane.b32.xlu0 %v838, 12
      %v1228 = vpop.permute.xlu0 %1227
      %1229 = vrot.lane.b32.xlu0 %v839, 12
      %v1230 = vpop.permute.xlu0 %1229
      %1231 = vrot.lane.b32.xlu0 %v840, 12
      %v1232 = vpop.permute.xlu0 %1231
      %1233 = vrot.lane.b32.xlu0 %v841, 12
      %v1234 = vpop.permute.xlu0 %1233
      %1235 = vrot.lane.b32.xlu0 %v842, 12
      %v1236 = vpop.permute.xlu0 %1235
      %1237 = vrot.lane.b32.xlu0 %v843, 12
      %v1238 = vpop.permute.xlu0 %1237
      %1239 = vrot.lane.b32.xlu0 %v844, 12
      %v1240 = vpop.permute.xlu0 %1239
      %1241 = vrot.lane.b32.xlu0 %v845, 12
      %v1242 = vpop.permute.xlu0 %1241
      %1243 = vrot.lane.b32.xlu0 %v846, 12
      %v1244 = vpop.permute.xlu0 %1243
      %1245 = vrot.lane.b32.xlu0 %v847, 12
      %v1246 = vpop.permute.xlu0 %1245
      %1247 = vrot.lane.b32.xlu0 %v848, 12
      %v1248 = vpop.permute.xlu0 %1247
      %1249 = vrot.lane.b32.xlu0 %v849, 12
      %v1250 = vpop.permute.xlu0 %1249
      %1251 = vrot.lane.b32.xlu0 %v850, 12
      %v1252 = vpop.permute.xlu0 %1251
      %1253 = vrot.lane.b32.xlu0 %v851, 12
      %v1254 = vpop.permute.xlu0 %1253
      %1255 = vrot.lane.b32.xlu0 %v852, 12
      %v1256 = vpop.permute.xlu0 %1255
      %1257 = vrot.lane.b32.xlu0 %v853, 12
      %v1258 = vpop.permute.xlu0 %1257
      %1259 = vrot.lane.b32.xlu0 %v854, 12
      %v1260 = vpop.permute.xlu0 %1259
      %1261 = vrot.lane.b32.xlu0 %v855, 12
      %v1262 = vpop.permute.xlu0 %1261
      %1263 = vrot.lane.b32.xlu0 %v856, 12
      %v1264 = vpop.permute.xlu0 %1263
      %1265 = vrot.lane.b32.xlu0 %v857, 12
      %v1266 = vpop.permute.xlu0 %1265
      %1267 = vrot.lane.b32.xlu0 %v858, 12
      %v1268 = vpop.permute.xlu0 %1267
      %1269 = vrot.lane.b32.xlu0 %v859, 12
      %v1270 = vpop.permute.xlu0 %1269
      %1271 = vrot.lane.b32.xlu0 %v860, 12
      %v1272 = vpop.permute.xlu0 %1271
      %1273 = vrot.lane.b32.xlu0 %v861, 12
      %v1274 = vpop.permute.xlu0 %1273
      %1275 = vrot.lane.b32.xlu0 %v862, 12
      %v1276 = vpop.permute.xlu0 %1275
      %1277 = vrot.lane.b32.xlu0 %v863, 12
      %v1278 = vpop.permute.xlu0 %1277
      %1279 = vrot.lane.b32.xlu0 %v864, 12
      %v1280 = vpop.permute.xlu0 %1279
      %1281 = vrot.lane.b32.xlu0 %v865, 12
      %v1282 = vpop.permute.xlu0 %1281
      %1347 = vrot.lane.b32.xlu0 %v866, 18
      %v1348 = vpop.permute.xlu0 %1347
      %1349 = vrot.lane.b32.xlu0 %v867, 18
      %v1350 = vpop.permute.xlu0 %1349
      %1351 = vrot.lane.b32.xlu0 %v868, 18
      %v1352 = vpop.permute.xlu0 %1351
      %1353 = vrot.lane.b32.xlu0 %v869, 18
      %v1354 = vpop.permute.xlu0 %1353
      %1355 = vrot.lane.b32.xlu0 %v870, 18
      %v1356 = vpop.permute.xlu0 %1355
      %1357 = vrot.lane.b32.xlu0 %v871, 18
      %v1358 = vpop.permute.xlu0 %1357
      %1359 = vrot.lane.b32.xlu0 %v872, 18
      %v1360 = vpop.permute.xlu0 %1359
      %1361 = vrot.lane.b32.xlu0 %v873, 18
      %v1362 = vpop.permute.xlu0 %1361
      %1363 = vrot.lane.b32.xlu0 %v874, 18
      %v1364 = vpop.permute.xlu0 %1363
      %1365 = vrot.lane.b32.xlu0 %v875, 18
      %v1366 = vpop.permute.xlu0 %1365
      %1367 = vrot.lane.b32.xlu0 %v876, 18
      %v1368 = vpop.permute.xlu0 %1367
      %1369 = vrot.lane.b32.xlu0 %v877, 18
      %v1370 = vpop.permute.xlu0 %1369
      %1371 = vrot.lane.b32.xlu0 %v878, 18
      %v1372 = vpop.permute.xlu0 %1371
      %1373 = vrot.lane.b32.xlu0 %v879, 18
      %v1374 = vpop.permute.xlu0 %1373
      %1375 = vrot.lane.b32.xlu0 %v880, 18
      %v1376 = vpop.permute.xlu0 %1375
      %1377 = vrot.lane.b32.xlu0 %v881, 18
      %v1378 = vpop.permute.xlu0 %1377
      %1379 = vrot.lane.b32.xlu0 %v882, 18
      %v1380 = vpop.permute.xlu0 %1379
      %1381 = vrot.lane.b32.xlu0 %v883, 18
      %v1382 = vpop.permute.xlu0 %1381
      %1383 = vrot.lane.b32.xlu0 %v884, 18
      %v1384 = vpop.permute.xlu0 %1383
      %1385 = vrot.lane.b32.xlu0 %v885, 18
      %v1386 = vpop.permute.xlu0 %1385
      %1387 = vrot.lane.b32.xlu0 %v886, 18
      %v1388 = vpop.permute.xlu0 %1387
      %1389 = vrot.lane.b32.xlu0 %v887, 18
      %v1390 = vpop.permute.xlu0 %1389
      %1391 = vrot.lane.b32.xlu0 %v888, 18
      %v1392 = vpop.permute.xlu0 %1391
      %1393 = vrot.lane.b32.xlu0 %v889, 18
      %v1394 = vpop.permute.xlu0 %1393
      %1395 = vrot.lane.b32.xlu0 %v890, 18
      %v1396 = vpop.permute.xlu0 %1395
      %1397 = vrot.lane.b32.xlu0 %v891, 18
      %v1398 = vpop.permute.xlu0 %1397
      %1399 = vrot.lane.b32.xlu0 %v892, 18
      %v1400 = vpop.permute.xlu0 %1399
      %1401 = vrot.lane.b32.xlu0 %v893, 18
      %v1402 = vpop.permute.xlu0 %1401
      %1403 = vrot.lane.b32.xlu0 %v894, 18
      %v1404 = vpop.permute.xlu0 %1403
      %1405 = vrot.lane.b32.xlu0 %v895, 18
      %v1406 = vpop.permute.xlu0 %1405
      %1407 = vrot.lane.b32.xlu0 %v896, 18
      %v1408 = vpop.permute.xlu0 %1407
      %1409 = vrot.lane.b32.xlu0 %v897, 18
      %v1410 = vpop.permute.xlu0 %1409
      %1475 = vrot.lane.b32.xlu0 %v898, 24
      %v1476 = vpop.permute.xlu0 %1475
      %1477 = vrot.lane.b32.xlu0 %v899, 24
      %v1478 = vpop.permute.xlu0 %1477
      %1479 = vrot.lane.b32.xlu0 %v900, 24
      %v1480 = vpop.permute.xlu0 %1479
      %1481 = vrot.lane.b32.xlu0 %v901, 24
      %v1482 = vpop.permute.xlu0 %1481
      %1483 = vrot.lane.b32.xlu0 %v902, 24
      %v1484 = vpop.permute.xlu0 %1483
      %1485 = vrot.lane.b32.xlu0 %v903, 24
      %v1486 = vpop.permute.xlu0 %1485
      %1487 = vrot.lane.b32.xlu0 %v904, 24
      %v1488 = vpop.permute.xlu0 %1487
      %1489 = vrot.lane.b32.xlu0 %v905, 24
      %v1490 = vpop.permute.xlu0 %1489
      %1491 = vrot.lane.b32.xlu0 %v906, 24
      %v1492 = vpop.permute.xlu0 %1491
      %1493 = vrot.lane.b32.xlu0 %v907, 24
      %v1494 = vpop.permute.xlu0 %1493
      %1495 = vrot.lane.b32.xlu0 %v908, 24
      %v1496 = vpop.permute.xlu0 %1495
      %1497 = vrot.lane.b32.xlu0 %v909, 24
      %v1498 = vpop.permute.xlu0 %1497
      %1499 = vrot.lane.b32.xlu0 %v910, 24
      %v1500 = vpop.permute.xlu0 %1499
      %1501 = vrot.lane.b32.xlu0 %v911, 24
      %v1502 = vpop.permute.xlu0 %1501
      %1503 = vrot.lane.b32.xlu0 %v912, 24
      %v1504 = vpop.permute.xlu0 %1503
      %1505 = vrot.lane.b32.xlu0 %v913, 24
      %v1506 = vpop.permute.xlu0 %1505
      %1507 = vrot.lane.b32.xlu0 %v914, 24
      %v1508 = vpop.permute.xlu0 %1507
      %1509 = vrot.lane.b32.xlu0 %v915, 24
      %v1510 = vpop.permute.xlu0 %1509
      %1511 = vrot.lane.b32.xlu0 %v916, 24
      %v1512 = vpop.permute.xlu0 %1511
      %1513 = vrot.lane.b32.xlu0 %v917, 24
      %v1514 = vpop.permute.xlu0 %1513
      %1515 = vrot.lane.b32.xlu0 %v918, 24
      %v1516 = vpop.permute.xlu0 %1515
      %1517 = vrot.lane.b32.xlu0 %v919, 24
      %v1518 = vpop.permute.xlu0 %1517
      %1519 = vrot.lane.b32.xlu0 %v920, 24
      %v1520 = vpop.permute.xlu0 %1519
      %1521 = vrot.lane.b32.xlu0 %v921, 24
      %v1522 = vpop.permute.xlu0 %1521
      %1523 = vrot.lane.b32.xlu0 %v922, 24
      %v1524 = vpop.permute.xlu0 %1523
      %1525 = vrot.lane.b32.xlu0 %v923, 24
      %v1526 = vpop.permute.xlu0 %1525
      %1527 = vrot.lane.b32.xlu0 %v924, 24
      %v1528 = vpop.permute.xlu0 %1527
      %1529 = vrot.lane.b32.xlu0 %v925, 24
      %v1530 = vpop.permute.xlu0 %1529
      %1531 = vrot.lane.b32.xlu0 %v926, 24
      %v1532 = vpop.permute.xlu0 %1531
      %1533 = vrot.lane.b32.xlu0 %v927, 24
      %v1534 = vpop.permute.xlu0 %1533
      %1535 = vrot.lane.b32.xlu0 %v928, 24
      %v1536 = vpop.permute.xlu0 %1535
      %1537 = vrot.lane.b32.xlu0 %v929, 24
      %v1538 = vpop.permute.xlu0 %1537
      %1603 = vrot.lane.b32.xlu0 %v930, 30
      %v1604 = vpop.permute.xlu0 %1603
      %1605 = vrot.lane.b32.xlu0 %v931, 30
      %v1606 = vpop.permute.xlu0 %1605
      %1607 = vrot.lane.b32.xlu0 %v932, 30
      %v1608 = vpop.permute.xlu0 %1607
      %1609 = vrot.lane.b32.xlu0 %v933, 30
      %v1610 = vpop.permute.xlu0 %1609
      %1611 = vrot.lane.b32.xlu0 %v934, 30
      %v1612 = vpop.permute.xlu0 %1611
      %1613 = vrot.lane.b32.xlu0 %v935, 30
      %v1614 = vpop.permute.xlu0 %1613
      %1615 = vrot.lane.b32.xlu0 %v936, 30
      %v1616 = vpop.permute.xlu0 %1615
      %1617 = vrot.lane.b32.xlu0 %v937, 30
      %v1618 = vpop.permute.xlu0 %1617
      %1619 = vrot.lane.b32.xlu0 %v938, 30
      %v1620 = vpop.permute.xlu0 %1619
      %1621 = vrot.lane.b32.xlu0 %v939, 30
      %v1622 = vpop.permute.xlu0 %1621
      %1623 = vrot.lane.b32.xlu0 %v940, 30
      %v1624 = vpop.permute.xlu0 %1623
      %1625 = vrot.lane.b32.xlu0 %v941, 30
      %v1626 = vpop.permute.xlu0 %1625
      %1627 = vrot.lane.b32.xlu0 %v942, 30
      %v1628 = vpop.permute.xlu0 %1627
      %1629 = vrot.lane.b32.xlu0 %v943, 30
      %v1630 = vpop.permute.xlu0 %1629
      %1631 = vrot.lane.b32.xlu0 %v944, 30
      %v1632 = vpop.permute.xlu0 %1631
      %1633 = vrot.lane.b32.xlu0 %v945, 30
      %v1634 = vpop.permute.xlu0 %1633
      %1635 = vrot.lane.b32.xlu0 %v946, 30
      %v1636 = vpop.permute.xlu0 %1635
      %1637 = vrot.lane.b32.xlu0 %v947, 30
      %v1638 = vpop.permute.xlu0 %1637
      %1639 = vrot.lane.b32.xlu0 %v948, 30
      %v1640 = vpop.permute.xlu0 %1639
      %1641 = vrot.lane.b32.xlu0 %v949, 30
      %v1642 = vpop.permute.xlu0 %1641
      %1643 = vrot.lane.b32.xlu0 %v950, 30
      %v1644 = vpop.permute.xlu0 %1643
      %1645 = vrot.lane.b32.xlu0 %v951, 30
      %v1646 = vpop.permute.xlu0 %1645
      %1647 = vrot.lane.b32.xlu0 %v952, 30
      %v1648 = vpop.permute.xlu0 %1647
      %1649 = vrot.lane.b32.xlu0 %v953, 30
      %v1650 = vpop.permute.xlu0 %1649
      %1651 = vrot.lane.b32.xlu0 %v954, 30
      %v1652 = vpop.permute.xlu0 %1651
      %1653 = vrot.lane.b32.xlu0 %v955, 30
      %v1654 = vpop.permute.xlu0 %1653
      %1655 = vrot.lane.b32.xlu0 %v956, 30
      %v1656 = vpop.permute.xlu0 %1655
      %1657 = vrot.lane.b32.xlu0 %v957, 30
      %v1658 = vpop.permute.xlu0 %1657
      %1659 = vrot.lane.b32.xlu0 %v958, 30
      %v1660 = vpop.permute.xlu0 %1659
      %1661 = vrot.lane.b32.xlu0 %v959, 30
      %v1662 = vpop.permute.xlu0 %1661
      %1663 = vrot.lane.b32.xlu0 %v960, 30
      %v1664 = vpop.permute.xlu0 %1663
      %1665 = vrot.lane.b32.xlu0 %v961, 30
      %v1666 = vpop.permute.xlu0 %1665
      %1731 = vrot.lane.b32.xlu0 %v963, 36
      %v1732 = vpop.permute.xlu0 %1731
      %1733 = vrot.lane.b32.xlu0 %v964, 36
      %v1734 = vpop.permute.xlu0 %1733
      %1735 = vrot.lane.b32.xlu0 %v965, 36
      %v1736 = vpop.permute.xlu0 %1735
      %1737 = vrot.lane.b32.xlu0 %v966, 36
      %v1738 = vpop.permute.xlu0 %1737
      %1739 = vrot.lane.b32.xlu0 %v967, 36
      %v1740 = vpop.permute.xlu0 %1739
      %1741 = vrot.lane.b32.xlu0 %v968, 36
      %v1742 = vpop.permute.xlu0 %1741
      %1743 = vrot.lane.b32.xlu0 %v969, 36
      %v1744 = vpop.permute.xlu0 %1743
      %1745 = vrot.lane.b32.xlu0 %v970, 36
      %v1746 = vpop.permute.xlu0 %1745
      %1747 = vrot.lane.b32.xlu0 %v971, 36
      %v1748 = vpop.permute.xlu0 %1747
      %1749 = vrot.lane.b32.xlu0 %v972, 36
      %v1750 = vpop.permute.xlu0 %1749
      %1751 = vrot.lane.b32.xlu0 %v973, 36
      %v1752 = vpop.permute.xlu0 %1751
      %1753 = vrot.lane.b32.xlu0 %v974, 36
      %v1754 = vpop.permute.xlu0 %1753
      %1755 = vrot.lane.b32.xlu0 %v975, 36
      %v1756 = vpop.permute.xlu0 %1755
      %1757 = vrot.lane.b32.xlu0 %v976, 36
      %v1758 = vpop.permute.xlu0 %1757
      %1759 = vrot.lane.b32.xlu0 %v977, 36
      %v1760 = vpop.permute.xlu0 %1759
      %1761 = vrot.lane.b32.xlu0 %v978, 36
      %v1762 = vpop.permute.xlu0 %1761
      %1763 = vrot.lane.b32.xlu0 %v979, 36
      %v1764 = vpop.permute.xlu0 %1763
      %1765 = vrot.lane.b32.xlu0 %v980, 36
      %v1766 = vpop.permute.xlu0 %1765
      %1767 = vrot.lane.b32.xlu0 %v981, 36
      %v1768 = vpop.permute.xlu0 %1767
      %1769 = vrot.lane.b32.xlu0 %v982, 36
      %v1770 = vpop.permute.xlu0 %1769
      %1771 = vrot.lane.b32.xlu0 %v983, 36
      %v1772 = vpop.permute.xlu0 %1771
      %1773 = vrot.lane.b32.xlu0 %v984, 36
      %v1774 = vpop.permute.xlu0 %1773
      %1775 = vrot.lane.b32.xlu0 %v985, 36
      %v1776 = vpop.permute.xlu0 %1775
      %1777 = vrot.lane.b32.xlu0 %v986, 36
      %v1778 = vpop.permute.xlu0 %1777
      %1779 = vrot.lane.b32.xlu0 %v987, 36
      %v1780 = vpop.permute.xlu0 %1779
      %1781 = vrot.lane.b32.xlu0 %v988, 36
      %v1782 = vpop.permute.xlu0 %1781
      %1783 = vrot.lane.b32.xlu0 %v989, 36
      %v1784 = vpop.permute.xlu0 %1783
      %1785 = vrot.lane.b32.xlu0 %v990, 36
      %v1786 = vpop.permute.xlu0 %1785
      %1787 = vrot.lane.b32.xlu0 %v991, 36
      %v1788 = vpop.permute.xlu0 %1787
      %1789 = vrot.lane.b32.xlu0 %v992, 36
      %v1790 = vpop.permute.xlu0 %1789
      %1791 = vrot.lane.b32.xlu0 %v993, 36
      %v1792 = vpop.permute.xlu0 %1791
      %1793 = vrot.lane.b32.xlu0 %v994, 36
      %v1794 = vpop.permute.xlu0 %1793
      %1859 = vrot.lane.b32.xlu0 %v995, 42
      %v1860 = vpop.permute.xlu0 %1859
      %1861 = vrot.lane.b32.xlu0 %v996, 42
      %v1862 = vpop.permute.xlu0 %1861
      %1863 = vrot.lane.b32.xlu0 %v997, 42
      %v1864 = vpop.permute.xlu0 %1863
      %1865 = vrot.lane.b32.xlu0 %v998, 42
      %v1866 = vpop.permute.xlu0 %1865
      %1867 = vrot.lane.b32.xlu0 %v999, 42
      %v1868 = vpop.permute.xlu0 %1867
      %1869 = vrot.lane.b32.xlu0 %v1000, 42
      %v1870 = vpop.permute.xlu0 %1869
      %1871 = vrot.lane.b32.xlu0 %v1001, 42
      %v1872 = vpop.permute.xlu0 %1871
      %1873 = vrot.lane.b32.xlu0 %v1002, 42
      %v1874 = vpop.permute.xlu0 %1873
      %1875 = vrot.lane.b32.xlu0 %v1003, 42
      %v1876 = vpop.permute.xlu0 %1875
      %1877 = vrot.lane.b32.xlu0 %v1004, 42
      %v1878 = vpop.permute.xlu0 %1877
      %1879 = vrot.lane.b32.xlu0 %v1005, 42
      %v1880 = vpop.permute.xlu0 %1879
      %1881 = vrot.lane.b32.xlu0 %v1006, 42
      %v1882 = vpop.permute.xlu0 %1881
      %1883 = vrot.lane.b32.xlu0 %v1007, 42
      %v1884 = vpop.permute.xlu0 %1883
      %1885 = vrot.lane.b32.xlu0 %v1008, 42
      %v1886 = vpop.permute.xlu0 %1885
      %1887 = vrot.lane.b32.xlu0 %v1009, 42
      %v1888 = vpop.permute.xlu0 %1887
      %1889 = vrot.lane.b32.xlu0 %v1010, 42
      %v1890 = vpop.permute.xlu0 %1889
      %1891 = vrot.lane.b32.xlu0 %v1011, 42
      %v1892 = vpop.permute.xlu0 %1891
      %1893 = vrot.lane.b32.xlu0 %v1012, 42
      %v1894 = vpop.permute.xlu0 %1893
      %1895 = vrot.lane.b32.xlu0 %v1013, 42
      %v1896 = vpop.permute.xlu0 %1895
      %1897 = vrot.lane.b32.xlu0 %v1014, 42
      %v1898 = vpop.permute.xlu0 %1897
      %1899 = vrot.lane.b32.xlu0 %v1015, 42
      %v1900 = vpop.permute.xlu0 %1899
      %1901 = vrot.lane.b32.xlu0 %v1016, 42
      %v1902 = vpop.permute.xlu0 %1901
      %1903 = vrot.lane.b32.xlu0 %v1017, 42
      %v1904 = vpop.permute.xlu0 %1903
      %1905 = vrot.lane.b32.xlu0 %v1018, 42
      %v1906 = vpop.permute.xlu0 %1905
      %1907 = vrot.lane.b32.xlu0 %v1019, 42
      %v1908 = vpop.permute.xlu0 %1907
      %1909 = vrot.lane.b32.xlu0 %v1020, 42
      %v1910 = vpop.permute.xlu0 %1909
      %1911 = vrot.lane.b32.xlu0 %v1021, 42
      %v1912 = vpop.permute.xlu0 %1911
      %1913 = vrot.lane.b32.xlu0 %v1022, 42
      %v1914 = vpop.permute.xlu0 %1913
      %1915 = vrot.lane.b32.xlu0 %v1023, 42
      %v1916 = vpop.permute.xlu0 %1915
      %1917 = vrot.lane.b32.xlu0 %v1024, 42
      %v1918 = vpop.permute.xlu0 %1917
      %1919 = vrot.lane.b32.xlu0 %v1025, 42
      %v1920 = vpop.permute.xlu0 %1919
      %1921 = vrot.lane.b32.xlu0 %v1026, 42
      %v1922 = vpop.permute.xlu0 %1921
      %1987 = vrot.lane.b32.xlu0 %v1027, 48
      %v1988 = vpop.permute.xlu0 %1987
      %1989 = vrot.lane.b32.xlu0 %v1028, 48
      %v1990 = vpop.permute.xlu0 %1989
      %1991 = vrot.lane.b32.xlu0 %v1029, 48
      %v1992 = vpop.permute.xlu0 %1991
      %1993 = vrot.lane.b32.xlu0 %v1030, 48
      %v1994 = vpop.permute.xlu0 %1993
      %1995 = vrot.lane.b32.xlu0 %v1031, 48
      %v1996 = vpop.permute.xlu0 %1995
      %1997 = vrot.lane.b32.xlu0 %v1032, 48
      %v1998 = vpop.permute.xlu0 %1997
      %1999 = vrot.lane.b32.xlu0 %v1033, 48
      %v2000 = vpop.permute.xlu0 %1999
      %2001 = vrot.lane.b32.xlu0 %v1034, 48
      %v2002 = vpop.permute.xlu0 %2001
      %2003 = vrot.lane.b32.xlu0 %v1035, 48
      %v2004 = vpop.permute.xlu0 %2003
      %2005 = vrot.lane.b32.xlu0 %v1036, 48
      %v2006 = vpop.permute.xlu0 %2005
      %2007 = vrot.lane.b32.xlu0 %v1037, 48
      %v2008 = vpop.permute.xlu0 %2007
      %2009 = vrot.lane.b32.xlu0 %v1038, 48
      %v2010 = vpop.permute.xlu0 %2009
      %2011 = vrot.lane.b32.xlu0 %v1039, 48
      %v2012 = vpop.permute.xlu0 %2011
      %2013 = vrot.lane.b32.xlu0 %v1040, 48
      %v2014 = vpop.permute.xlu0 %2013
      %2015 = vrot.lane.b32.xlu0 %v1041, 48
      %v2016 = vpop.permute.xlu0 %2015
      %2017 = vrot.lane.b32.xlu0 %v1042, 48
      %v2018 = vpop.permute.xlu0 %2017
      %2019 = vrot.lane.b32.xlu0 %v1043, 48
      %v2020 = vpop.permute.xlu0 %2019
      %2021 = vrot.lane.b32.xlu0 %v1044, 48
      %v2022 = vpop.permute.xlu0 %2021
      %2023 = vrot.lane.b32.xlu0 %v1045, 48
      %v2024 = vpop.permute.xlu0 %2023
      %2025 = vrot.lane.b32.xlu0 %v1046, 48
      %v2026 = vpop.permute.xlu0 %2025
      %2027 = vrot.lane.b32.xlu0 %v1047, 48
      %v2028 = vpop.permute.xlu0 %2027
      %2029 = vrot.lane.b32.xlu0 %v1048, 48
      %v2030 = vpop.permute.xlu0 %2029
      %2031 = vrot.lane.b32.xlu0 %v1049, 48
      %v2032 = vpop.permute.xlu0 %2031
      %2033 = vrot.lane.b32.xlu0 %v1050, 48
      %v2034 = vpop.permute.xlu0 %2033
      %2035 = vrot.lane.b32.xlu0 %v1051, 48
      %v2036 = vpop.permute.xlu0 %2035
      %2037 = vrot.lane.b32.xlu0 %v1052, 48
      %v2038 = vpop.permute.xlu0 %2037
      %2039 = vrot.lane.b32.xlu0 %v1053, 48
      %v2040 = vpop.permute.xlu0 %2039
      %2041 = vrot.lane.b32.xlu0 %v1054, 48
      %v2042 = vpop.permute.xlu0 %2041
      %2043 = vrot.lane.b32.xlu0 %v1055, 48
      %v2044 = vpop.permute.xlu0 %2043
      %2045 = vrot.lane.b32.xlu0 %v1056, 48
      %v2046 = vpop.permute.xlu0 %2045
      %2047 = vrot.lane.b32.xlu0 %v1057, 48
      %v2048 = vpop.permute.xlu0 %2047
      %2049 = vrot.lane.b32.xlu0 %v1058, 48
      %v2050 = vpop.permute.xlu0 %2049
      %v2083 = vsel %vm681, %v770, %v1092
      %v2084 = vsel %vm681, %v771, %v1094
      %v2085 = vsel %vm681, %v772, %v1096
      %v2086 = vsel %vm681, %v773, %v1098
      %v2087 = vsel %vm681, %v774, %v1100
      %v2088 = vsel %vm681, %v775, %v1102
      %v2089 = vsel %vm681, %v776, %v1104
      %v2090 = vsel %vm681, %v777, %v1106
      %v2091 = vsel %vm681, %v778, %v1108
      %v2092 = vsel %vm681, %v779, %v1110
      %v2093 = vsel %vm681, %v780, %v1112
      %v2094 = vsel %vm681, %v781, %v1114
      %v2095 = vsel %vm681, %v782, %v1116
      %v2096 = vsel %vm681, %v783, %v1118
      %v2097 = vsel %vm681, %v784, %v1120
      %v2098 = vsel %vm681, %v785, %v1122
      %v2099 = vsel %vm681, %v786, %v1124
      %v2100 = vsel %vm681, %v787, %v1126
      %v2101 = vsel %vm681, %v788, %v1128
      %v2102 = vsel %vm681, %v789, %v1130
      %v2103 = vsel %vm681, %v790, %v1132
      %v2104 = vsel %vm681, %v791, %v1134
      %v2105 = vsel %vm681, %v792, %v1136
      %v2106 = vsel %vm681, %v793, %v1138
      %v2107 = vsel %vm681, %v794, %v1140
      %v2108 = vsel %vm681, %v795, %v1142
      %v2109 = vsel %vm681, %v796, %v1144
      %v2110 = vsel %vm681, %v797, %v1146
      %v2111 = vsel %vm681, %v798, %v1148
      %v2112 = vsel %vm681, %v799, %v1150
      %v2113 = vsel %vm681, %v800, %v1152
      %v2114 = vsel %vm681, %v801, %v1154
      %vm2115 = vcmask 97280
      %v2116 = vsel %vm2115, %v2083, %v1220
      %v2117 = vsel %vm2115, %v2084, %v1222
      %v2118 = vsel %vm2115, %v2085, %v1224
      %v2119 = vsel %vm2115, %v2086, %v1226
      %v2120 = vsel %vm2115, %v2087, %v1228
      %v2121 = vsel %vm2115, %v2088, %v1230
      %v2122 = vsel %vm2115, %v2089, %v1232
      %v2123 = vsel %vm2115, %v2090, %v1234
      %v2124 = vsel %vm2115, %v2091, %v1236
      %v2125 = vsel %vm2115, %v2092, %v1238
      %v2126 = vsel %vm2115, %v2093, %v1240
      %v2127 = vsel %vm2115, %v2094, %v1242
      %v2128 = vsel %vm2115, %v2095, %v1244
      %v2129 = vsel %vm2115, %v2096, %v1246
      %v2130 = vsel %vm2115, %v2097, %v1248
      %v2131 = vsel %vm2115, %v2098, %v1250
      %v2132 = vsel %vm2115, %v2099, %v1252
      %v2133 = vsel %vm2115, %v2100, %v1254
      %v2134 = vsel %vm2115, %v2101, %v1256
      %v2135 = vsel %vm2115, %v2102, %v1258
      %v2136 = vsel %vm2115, %v2103, %v1260
      %v2137 = vsel %vm2115, %v2104, %v1262
      %v2138 = vsel %vm2115, %v2105, %v1264
      %v2139 = vsel %vm2115, %v2106, %v1266
      %v2140 = vsel %vm2115, %v2107, %v1268
      %v2141 = vsel %vm2115, %v2108, %v1270
      %v2142 = vsel %vm2115, %v2109, %v1272
      %v2143 = vsel %vm2115, %v2110, %v1274
      %v2144 = vsel %vm2115, %v2111, %v1276
      %v2145 = vsel %vm2115, %v2112, %v1278
      %v2146 = vsel %vm2115, %v2113, %v1280
      %v2147 = vsel %vm2115, %v2114, %v1282
      %vm2148 = vcmask 146432
      %v2149 = vsel %vm2148, %v2116, %v1348
      %v2150 = vsel %vm2148, %v2117, %v1350
      %v2151 = vsel %vm2148, %v2118, %v1352
      %v2152 = vsel %vm2148, %v2119, %v1354
      %v2153 = vsel %vm2148, %v2120, %v1356
      %v2154 = vsel %vm2148, %v2121, %v1358
      %v2155 = vsel %vm2148, %v2122, %v1360
      %v2156 = vsel %vm2148, %v2123, %v1362
      %v2157 = vsel %vm2148, %v2124, %v1364
      %v2158 = vsel %vm2148, %v2125, %v1366
      %v2159 = vsel %vm2148, %v2126, %v1368
      %v2160 = vsel %vm2148, %v2127, %v1370
      %v2161 = vsel %vm2148, %v2128, %v1372
      %v2162 = vsel %vm2148, %v2129, %v1374
      %v2163 = vsel %vm2148, %v2130, %v1376
      %v2164 = vsel %vm2148, %v2131, %v1378
      %v2165 = vsel %vm2148, %v2132, %v1380
      %v2166 = vsel %vm2148, %v2133, %v1382
      %v2167 = vsel %vm2148, %v2134, %v1384
      %v2168 = vsel %vm2148, %v2135, %v1386
      %v2169 = vsel %vm2148, %v2136, %v1388
      %v2170 = vsel %vm2148, %v2137, %v1390
      %v2171 = vsel %vm2148, %v2138, %v1392
      %v2172 = vsel %vm2148, %v2139, %v1394
      %v2173 = vsel %vm2148, %v2140, %v1396
      %v2174 = vsel %vm2148, %v2141, %v1398
      %v2175 = vsel %vm2148, %v2142, %v1400
      %v2176 = vsel %vm2148, %v2143, %v1402
      %v2177 = vsel %vm2148, %v2144, %v1404
      %v2178 = vsel %vm2148, %v2145, %v1406
      %v2179 = vsel %vm2148, %v2146, %v1408
      %v2180 = vsel %vm2148, %v2147, %v1410
      %vm2181 = vcmask 195584
      %v2182 = vsel %vm2181, %v2149, %v1476
      %v2183 = vsel %vm2181, %v2150, %v1478
      %v2184 = vsel %vm2181, %v2151, %v1480
      %v2185 = vsel %vm2181, %v2152, %v1482
      %v2186 = vsel %vm2181, %v2153, %v1484
      %v2187 = vsel %vm2181, %v2154, %v1486
      %v2188 = vsel %vm2181, %v2155, %v1488
      %v2189 = vsel %vm2181, %v2156, %v1490
      %v2190 = vsel %vm2181, %v2157, %v1492
      %v2191 = vsel %vm2181, %v2158, %v1494
      %v2192 = vsel %vm2181, %v2159, %v1496
      %v2193 = vsel %vm2181, %v2160, %v1498
      %v2194 = vsel %vm2181, %v2161, %v1500
      %v2195 = vsel %vm2181, %v2162, %v1502
      %v2196 = vsel %vm2181, %v2163, %v1504
      %v2197 = vsel %vm2181, %v2164, %v1506
      %v2198 = vsel %vm2181, %v2165, %v1508
      %v2199 = vsel %vm2181, %v2166, %v1510
      %v2200 = vsel %vm2181, %v2167, %v1512
      %v2201 = vsel %vm2181, %v2168, %v1514
      %v2202 = vsel %vm2181, %v2169, %v1516
      %v2203 = vsel %vm2181, %v2170, %v1518
      %v2204 = vsel %vm2181, %v2171, %v1520
      %v2205 = vsel %vm2181, %v2172, %v1522
      %v2206 = vsel %vm2181, %v2173, %v1524
      %v2207 = vsel %vm2181, %v2174, %v1526
      %v2208 = vsel %vm2181, %v2175, %v1528
      %v2209 = vsel %vm2181, %v2176, %v1530
      %v2210 = vsel %vm2181, %v2177, %v1532
      %v2211 = vsel %vm2181, %v2178, %v1534
      %v2212 = vsel %vm2181, %v2179, %v1536
      %v2213 = vsel %vm2181, %v2180, %v1538
      %vm2214 = vcmask 244736
      %v2215 = vsel %vm2214, %v2182, %v1604
      %v2216 = vsel %vm2214, %v2183, %v1606
      %v2217 = vsel %vm2214, %v2184, %v1608
      %v2218 = vsel %vm2214, %v2185, %v1610
      %v2219 = vsel %vm2214, %v2186, %v1612
      %v2220 = vsel %vm2214, %v2187, %v1614
      %v2221 = vsel %vm2214, %v2188, %v1616
      %v2222 = vsel %vm2214, %v2189, %v1618
      %v2223 = vsel %vm2214, %v2190, %v1620
      %v2224 = vsel %vm2214, %v2191, %v1622
      %v2225 = vsel %vm2214, %v2192, %v1624
      %v2226 = vsel %vm2214, %v2193, %v1626
      %v2227 = vsel %vm2214, %v2194, %v1628
      %v2228 = vsel %vm2214, %v2195, %v1630
      %v2229 = vsel %vm2214, %v2196, %v1632
      %v2230 = vsel %vm2214, %v2197, %v1634
      %v2231 = vsel %vm2214, %v2198, %v1636
      %v2232 = vsel %vm2214, %v2199, %v1638
      %v2233 = vsel %vm2214, %v2200, %v1640
      %v2234 = vsel %vm2214, %v2201, %v1642
      %v2235 = vsel %vm2214, %v2202, %v1644
      %v2236 = vsel %vm2214, %v2203, %v1646
      %v2237 = vsel %vm2214, %v2204, %v1648
      %v2238 = vsel %vm2214, %v2205, %v1650
      %v2239 = vsel %vm2214, %v2206, %v1652
      %v2240 = vsel %vm2214, %v2207, %v1654
      %v2241 = vsel %vm2214, %v2208, %v1656
      %v2242 = vsel %vm2214, %v2209, %v1658
      %v2243 = vsel %vm2214, %v2210, %v1660
      %v2244 = vsel %vm2214, %v2211, %v1662
      %v2245 = vsel %vm2214, %v2212, %v1664
      %v2246 = vsel %vm2214, %v2213, %v1666
      %vm2247 = vcmask 293888
      %v2248 = vsel %vm2247, %v2215, %v1732
      %v2249 = vsel %vm2247, %v2216, %v1734
      %v2250 = vsel %vm2247, %v2217, %v1736
      %v2251 = vsel %vm2247, %v2218, %v1738
      %v2252 = vsel %vm2247, %v2219, %v1740
      %v2253 = vsel %vm2247, %v2220, %v1742
      %v2254 = vsel %vm2247, %v2221, %v1744
      %v2255 = vsel %vm2247, %v2222, %v1746
      %v2256 = vsel %vm2247, %v2223, %v1748
      %v2257 = vsel %vm2247, %v2224, %v1750
      %v2258 = vsel %vm2247, %v2225, %v1752
      %v2259 = vsel %vm2247, %v2226, %v1754
      %v2260 = vsel %vm2247, %v2227, %v1756
      %v2261 = vsel %vm2247, %v2228, %v1758
      %v2262 = vsel %vm2247, %v2229, %v1760
      %v2263 = vsel %vm2247, %v2230, %v1762
      %v2264 = vsel %vm2247, %v2231, %v1764
      %v2265 = vsel %vm2247, %v2232, %v1766
      %v2266 = vsel %vm2247, %v2233, %v1768
      %v2267 = vsel %vm2247, %v2234, %v1770
      %v2268 = vsel %vm2247, %v2235, %v1772
      %v2269 = vsel %vm2247, %v2236, %v1774
      %v2270 = vsel %vm2247, %v2237, %v1776
      %v2271 = vsel %vm2247, %v2238, %v1778
      %v2272 = vsel %vm2247, %v2239, %v1780
      %v2273 = vsel %vm2247, %v2240, %v1782
      %v2274 = vsel %vm2247, %v2241, %v1784
      %v2275 = vsel %vm2247, %v2242, %v1786
      %v2276 = vsel %vm2247, %v2243, %v1788
      %v2277 = vsel %vm2247, %v2244, %v1790
      %v2278 = vsel %vm2247, %v2245, %v1792
      %v2279 = vsel %vm2247, %v2246, %v1794
      %vm2280 = vcmask 343040
      %v2281 = vsel %vm2280, %v2248, %v1860
      %v2282 = vsel %vm2280, %v2249, %v1862
      %v2283 = vsel %vm2280, %v2250, %v1864
      %v2284 = vsel %vm2280, %v2251, %v1866
      %v2285 = vsel %vm2280, %v2252, %v1868
      %v2286 = vsel %vm2280, %v2253, %v1870
      %v2287 = vsel %vm2280, %v2254, %v1872
      %v2288 = vsel %vm2280, %v2255, %v1874
      %v2289 = vsel %vm2280, %v2256, %v1876
      %v2290 = vsel %vm2280, %v2257, %v1878
      %v2291 = vsel %vm2280, %v2258, %v1880
      %v2292 = vsel %vm2280, %v2259, %v1882
      %v2293 = vsel %vm2280, %v2260, %v1884
      %v2294 = vsel %vm2280, %v2261, %v1886
      %v2295 = vsel %vm2280, %v2262, %v1888
      %v2296 = vsel %vm2280, %v2263, %v1890
      %v2297 = vsel %vm2280, %v2264, %v1892
      %v2298 = vsel %vm2280, %v2265, %v1894
      %v2299 = vsel %vm2280, %v2266, %v1896
      %v2300 = vsel %vm2280, %v2267, %v1898
      %v2301 = vsel %vm2280, %v2268, %v1900
      %v2302 = vsel %vm2280, %v2269, %v1902
      %v2303 = vsel %vm2280, %v2270, %v1904
      %v2304 = vsel %vm2280, %v2271, %v1906
      %v2305 = vsel %vm2280, %v2272, %v1908
      %v2306 = vsel %vm2280, %v2273, %v1910
      %v2307 = vsel %vm2280, %v2274, %v1912
      %v2308 = vsel %vm2280, %v2275, %v1914
      %v2309 = vsel %vm2280, %v2276, %v1916
      %v2310 = vsel %vm2280, %v2277, %v1918
      %v2311 = vsel %vm2280, %v2278, %v1920
      %v2312 = vsel %vm2280, %v2279, %v1922
      %vm2313 = vcmask 392192
      %v2314 = vsel %vm2313, %v2281, %v1988
      %v2315 = vsel %vm2313, %v2282, %v1990
      %v2316 = vsel %vm2313, %v2283, %v1992
      %v2317 = vsel %vm2313, %v2284, %v1994
      %v2318 = vsel %vm2313, %v2285, %v1996
      %v2319 = vsel %vm2313, %v2286, %v1998
      %v2320 = vsel %vm2313, %v2287, %v2000
      %v2321 = vsel %vm2313, %v2288, %v2002
      %v2322 = vsel %vm2313, %v2289, %v2004
      %v2323 = vsel %vm2313, %v2290, %v2006
      %v2324 = vsel %vm2313, %v2291, %v2008
      %v2325 = vsel %vm2313, %v2292, %v2010
      %v2326 = vsel %vm2313, %v2293, %v2012
      %v2327 = vsel %vm2313, %v2294, %v2014
      %v2328 = vsel %vm2313, %v2295, %v2016
      %v2329 = vsel %vm2313, %v2296, %v2018
      %v2330 = vsel %vm2313, %v2297, %v2020
      %v2331 = vsel %vm2313, %v2298, %v2022
      %v2332 = vsel %vm2313, %v2299, %v2024
      %v2333 = vsel %vm2313, %v2300, %v2026
      %v2334 = vsel %vm2313, %v2301, %v2028
      %v2335 = vsel %vm2313, %v2302, %v2030
      %v2336 = vsel %vm2313, %v2303, %v2032
      %v2337 = vsel %vm2313, %v2304, %v2034
      %v2338 = vsel %vm2313, %v2305, %v2036
      %v2339 = vsel %vm2313, %v2306, %v2038
      %v2340 = vsel %vm2313, %v2307, %v2040
      %v2341 = vsel %vm2313, %v2308, %v2042
      %v2342 = vsel %vm2313, %v2309, %v2044
      %v2343 = vsel %vm2313, %v2310, %v2046
      %v2344 = vsel %vm2313, %v2311, %v2048
      %v2345 = vsel %vm2313, %v2312, %v2050
      %v2346 = vld [vmem:[%s3] sm:$0xff]
      %v2347 = vld [vmem:[%s3 + $0x8] sm:$0xff]
      %v2348 = vld [vmem:[%s3 + $0x10] sm:$0xff]
      %v2349 = vld [vmem:[%s3 + $0x18] sm:$0xff]
      %v2350 = vld [vmem:[%s3 + $0x20] sm:$0xff]
      %v2351 = vld [vmem:[%s3 + $0x28] sm:$0xff]
      %v2352 = vld [vmem:[%s3 + $0x30] sm:$0x3f]
      %v2353 = vld [vmem:[%s4] sm:$0x1]
      %v2355 = vlaneseq
      %v2356 = vshrl.u32 %v2355, 7
      %v2357 = vsub.s32 0, %v2356
      %v2358 = vrot.slane %v2353, %v2357
      %vm2360 = vcmask 441344
      %v2362 = vsel %vm2360, %v2314, 0
      %v2365 = vsel %vm2360, %v2315, 0
      %v2368 = vsel %vm2360, %v2316, 0
      %v2371 = vsel %vm2360, %v2317, 0
      %v2374 = vsel %vm2360, %v2318, 0
      %v2377 = vsel %vm2360, %v2319, 0
      %v2380 = vsel %vm2360, %v2320, 0
      %v2383 = vsel %vm2360, %v2321, 0
      %v2386 = vsel %vm2360, %v2322, 0
      %v2389 = vsel %vm2360, %v2323, 0
      %v2392 = vsel %vm2360, %v2324, 0
      %v2395 = vsel %vm2360, %v2325, 0
      %v2398 = vsel %vm2360, %v2326, 0
      %v2401 = vsel %vm2360, %v2327, 0
      %v2404 = vsel %vm2360, %v2328, 0
      %v2407 = vsel %vm2360, %v2329, 0
      %v2410 = vsel %vm2360, %v2330, 0
      %v2413 = vsel %vm2360, %v2331, 0
      %v2416 = vsel %vm2360, %v2332, 0
      %v2419 = vsel %vm2360, %v2333, 0
      %v2422 = vsel %vm2360, %v2334, 0
      %v2425 = vsel %vm2360, %v2335, 0
      %v2428 = vsel %vm2360, %v2336, 0
      %v2431 = vsel %vm2360, %v2337, 0
      %v2434 = vsel %vm2360, %v2338, 0
      %v2437 = vsel %vm2360, %v2339, 0
      %v2440 = vsel %vm2360, %v2340, 0
      %v2443 = vsel %vm2360, %v2341, 0
      %v2446 = vsel %vm2360, %v2342, 0
      %v2449 = vsel %vm2360, %v2343, 0
      %v2452 = vsel %vm2360, %v2344, 0
      %v2455 = vsel %vm2360, %v2345, 0
      %vm2457 = vcmask 1045504
      %v2459 = vsel %vm2457, %v2352, 0
      %2461 = vmatprep.subr.mxu0 0.0
      %2462 = vmatpush1.msra.mxu0 0.0
      %2463 = vmatprep.subr.mxu0 0.0
      %2464 = vmatpush1.msra.mxu0 0.0
      %2465 = vmatprep.subr.mxu0 0.0
      %2466 = vmatpush1.msra.mxu0 0.0
      %2467 = vmatprep.subr.mxu0 0.0
      %2468 = vmatpush1.msra.mxu0 0.0
      %2469 = vmatprep.subr.mxu0 0.0
      %2470 = vmatpush1.msra.mxu0 0.0
      %2471 = vmatprep.subr.mxu0 0.0
      %2472 = vmatpush1.msra.mxu0 0.0
      %2473 = vmatprep.subr.mxu0 0.0
      %2474 = vmatpush1.msra.mxu0 0.0
      %2475 = vmatprep.subr.mxu0 0.0
      %2476 = vmatpush1.msra.mxu0 0.0
      %2477 = vmatprep.subr.mxu0 0.0
      %2478 = vmatpush1.msra.mxu0 0.0
      %2479 = vmatprep.subr.mxu0 0.0
      %2480 = vmatpush1.msra.mxu0 %v2459
      %2481 = vmatprep.subr.mxu0 0.0
      %2482 = vmatpush1.msra.mxu0 %v2351
      %2483 = vmatprep.subr.mxu0 0.0
      %2484 = vmatpush1.msra.mxu0 %v2350
      %2485 = vmatprep.subr.mxu0 0.0
      %2486 = vmatpush1.msra.mxu0 %v2349
      %2487 = vmatprep.subr.mxu0 0.0
      %2488 = vmatpush1.msra.mxu0 %v2348
      %2489 = vmatprep.subr.mxu0 0.0
      %2490 = vmatpush1.msra.mxu0 %v2347
      %2491 = vmatprep.subr.mxu0 0.0
      %2492 = vmatpush1.msra.mxu0 %v2346
      %2493 = vmatprep.subr.mxu0 0.0
      %2494 = vmatpush2.msra.mxu0 0.0
      %2495 = vmatprep.subr.mxu0 0.0
      %2496 = vmatpush2.msra.mxu0 0.0
      %2497 = vmatprep.subr.mxu0 0.0
      %2498 = vmatpush2.msra.mxu0 0.0
      %2499 = vmatprep.subr.mxu0 0.0
      %2500 = vmatpush2.msra.mxu0 0.0
      %2501 = vmatprep.subr.mxu0 0.0
      %2502 = vmatpush2.msra.mxu0 0.0
      %2503 = vmatprep.subr.mxu0 0.0
      %2504 = vmatpush2.msra.mxu0 0.0
      %2505 = vmatprep.subr.mxu0 0.0
      %2506 = vmatpush2.msra.mxu0 0.0
      %2507 = vmatprep.subr.mxu0 0.0
      %2508 = vmatpush2.msra.mxu0 0.0
      %2509 = vmatprep.subr.mxu0 0.0
      %2510 = vmatpush2.msra.mxu0 0.0
      %2511 = vmatprep.subr.mxu0 0.0
      %2512 = vmatpush2.msra.mxu0 0.0
      %2513 = vmatprep.subr.mxu0 0.0
      %2514 = vmatpush2.msra.mxu0 0.0
      %2515 = vmatprep.subr.mxu0 0.0
      %2516 = vmatpush2.msra.mxu0 0.0
      %2517 = vmatprep.subr.mxu0 0.0
      %2518 = vmatpush2.msra.mxu0 0.0
      %2519 = vmatprep.subr.mxu0 0.0
      %2520 = vmatpush2.msra.mxu0 0.0
      %2521 = vmatprep.subr.mxu0 0.0
      %2522 = vmatpush2.msra.mxu0 0.0
      %2523 = vmatprep.subr.mxu0 0.0
      %2524 = vmatpush2.msra.mxu0 0.0
      %2525 = vmatprep.mubr.f32.mxu0 0.0
      %2526 = vmatmul.mubr.f32.gmra.mxu0 %v2362
      %v2527 = vpop.f32.mrf.mxu0
      %v2528 = vadd.f32 %v2358, %v2527
      %v2529 = vpop.f32.mrf.mxu0
      %2530 = vmatprep.mubr.f32.mxu0 0.0
      %2531 = vmatmul.mubr.f32.gmra.mxu0 %v2365
      %v2532 = vpop.f32.mrf.mxu0
      %v2533 = vadd.f32 %v2358, %v2532
      %v2534 = vpop.f32.mrf.mxu0
      %2535 = vmatprep.mubr.f32.mxu0 0.0
      %2536 = vmatmul.mubr.f32.gmra.mxu0 %v2368
      %v2537 = vpop.f32.mrf.mxu0
      %v2538 = vadd.f32 %v2358, %v2537
      %v2539 = vpop.f32.mrf.mxu0
      %2540 = vmatprep.mubr.f32.mxu0 0.0
      %2541 = vmatmul.mubr.f32.gmra.mxu0 %v2371
      %v2542 = vpop.f32.mrf.mxu0
      %v2543 = vadd.f32 %v2358, %v2542
      %v2544 = vpop.f32.mrf.mxu0
      %2545 = vmatprep.mubr.f32.mxu0 0.0
      %2546 = vmatmul.mubr.f32.gmra.mxu0 %v2374
      %v2547 = vpop.f32.mrf.mxu0
      %v2548 = vadd.f32 %v2358, %v2547
      %v2549 = vpop.f32.mrf.mxu0
      %2550 = vmatprep.mubr.f32.mxu0 0.0
      %2551 = vmatmul.mubr.f32.gmra.mxu0 %v2377
      %v2552 = vpop.f32.mrf.mxu0
      %v2553 = vadd.f32 %v2358, %v2552
      %v2554 = vpop.f32.mrf.mxu0
      %2555 = vmatprep.mubr.f32.mxu0 0.0
      %2556 = vmatmul.mubr.f32.gmra.mxu0 %v2380
      %v2557 = vpop.f32.mrf.mxu0
      %v2558 = vadd.f32 %v2358, %v2557
      %v2559 = vpop.f32.mrf.mxu0
      %2560 = vmatprep.mubr.f32.mxu0 0.0
      %2561 = vmatmul.mubr.f32.gmra.mxu0 %v2383
      %v2562 = vpop.f32.mrf.mxu0
      %v2563 = vadd.f32 %v2358, %v2562
      %v2564 = vpop.f32.mrf.mxu0
      %2565 = vmatprep.mubr.f32.mxu0 0.0
      %2566 = vmatmul.mubr.f32.gmra.mxu0 %v2386
      %v2567 = vpop.f32.mrf.mxu0
      %v2568 = vadd.f32 %v2358, %v2567
      %v2569 = vpop.f32.mrf.mxu0
      %2570 = vmatprep.mubr.f32.mxu0 0.0
      %2571 = vmatmul.mubr.f32.gmra.mxu0 %v2389
      %v2572 = vpop.f32.mrf.mxu0
      %v2573 = vadd.f32 %v2358, %v2572
      %v2574 = vpop.f32.mrf.mxu0
      %2575 = vmatprep.mubr.f32.mxu0 0.0
      %2576 = vmatmul.mubr.f32.gmra.mxu0 %v2392
      %v2577 = vpop.f32.mrf.mxu0
      %v2578 = vadd.f32 %v2358, %v2577
      %v2579 = vpop.f32.mrf.mxu0
      %2580 = vmatprep.mubr.f32.mxu0 0.0
      %2581 = vmatmul.mubr.f32.gmra.mxu0 %v2395
      %v2582 = vpop.f32.mrf.mxu0
      %v2583 = vadd.f32 %v2358, %v2582
      %v2584 = vpop.f32.mrf.mxu0
      %2585 = vmatprep.mubr.f32.mxu0 0.0
      %2586 = vmatmul.mubr.f32.gmra.mxu0 %v2398
      %v2587 = vpop.f32.mrf.mxu0
      %v2588 = vadd.f32 %v2358, %v2587
      %v2589 = vpop.f32.mrf.mxu0
      %2590 = vmatprep.mubr.f32.mxu0 0.0
      %2591 = vmatmul.mubr.f32.gmra.mxu0 %v2401
      %v2592 = vpop.f32.mrf.mxu0
      %v2593 = vadd.f32 %v2358, %v2592
      %v2594 = vpop.f32.mrf.mxu0
      %2595 = vmatprep.mubr.f32.mxu0 0.0
      %2596 = vmatmul.mubr.f32.gmra.mxu0 %v2404
      %v2597 = vpop.f32.mrf.mxu0
      %v2598 = vadd.f32 %v2358, %v2597
      %v2599 = vpop.f32.mrf.mxu0
      %2600 = vmatprep.mubr.f32.mxu0 0.0
      %2601 = vmatmul.mubr.f32.gmra.mxu0 %v2407
      %v2602 = vpop.f32.mrf.mxu0
      %v2603 = vadd.f32 %v2358, %v2602
      %v2604 = vpop.f32.mrf.mxu0
      %2605 = vmatprep.mubr.f32.mxu0 0.0
      %2606 = vmatmul.mubr.f32.gmra.mxu0 %v2410
      %v2607 = vpop.f32.mrf.mxu0
      %v2608 = vadd.f32 %v2358, %v2607
      %v2609 = vpop.f32.mrf.mxu0
      %2610 = vmatprep.mubr.f32.mxu0 0.0
      %2611 = vmatmul.mubr.f32.gmra.mxu0 %v2413
      %v2612 = vpop.f32.mrf.mxu0
      %v2613 = vadd.f32 %v2358, %v2612
      %v2614 = vpop.f32.mrf.mxu0
      %2615 = vmatprep.mubr.f32.mxu0 0.0
      %2616 = vmatmul.mubr.f32.gmra.mxu0 %v2416
      %v2617 = vpop.f32.mrf.mxu0
      %v2618 = vadd.f32 %v2358, %v2617
      %v2619 = vpop.f32.mrf.mxu0
      %2620 = vmatprep.mubr.f32.mxu0 0.0
      %2621 = vmatmul.mubr.f32.gmra.mxu0 %v2419
      %v2622 = vpop.f32.mrf.mxu0
      %v2623 = vadd.f32 %v2358, %v2622
      %v2624 = vpop.f32.mrf.mxu0
      %2625 = vmatprep.mubr.f32.mxu0 0.0
      %2626 = vmatmul.mubr.f32.gmra.mxu0 %v2422
      %v2627 = vpop.f32.mrf.mxu0
      %v2628 = vadd.f32 %v2358, %v2627
      %v2629 = vpop.f32.mrf.mxu0
      %2630 = vmatprep.mubr.f32.mxu0 0.0
      %2631 = vmatmul.mubr.f32.gmra.mxu0 %v2425
      %v2632 = vpop.f32.mrf.mxu0
      %v2633 = vadd.f32 %v2358, %v2632
      %v2634 = vpop.f32.mrf.mxu0
      %2635 = vmatprep.mubr.f32.mxu0 0.0
      %2636 = vmatmul.mubr.f32.gmra.mxu0 %v2428
      %v2637 = vpop.f32.mrf.mxu0
      %v2638 = vadd.f32 %v2358, %v2637
      %v2639 = vpop.f32.mrf.mxu0
      %2640 = vmatprep.mubr.f32.mxu0 0.0
      %2641 = vmatmul.mubr.f32.gmra.mxu0 %v2431
      %v2642 = vpop.f32.mrf.mxu0
      %v2643 = vadd.f32 %v2358, %v2642
      %v2644 = vpop.f32.mrf.mxu0
      %2645 = vmatprep.mubr.f32.mxu0 0.0
      %2646 = vmatmul.mubr.f32.gmra.mxu0 %v2434
      %v2647 = vpop.f32.mrf.mxu0
      %v2648 = vadd.f32 %v2358, %v2647
      %v2649 = vpop.f32.mrf.mxu0
      %2650 = vmatprep.mubr.f32.mxu0 0.0
      %2651 = vmatmul.mubr.f32.gmra.mxu0 %v2437
      %v2652 = vpop.f32.mrf.mxu0
      %v2653 = vadd.f32 %v2358, %v2652
      %v2654 = vpop.f32.mrf.mxu0
      %2655 = vmatprep.mubr.f32.mxu0 0.0
      %2656 = vmatmul.mubr.f32.gmra.mxu0 %v2440
      %v2657 = vpop.f32.mrf.mxu0
      %v2658 = vadd.f32 %v2358, %v2657
      %v2659 = vpop.f32.mrf.mxu0
      %2660 = vmatprep.mubr.f32.mxu0 0.0
      %2661 = vmatmul.mubr.f32.gmra.mxu0 %v2443
      %v2662 = vpop.f32.mrf.mxu0
      %v2663 = vadd.f32 %v2358, %v2662
      %v2664 = vpop.f32.mrf.mxu0
      %2665 = vmatprep.mubr.f32.mxu0 0.0
      %2666 = vmatmul.mubr.f32.gmra.mxu0 %v2446
      %v2667 = vpop.f32.mrf.mxu0
      %v2668 = vadd.f32 %v2358, %v2667
      %v2669 = vpop.f32.mrf.mxu0
      %2670 = vmatprep.mubr.f32.mxu0 0.0
      %2671 = vmatmul.mubr.f32.gmra.mxu0 %v2449
      %v2672 = vpop.f32.mrf.mxu0
      %v2673 = vadd.f32 %v2358, %v2672
      %v2674 = vpop.f32.mrf.mxu0
      %2675 = vmatprep.mubr.f32.mxu0 0.0
      %2676 = vmatmul.mubr.f32.gmra.mxu0 %v2452
      %v2677 = vpop.f32.mrf.mxu0
      %v2678 = vadd.f32 %v2358, %v2677
      %v2679 = vpop.f32.mrf.mxu0
      %2680 = vmatprep.mubr.f32.mxu0 0.0
      %2681 = vmatmul.mubr.f32.gmra.mxu0 %v2455
      %v2682 = vpop.f32.mrf.mxu0
      %v2683 = vadd.f32 %v2358, %v2682
      %v2684 = vpop.f32.mrf.mxu0
      %2685 = vdwg.mxu0
      %v2686 = vld [vmem:[%s5] sm:$0xf]
      %v2687 = vld [vmem:[%s6] sm:$0xf]
      %2689 = vset.pattern.permute.xlu0 0
      %2690 = vperm.xlu0 %2689, %v2687
      %v2691 = vpop.permute.xlu0 %2690
      %v2694 = vsel %vm681, %v2686, 0
      %v2697 = vsel %vm681, %v2528, 0
      %v2700 = vsel %vm681, %v2533, 0
      %v2703 = vsel %vm681, %v2538, 0
      %v2706 = vsel %vm681, %v2543, 0
      %v2709 = vsel %vm681, %v2548, 0
      %v2712 = vsel %vm681, %v2553, 0
      %v2715 = vsel %vm681, %v2558, 0
      %v2718 = vsel %vm681, %v2563, 0
      %v2721 = vsel %vm681, %v2568, 0
      %v2724 = vsel %vm681, %v2573, 0
      %v2727 = vsel %vm681, %v2578, 0
      %v2730 = vsel %vm681, %v2583, 0
      %v2733 = vsel %vm681, %v2588, 0
      %v2736 = vsel %vm681, %v2593, 0
      %v2739 = vsel %vm681, %v2598, 0
      %v2742 = vsel %vm681, %v2603, 0
      %v2745 = vsel %vm681, %v2608, 0
      %v2748 = vsel %vm681, %v2613, 0
      %v2751 = vsel %vm681, %v2618, 0
      %v2754 = vsel %vm681, %v2623, 0
      %v2757 = vsel %vm681, %v2628, 0
      %v2760 = vsel %vm681, %v2633, 0
      %v2763 = vsel %vm681, %v2638, 0
      %v2766 = vsel %vm681, %v2643, 0
      %v2769 = vsel %vm681, %v2648, 0
      %v2772 = vsel %vm681, %v2653, 0
      %v2775 = vsel %vm681, %v2658, 0
      %v2778 = vsel %vm681, %v2663, 0
      %v2781 = vsel %vm681, %v2668, 0
      %v2784 = vsel %vm681, %v2673, 0
      %v2787 = vsel %vm681, %v2678, 0
      %v2790 = vsel %vm681, %v2683, 0
      %2792 = vmatprep.subr.mxu0 0.0
      %2793 = vmatpush1.xpose.msra.mxu0 %v2742
      %2794 = vmatprep.subr.mxu0 0.0
      %2795 = vmatpush1.xpose.msra.mxu0 %v2739
      %2796 = vmatprep.subr.mxu0 0.0
      %2797 = vmatpush1.xpose.msra.mxu0 %v2736
      %2798 = vmatprep.subr.mxu0 0.0
      %2799 = vmatpush1.xpose.msra.mxu0 %v2733
      %2800 = vmatprep.subr.mxu0 0.0
      %2801 = vmatpush1.xpose.msra.mxu0 %v2730
      %2802 = vmatprep.subr.mxu0 0.0
      %2803 = vmatpush1.xpose.msra.mxu0 %v2727
      %2804 = vmatprep.subr.mxu0 0.0
      %2805 = vmatpush1.xpose.msra.mxu0 %v2724
      %2806 = vmatprep.subr.mxu0 0.0
      %2807 = vmatpush1.xpose.msra.mxu0 %v2721
      %2808 = vmatprep.subr.mxu0 0.0
      %2809 = vmatpush1.xpose.msra.mxu0 %v2718
      %2810 = vmatprep.subr.mxu0 0.0
      %2811 = vmatpush1.xpose.msra.mxu0 %v2715
      %2812 = vmatprep.subr.mxu0 0.0
      %2813 = vmatpush1.xpose.msra.mxu0 %v2712
      %2814 = vmatprep.subr.mxu0 0.0
      %2815 = vmatpush1.xpose.msra.mxu0 %v2709
      %2816 = vmatprep.subr.mxu0 0.0
      %2817 = vmatpush1.xpose.msra.mxu0 %v2706
      %2818 = vmatprep.subr.mxu0 0.0
      %2819 = vmatpush1.xpose.msra.mxu0 %v2703
      %2820 = vmatprep.subr.mxu0 0.0
      %2821 = vmatpush1.xpose.msra.mxu0 %v2700
      %2822 = vmatprep.subr.mxu0 0.0
      %2823 = vmatpush1.xpose.msra.mxu0 %v2697
      %2824 = vmatprep.subr.mxu0 0.0
      %2825 = vmatpush2.xpose.msra.mxu0 %v2790
      %2826 = vmatprep.subr.mxu0 0.0
      %2827 = vmatpush2.xpose.msra.mxu0 %v2787
      %2828 = vmatprep.subr.mxu0 0.0
      %2829 = vmatpush2.xpose.msra.mxu0 %v2784
      %2830 = vmatprep.subr.mxu0 0.0
      %2831 = vmatpush2.xpose.msra.mxu0 %v2781
      %2832 = vmatprep.subr.mxu0 0.0
      %2833 = vmatpush2.xpose.msra.mxu0 %v2778
      %2834 = vmatprep.subr.mxu0 0.0
      %2835 = vmatpush2.xpose.msra.mxu0 %v2775
      %2836 = vmatprep.subr.mxu0 0.0
      %2837 = vmatpush2.xpose.msra.mxu0 %v2772
      %2838 = vmatprep.subr.mxu0 0.0
      %2839 = vmatpush2.xpose.msra.mxu0 %v2769
      %2840 = vmatprep.subr.mxu0 0.0
      %2841 = vmatpush2.xpose.msra.mxu0 %v2766
      %2842 = vmatprep.subr.mxu0 0.0
      %2843 = vmatpush2.xpose.msra.mxu0 %v2763
      %2844 = vmatprep.subr.mxu0 0.0
      %2845 = vmatpush2.xpose.msra.mxu0 %v2760
      %2846 = vmatprep.subr.mxu0 0.0
      %2847 = vmatpush2.xpose.msra.mxu0 %v2757
      %2848 = vmatprep.subr.mxu0 0.0
      %2849 = vmatpush2.xpose.msra.mxu0 %v2754
      %2850 = vmatprep.subr.mxu0 0.0
      %2851 = vmatpush2.xpose.msra.mxu0 %v2751
      %2852 = vmatprep.subr.mxu0 0.0
      %2853 = vmatpush2.xpose.msra.mxu0 %v2748
      %2854 = vmatprep.subr.mxu0 0.0
      %2855 = vmatpush2.xpose.msra.mxu0 %v2745
      %2856 = vmatprep.mubr.f32.mxu0 0.0
      %2857 = vmatmul.mubr.f32.gmra.mxu0 %v2694
      %v2858 = vpop.f32.mrf.mxu0
      %v2859 = vadd.f32 %v2691, %v2858
      %v2860 = vpop.f32.mrf.mxu0
      %v2861 = vadd.f32 %v2691, %v2860
      %2862 = vdwg.mxu0
      %v2863 = vmax.f32 %v2859, 0.0
      %v2864 = vmax.f32 %v2861, 0.0
      %v2865 = vmin.f32 %v2863, 6.0
      %v2866 = vmin.f32 %v2864, 6.0
      %v2867 = vadd.f32 %v2865, %v279
      %v2868 = vadd.f32 %v2866, %v289
      %v2871 = vcombine.low %v2867, %v2868
      %2873 = vst [vmem:[%s278] sm:$0xff] %v2871
      %p2874 = scmp.lt.s32.totalorder %s18, 1
      %s2875 = scalar_select %p2874, %s18, 1
      %s2876 = smul.addr %s2875, 2
      %s2877 = smul.addr %s2876, 4
      %s2878 = scalar_lea.vmem %s7, %s2877
      // Predicated region
      $region49: #{_lambda_.2} parent=47 // pred_check
        %p2879 = pneg %p188
      $region50: #{_lambda_.2} parent=47 // pred_check_branch
        %2881 = sbr.rel (%p2879) target = $region52
      $region51: #{_lambda_.2} parent=47 // pred_region
        _
      $region52: #{_lambda_.2} parent=47 // pred_fallthru
        _
    $region48: #{_lambda_.2} parent=5 // pred_fallthru
      _
    %p2882 = scmp.le.s32.totalorder 2, %s13
    // Predicated region
    $region53: #{_lambda_.2} parent=5 // pred_check
      %p2883 = pneg %p2882
    $region54: #{_lambda_.2} parent=5 // pred_check_branch
      %2885 = sbr.rel (%p2883) target = $region56
    $region55: #{_lambda_.2} parent=5 // pred_region
      %s2886 = ssub.s32 %s13, 2
      // Predicated region
      $region57: #{_lambda_.2} parent=55 // pred_check
        %p2887 = pneg %p194
      $region58: #{_lambda_.2} parent=55 // pred_check_branch
        %2889 = sbr.rel (%p2887) target = $region60
      $region59: #{_lambda_.2} parent=55 // pred_region
        %p2890 = scmp.lt.s32.totalorder %s19, 1
        %s2891 = scalar_select %p2890, %s19, 1
        %s2892 = smul.addr %s2891, 2
        %s2893 = smul.addr %s2892, 4
        %s2894 = scalar_lea.vmem %s7, %s2893
      $region60: #{_lambda_.2} parent=55 // pred_fallthru
        _
    $region56: #{_lambda_.2} parent=5 // pred_fallthru
      _
  $region6: #{_lambda_.2} parent=0 // loop_footer
    %s17 = sadd.s32 1, %s13
  $region7: #{_lambda_.2} parent=0 // loop_footer_branch
    %12 = sbr.rel target = $region3
  $region8: #{_lambda_.2} parent=0 // loop_exit
    _

</llo_original>
